<compile_context>
chip_gen: v7x
topology: tpu7x:2x2x1
jax: 0.10.0
libtpu: 0.0.40
codegen_flags: <defaults>
</compile_context>

<pallas_src>
import functools

import jax
import jax.numpy as jnp
from jax.experimental import pallas as pl
from jax.experimental.pallas import tpu as pltpu


N_LAYERS = 10
IMG_DIM = 28 * 28  # 784


def _round_up(x, m):
    return (x + m - 1) // m * m


def layer_dims(num_hidden):
    enc = [(IMG_DIM, 512), (512, 512), (512, 256), (256, 256), (256, num_hidden)]
    dec = [(num_hidden, 256), (256, 256), (256, 512), (512, 512), (512, IMG_DIM)]
    return enc, dec


def _autoenc_kernel(x_ref, *refs):
    # refs = (w0..w9, b0..b9, enc_out_ref, dec_out_ref)
    w_refs = refs[:N_LAYERS]
    b_refs = refs[N_LAYERS:2 * N_LAYERS]
    enc_out_ref = refs[2 * N_LAYERS]
    dec_out_ref = refs[2 * N_LAYERS + 1]

    h = x_ref[...].astype(jnp.float32)
    for li in range(N_LAYERS):
        w = w_refs[li][...]                      # (in_p, out_p) bf16
        b = b_refs[li][...]                      # (1, out_p)   f32, broadcasts
        y = jnp.dot(h.astype(jnp.bfloat16), w, preferred_element_type=jnp.float32)
        h = jnp.maximum(y + b, 0.0)              # ReLU after EVERY linear (matches module)
        if li == 4:                              # end of encoder (bottleneck)
            enc_out_ref[...] = h.astype(enc_out_ref.dtype)
    dec_out_ref[...] = h.astype(dec_out_ref.dtype)


@functools.partial(jax.jit, static_argnames=("num_hidden",))
def autoenc_forward(x, weights, biases, *, num_hidden):
    """x: (B, 1, 28, 28) float32. Returns (encoded (B, H), decoded (B, 1, 28, 28))."""
    B = x.shape[0]
    d_in_pad = weights[0].shape[0]               # 896
    h_pad = weights[4].shape[1]                  # 128 (padded bottleneck)
    d_out_pad = weights[9].shape[1]              # 896

    # Batch tile: <=256 (matches 256x256 MXU on v6e/v7x), multiple of 8.
    tm = 256 if B >= 256 else _round_up(max(B, 1), 8)
    b_pad = _round_up(B, tm)
    grid = (b_pad // tm,)

    # Pad the flattened input to lane-dense (b_pad, 896); zeros contribute nothing.
    x_flat = x.reshape(B, IMG_DIM).astype(jnp.float32)
    x_in = jnp.zeros((b_pad, d_in_pad), jnp.float32).at[:B, :IMG_DIM].set(x_flat)

    x_spec = pl.BlockSpec((tm, d_in_pad), lambda i: (i, 0))
    w_specs = [pl.BlockSpec(w.shape, lambda i: (0, 0)) for w in weights]
    b_specs = [pl.BlockSpec(b.shape, lambda i: (0, 0)) for b in biases]
    enc_spec = pl.BlockSpec((tm, h_pad), lambda i: (i, 0))
    dec_spec = pl.BlockSpec((tm, d_out_pad), lambda i: (i, 0))

    enc_out, dec_out = pl.pallas_call(
        _autoenc_kernel,
        grid=grid,
        out_shape=(
            jax.ShapeDtypeStruct((b_pad, h_pad), jnp.float32),
            jax.ShapeDtypeStruct((b_pad, d_out_pad), jnp.float32),
        ),
        in_specs=[x_spec] + w_specs + b_specs,
        out_specs=(enc_spec, dec_spec),
        compiler_params=pltpu.CompilerParams(
            dimension_semantics=("parallel",),
            vmem_limit_bytes=32 * 1024 * 1024,
        ),
    )(x_in, *weights, *biases)

    encoded = enc_out[:B, :num_hidden]
    decoded = dec_out[:B, :IMG_DIM].reshape(B, 1, 28, 28)
    return encoded, decoded


def init_params(key, num_hidden):
    """Matches _init_weights: W ~ N(0, 0.01), b = 0.

    PyTorch nn.Linear stores weight as (out, in); we store the transpose
    (in, out) so the kernel computes x @ W. Weights are zero-padded once to
    multiples of 128 on both dims and cast to bf16; biases stay f32 (padded).
    """
    enc, dec = layer_dims(num_hidden)
    dims = enc + dec
    weights, biases = [], []
    for d_in, d_out in dims:
        key, sub = jax.random.split(key)
        w = 0.01 * jax.random.normal(sub, (d_in, d_out), dtype=jnp.float32)
        d_in_p = _round_up(d_in, 128)
        d_out_p = _round_up(d_out, 128)
        w_p = (
            jnp.zeros((d_in_p, d_out_p), jnp.float32)
            .at[:d_in, :d_out]
            .set(w)
            .astype(jnp.bfloat16)
        )
        b_p = jnp.zeros((1, d_out_p), jnp.float32)   # bias init is 0 (padded too)
        weights.append(w_p)
        biases.append(b_p)
    return weights, biases


if __name__ == "__main__":
    num_hidden = 32
    batch = 2

    key = jax.random.PRNGKey(0)
    key, k_x = jax.random.split(key)
    x = jax.random.uniform(k_x, (batch, 1, 28, 28), dtype=jnp.float32)

    weights, biases = init_params(key, num_hidden)

    encoded, decoded = autoenc_forward(x, weights, biases, num_hidden=num_hidden)
    jax.block_until_ready((encoded, decoded))

    # Reference in plain JAX with the SAME padded bf16 weights / bf16-cast
    # activations and f32 accumulation (so the comparison is apples-to-apples).
    d_in_pad = weights[0].shape[0]
    h = jnp.zeros((batch, d_in_pad), jnp.float32).at[:, :IMG_DIM].set(
        x.reshape(batch, IMG_DIM)
    )
    enc_ref = None
    for li, (w, b) in enumerate(zip(weights, biases)):
        h = jnp.maximum(
            jnp.dot(h.astype(jnp.bfloat16), w, preferred_element_type=jnp.float32) + b,
            0.0,
        )
        if li == 4:
            enc_ref = h[:, :num_hidden]
    dec_ref = h[:, :IMG_DIM].reshape(batch, 1, 28, 28)

    assert encoded.shape == (batch, num_hidden)
    assert decoded.shape == (batch, 1, 28, 28)
    assert jnp.allclose(encoded, enc_ref, atol=1e-6, rtol=2e-2)
    assert jnp.allclose(decoded, dec_ref, atol=1e-6, rtol=2e-2)

    print("KERNEL_OK")
</pallas_src>

<mosaic_0001>
module attributes {stable_mosaic.version = 11 : i64} {
  func.func @_autoenc_kernel(%arg0: i32, %arg1: memref<8x896xf32, #tpu.memory_space<vmem>>, %arg2: memref<896x512xbf16, #tpu.memory_space<vmem>>, %arg3: memref<512x512xbf16, #tpu.memory_space<vmem>>, %arg4: memref<512x256xbf16, #tpu.memory_space<vmem>>, %arg5: memref<256x256xbf16, #tpu.memory_space<vmem>>, %arg6: memref<256x128xbf16, #tpu.memory_space<vmem>>, %arg7: memref<128x256xbf16, #tpu.memory_space<vmem>>, %arg8: memref<256x256xbf16, #tpu.memory_space<vmem>>, %arg9: memref<256x512xbf16, #tpu.memory_space<vmem>>, %arg10: memref<512x512xbf16, #tpu.memory_space<vmem>>, %arg11: memref<512x896xbf16, #tpu.memory_space<vmem>>, %arg12: memref<1x512xf32, #tpu.memory_space<vmem>>, %arg13: memref<1x512xf32, #tpu.memory_space<vmem>>, %arg14: memref<1x256xf32, #tpu.memory_space<vmem>>, %arg15: memref<1x256xf32, #tpu.memory_space<vmem>>, %arg16: memref<1x128xf32, #tpu.memory_space<vmem>>, %arg17: memref<1x256xf32, #tpu.memory_space<vmem>>, %arg18: memref<1x256xf32, #tpu.memory_space<vmem>>, %arg19: memref<1x512xf32, #tpu.memory_space<vmem>>, %arg20: memref<1x512xf32, #tpu.memory_space<vmem>>, %arg21: memref<1x896xf32, #tpu.memory_space<vmem>>, %arg22: memref<8x128xf32, #tpu.memory_space<vmem>>, %arg23: memref<8x896xf32, #tpu.memory_space<vmem>>) attributes {dimension_semantics = [#tpu.dimension_semantics<parallel>], iteration_bounds = array<i64: 1>, scalar_prefetch = 0 : i64, scratch_operands = 0 : i64, tpu.core_type = #tpu.core_type<tc>, window_params = [{transform_indices = @transform_0, window_bounds = array<i64: 8, 896>}, {pipeline_mode = #tpu.pipeline_mode<synchronous>, transform_indices = @transform_1, window_bounds = array<i64: 896, 512>}, {pipeline_mode = #tpu.pipeline_mode<synchronous>, transform_indices = @transform_2, window_bounds = array<i64: 512, 512>}, {pipeline_mode = #tpu.pipeline_mode<synchronous>, transform_indices = @transform_3, window_bounds = array<i64: 512, 256>}, {pipeline_mode = #tpu.pipeline_mode<synchronous>, transform_indices = @transform_4, window_bounds = array<i64: 256, 256>}, {pipeline_mode = #tpu.pipeline_mode<synchronous>, transform_indices = @transform_5, window_bounds = array<i64: 256, 128>}, {pipeline_mode = #tpu.pipeline_mode<synchronous>, transform_indices = @transform_6, window_bounds = array<i64: 128, 256>}, {pipeline_mode = #tpu.pipeline_mode<synchronous>, transform_indices = @transform_7, window_bounds = array<i64: 256, 256>}, {pipeline_mode = #tpu.pipeline_mode<synchronous>, transform_indices = @transform_8, window_bounds = array<i64: 256, 512>}, {pipeline_mode = #tpu.pipeline_mode<synchronous>, transform_indices = @transform_9, window_bounds = array<i64: 512, 512>}, {pipeline_mode = #tpu.pipeline_mode<synchronous>, transform_indices = @transform_10, window_bounds = array<i64: 512, 896>}, {pipeline_mode = #tpu.pipeline_mode<synchronous>, transform_indices = @transform_11, window_bounds = array<i64: 1, 512>}, {pipeline_mode = #tpu.pipeline_mode<synchronous>, transform_indices = @transform_12, window_bounds = array<i64: 1, 512>}, {pipeline_mode = #tpu.pipeline_mode<synchronous>, transform_indices = @transform_13, window_bounds = array<i64: 1, 256>}, {pipeline_mode = #tpu.pipeline_mode<synchronous>, transform_indices = @transform_14, window_bounds = array<i64: 1, 256>}, {pipeline_mode = #tpu.pipeline_mode<synchronous>, transform_indices = @transform_15, window_bounds = array<i64: 1, 128>}, {pipeline_mode = #tpu.pipeline_mode<synchronous>, transform_indices = @transform_16, window_bounds = array<i64: 1, 256>}, {pipeline_mode = #tpu.pipeline_mode<synchronous>, transform_indices = @transform_17, window_bounds = array<i64: 1, 256>}, {pipeline_mode = #tpu.pipeline_mode<synchronous>, transform_indices = @transform_18, window_bounds = array<i64: 1, 512>}, {pipeline_mode = #tpu.pipeline_mode<synchronous>, transform_indices = @transform_19, window_bounds = array<i64: 1, 512>}, {pipeline_mode = #tpu.pipeline_mode<synchronous>, transform_indices = @transform_20, window_bounds = array<i64: 1, 896>}, {transform_indices = @transform_21, window_bounds = array<i64: 8, 128>}, {transform_indices = @transform_22, window_bounds = array<i64: 8, 896>}]} {
    %c0 = arith.constant 0 : index
    %c0_0 = arith.constant 0 : index
    %0 = vector.load %arg1[%c0, %c0_0] : memref<8x896xf32, #tpu.memory_space<vmem>>, vector<8x896xf32>
    %c0_1 = arith.constant 0 : index
    %c0_2 = arith.constant 0 : index
    %1 = vector.load %arg2[%c0_1, %c0_2] : memref<896x512xbf16, #tpu.memory_space<vmem>>, vector<896x512xbf16>
    %c0_3 = arith.constant 0 : index
    %c0_4 = arith.constant 0 : index
    %2 = vector.load %arg12[%c0_3, %c0_4] : memref<1x512xf32, #tpu.memory_space<vmem>>, vector<1x512xf32>
    %3 = arith.truncf %0 : vector<8x896xf32> to vector<8x896xbf16>
    %cst = arith.constant dense<0.000000e+00> : vector<8x512xf32>
    %4 = tpu.matmul %3, %1, %cst {dimension_numbers = #tpu.dot_dimension_numbers<[1], [0], [0], [1], [0, 0, 1, 1], [], []>} : vector<8x896xbf16>, vector<896x512xbf16>, vector<8x512xf32> -> vector<8x512xf32>
    %5 = vector.broadcast %2 : vector<1x512xf32> to vector<8x512xf32>
    %6 = arith.addf %4, %5 : vector<8x512xf32>
    %cst_5 = arith.constant 0.000000e+00 : f32
    %7 = vector.broadcast %cst_5 : f32 to vector<8x512xf32>
    %8 = arith.maximumf %6, %7 : vector<8x512xf32>
    %c0_6 = arith.constant 0 : index
    %c0_7 = arith.constant 0 : index
    %9 = vector.load %arg3[%c0_6, %c0_7] : memref<512x512xbf16, #tpu.memory_space<vmem>>, vector<512x512xbf16>
    %c0_8 = arith.constant 0 : index
    %c0_9 = arith.constant 0 : index
    %10 = vector.load %arg13[%c0_8, %c0_9] : memref<1x512xf32, #tpu.memory_space<vmem>>, vector<1x512xf32>
    %11 = arith.truncf %8 : vector<8x512xf32> to vector<8x512xbf16>
    %cst_10 = arith.constant dense<0.000000e+00> : vector<8x512xf32>
    %12 = tpu.matmul %11, %9, %cst_10 {dimension_numbers = #tpu.dot_dimension_numbers<[1], [0], [0], [1], [0, 0, 1, 1], [], []>} : vector<8x512xbf16>, vector<512x512xbf16>, vector<8x512xf32> -> vector<8x512xf32>
    %13 = vector.broadcast %10 : vector<1x512xf32> to vector<8x512xf32>
    %14 = arith.addf %12, %13 : vector<8x512xf32>
    %cst_11 = arith.constant 0.000000e+00 : f32
    %15 = vector.broadcast %cst_11 : f32 to vector<8x512xf32>
    %16 = arith.maximumf %14, %15 : vector<8x512xf32>
    %c0_12 = arith.constant 0 : index
    %c0_13 = arith.constant 0 : index
    %17 = vector.load %arg4[%c0_12, %c0_13] : memref<512x256xbf16, #tpu.memory_space<vmem>>, vector<512x256xbf16>
    %c0_14 = arith.constant 0 : index
    %c0_15 = arith.constant 0 : index
    %18 = vector.load %arg14[%c0_14, %c0_15] : memref<1x256xf32, #tpu.memory_space<vmem>>, vector<1x256xf32>
    %19 = arith.truncf %16 : vector<8x512xf32> to vector<8x512xbf16>
    %cst_16 = arith.constant dense<0.000000e+00> : vector<8x256xf32>
    %20 = tpu.matmul %19, %17, %cst_16 {dimension_numbers = #tpu.dot_dimension_numbers<[1], [0], [0], [1], [0, 0, 1, 1], [], []>} : vector<8x512xbf16>, vector<512x256xbf16>, vector<8x256xf32> -> vector<8x256xf32>
    %21 = vector.broadcast %18 : vector<1x256xf32> to vector<8x256xf32>
    %22 = arith.addf %20, %21 : vector<8x256xf32>
    %cst_17 = arith.constant 0.000000e+00 : f32
    %23 = vector.broadcast %cst_17 : f32 to vector<8x256xf32>
    %24 = arith.maximumf %22, %23 : vector<8x256xf32>
    %c0_18 = arith.constant 0 : index
    %c0_19 = arith.constant 0 : index
    %25 = vector.load %arg5[%c0_18, %c0_19] : memref<256x256xbf16, #tpu.memory_space<vmem>>, vector<256x256xbf16>
    %c0_20 = arith.constant 0 : index
    %c0_21 = arith.constant 0 : index
    %26 = vector.load %arg15[%c0_20, %c0_21] : memref<1x256xf32, #tpu.memory_space<vmem>>, vector<1x256xf32>
    %27 = arith.truncf %24 : vector<8x256xf32> to vector<8x256xbf16>
    %cst_22 = arith.constant dense<0.000000e+00> : vector<8x256xf32>
    %28 = tpu.matmul %27, %25, %cst_22 {dimension_numbers = #tpu.dot_dimension_numbers<[1], [0], [0], [1], [0, 0, 1, 1], [], []>} : vector<8x256xbf16>, vector<256x256xbf16>, vector<8x256xf32> -> vector<8x256xf32>
    %29 = vector.broadcast %26 : vector<1x256xf32> to vector<8x256xf32>
    %30 = arith.addf %28, %29 : vector<8x256xf32>
    %cst_23 = arith.constant 0.000000e+00 : f32
    %31 = vector.broadcast %cst_23 : f32 to vector<8x256xf32>
    %32 = arith.maximumf %30, %31 : vector<8x256xf32>
    %c0_24 = arith.constant 0 : index
    %c0_25 = arith.constant 0 : index
    %33 = vector.load %arg6[%c0_24, %c0_25] : memref<256x128xbf16, #tpu.memory_space<vmem>>, vector<256x128xbf16>
    %c0_26 = arith.constant 0 : index
    %c0_27 = arith.constant 0 : index
    %34 = vector.load %arg16[%c0_26, %c0_27] : memref<1x128xf32, #tpu.memory_space<vmem>>, vector<1x128xf32>
    %35 = arith.truncf %32 : vector<8x256xf32> to vector<8x256xbf16>
    %cst_28 = arith.constant dense<0.000000e+00> : vector<8x128xf32>
    %36 = tpu.matmul %35, %33, %cst_28 {dimension_numbers = #tpu.dot_dimension_numbers<[1], [0], [0], [1], [0, 0, 1, 1], [], []>} : vector<8x256xbf16>, vector<256x128xbf16>, vector<8x128xf32> -> vector<8x128xf32>
    %37 = vector.broadcast %34 : vector<1x128xf32> to vector<8x128xf32>
    %38 = arith.addf %36, %37 : vector<8x128xf32>
    %cst_29 = arith.constant 0.000000e+00 : f32
    %39 = vector.broadcast %cst_29 : f32 to vector<8x128xf32>
    %40 = arith.maximumf %38, %39 : vector<8x128xf32>
    %c0_30 = arith.constant 0 : index
    %c0_31 = arith.constant 0 : index
    %41 = vector.load %arg22[%c0_30, %c0_31] : memref<8x128xf32, #tpu.memory_space<vmem>>, vector<8x128xf32>
    tpu.vector_store %arg22[%c0_30, %c0_31], %40 {strides = array<i32>} : memref<8x128xf32, #tpu.memory_space<vmem>>, vector<8x128xf32>,
    %c0_32 = arith.constant 0 : index
    %c0_33 = arith.constant 0 : index
    %42 = vector.load %arg7[%c0_32, %c0_33] : memref<128x256xbf16, #tpu.memory_space<vmem>>, vector<128x256xbf16>
    %c0_34 = arith.constant 0 : index
    %c0_35 = arith.constant 0 : index
    %43 = vector.load %arg17[%c0_34, %c0_35] : memref<1x256xf32, #tpu.memory_space<vmem>>, vector<1x256xf32>
    %44 = arith.truncf %40 : vector<8x128xf32> to vector<8x128xbf16>
    %cst_36 = arith.constant dense<0.000000e+00> : vector<8x256xf32>
    %45 = tpu.matmul %44, %42, %cst_36 {dimension_numbers = #tpu.dot_dimension_numbers<[1], [0], [0], [1], [0, 0, 1, 1], [], []>} : vector<8x128xbf16>, vector<128x256xbf16>, vector<8x256xf32> -> vector<8x256xf32>
    %46 = vector.broadcast %43 : vector<1x256xf32> to vector<8x256xf32>
    %47 = arith.addf %45, %46 : vector<8x256xf32>
    %cst_37 = arith.constant 0.000000e+00 : f32
    %48 = vector.broadcast %cst_37 : f32 to vector<8x256xf32>
    %49 = arith.maximumf %47, %48 : vector<8x256xf32>
    %c0_38 = arith.constant 0 : index
    %c0_39 = arith.constant 0 : index
    %50 = vector.load %arg8[%c0_38, %c0_39] : memref<256x256xbf16, #tpu.memory_space<vmem>>, vector<256x256xbf16>
    %c0_40 = arith.constant 0 : index
    %c0_41 = arith.constant 0 : index
    %51 = vector.load %arg18[%c0_40, %c0_41] : memref<1x256xf32, #tpu.memory_space<vmem>>, vector<1x256xf32>
    %52 = arith.truncf %49 : vector<8x256xf32> to vector<8x256xbf16>
    %cst_42 = arith.constant dense<0.000000e+00> : vector<8x256xf32>
    %53 = tpu.matmul %52, %50, %cst_42 {dimension_numbers = #tpu.dot_dimension_numbers<[1], [0], [0], [1], [0, 0, 1, 1], [], []>} : vector<8x256xbf16>, vector<256x256xbf16>, vector<8x256xf32> -> vector<8x256xf32>
    %54 = vector.broadcast %51 : vector<1x256xf32> to vector<8x256xf32>
    %55 = arith.addf %53, %54 : vector<8x256xf32>
    %cst_43 = arith.constant 0.000000e+00 : f32
    %56 = vector.broadcast %cst_43 : f32 to vector<8x256xf32>
    %57 = arith.maximumf %55, %56 : vector<8x256xf32>
    %c0_44 = arith.constant 0 : index
    %c0_45 = arith.constant 0 : index
    %58 = vector.load %arg9[%c0_44, %c0_45] : memref<256x512xbf16, #tpu.memory_space<vmem>>, vector<256x512xbf16>
    %c0_46 = arith.constant 0 : index
    %c0_47 = arith.constant 0 : index
    %59 = vector.load %arg19[%c0_46, %c0_47] : memref<1x512xf32, #tpu.memory_space<vmem>>, vector<1x512xf32>
    %60 = arith.truncf %57 : vector<8x256xf32> to vector<8x256xbf16>
    %cst_48 = arith.constant dense<0.000000e+00> : vector<8x512xf32>
    %61 = tpu.matmul %60, %58, %cst_48 {dimension_numbers = #tpu.dot_dimension_numbers<[1], [0], [0], [1], [0, 0, 1, 1], [], []>} : vector<8x256xbf16>, vector<256x512xbf16>, vector<8x512xf32> -> vector<8x512xf32>
    %62 = vector.broadcast %59 : vector<1x512xf32> to vector<8x512xf32>
    %63 = arith.addf %61, %62 : vector<8x512xf32>
    %cst_49 = arith.constant 0.000000e+00 : f32
    %64 = vector.broadcast %cst_49 : f32 to vector<8x512xf32>
    %65 = arith.maximumf %63, %64 : vector<8x512xf32>
    %c0_50 = arith.constant 0 : index
    %c0_51 = arith.constant 0 : index
    %66 = vector.load %arg10[%c0_50, %c0_51] : memref<512x512xbf16, #tpu.memory_space<vmem>>, vector<512x512xbf16>
    %c0_52 = arith.constant 0 : index
    %c0_53 = arith.constant 0 : index
    %67 = vector.load %arg20[%c0_52, %c0_53] : memref<1x512xf32, #tpu.memory_space<vmem>>, vector<1x512xf32>
    %68 = arith.truncf %65 : vector<8x512xf32> to vector<8x512xbf16>
    %cst_54 = arith.constant dense<0.000000e+00> : vector<8x512xf32>
    %69 = tpu.matmul %68, %66, %cst_54 {dimension_numbers = #tpu.dot_dimension_numbers<[1], [0], [0], [1], [0, 0, 1, 1], [], []>} : vector<8x512xbf16>, vector<512x512xbf16>, vector<8x512xf32> -> vector<8x512xf32>
    %70 = vector.broadcast %67 : vector<1x512xf32> to vector<8x512xf32>
    %71 = arith.addf %69, %70 : vector<8x512xf32>
    %cst_55 = arith.constant 0.000000e+00 : f32
    %72 = vector.broadcast %cst_55 : f32 to vector<8x512xf32>
    %73 = arith.maximumf %71, %72 : vector<8x512xf32>
    %c0_56 = arith.constant 0 : index
    %c0_57 = arith.constant 0 : index
    %74 = vector.load %arg11[%c0_56, %c0_57] : memref<512x896xbf16, #tpu.memory_space<vmem>>, vector<512x896xbf16>
    %c0_58 = arith.constant 0 : index
    %c0_59 = arith.constant 0 : index
    %75 = vector.load %arg21[%c0_58, %c0_59] : memref<1x896xf32, #tpu.memory_space<vmem>>, vector<1x896xf32>
    %76 = arith.truncf %73 : vector<8x512xf32> to vector<8x512xbf16>
    %cst_60 = arith.constant dense<0.000000e+00> : vector<8x896xf32>
    %77 = tpu.matmul %76, %74, %cst_60 {dimension_numbers = #tpu.dot_dimension_numbers<[1], [0], [0], [1], [0, 0, 1, 1], [], []>} : vector<8x512xbf16>, vector<512x896xbf16>, vector<8x896xf32> -> vector<8x896xf32>
    %78 = vector.broadcast %75 : vector<1x896xf32> to vector<8x896xf32>
    %79 = arith.addf %77, %78 : vector<8x896xf32>
    %cst_61 = arith.constant 0.000000e+00 : f32
    %80 = vector.broadcast %cst_61 : f32 to vector<8x896xf32>
    %81 = arith.maximumf %79, %80 : vector<8x896xf32>
    %c0_62 = arith.constant 0 : index
    %c0_63 = arith.constant 0 : index
    %82 = vector.load %arg23[%c0_62, %c0_63] : memref<8x896xf32, #tpu.memory_space<vmem>>, vector<8x896xf32>
    tpu.vector_store %arg23[%c0_62, %c0_63], %81 {strides = array<i32>} : memref<8x896xf32, #tpu.memory_space<vmem>>, vector<8x896xf32>,
    return
  }
  func.func @transform_0(%arg0: i32) -> (i32, i32) {
    %c0_i32 = arith.constant 0 : i32
    %c0_i32_0 = arith.constant 0 : i32
    return %arg0, %c0_i32 : i32, i32
  }
  func.func @transform_1(%arg0: i32) -> (i32, i32) {
    %c0_i32 = arith.constant 0 : i32
    %c0_i32_0 = arith.constant 0 : i32
    %c0_i32_1 = arith.constant 0 : i32
    return %c0_i32, %c0_i32_0 : i32, i32
  }
  func.func @transform_2(%arg0: i32) -> (i32, i32) {
    %c0_i32 = arith.constant 0 : i32
    %c0_i32_0 = arith.constant 0 : i32
    %c0_i32_1 = arith.constant 0 : i32
    return %c0_i32, %c0_i32_0 : i32, i32
  }
  func.func @transform_3(%arg0: i32) -> (i32, i32) {
    %c0_i32 = arith.constant 0 : i32
    %c0_i32_0 = arith.constant 0 : i32
    %c0_i32_1 = arith.constant 0 : i32
    return %c0_i32, %c0_i32_0 : i32, i32
  }
  func.func @transform_4(%arg0: i32) -> (i32, i32) {
    %c0_i32 = arith.constant 0 : i32
    %c0_i32_0 = arith.constant 0 : i32
    %c0_i32_1 = arith.constant 0 : i32
    return %c0_i32, %c0_i32_0 : i32, i32
  }
  func.func @transform_5(%arg0: i32) -> (i32, i32) {
    %c0_i32 = arith.constant 0 : i32
    %c0_i32_0 = arith.constant 0 : i32
    %c0_i32_1 = arith.constant 0 : i32
    return %c0_i32, %c0_i32_0 : i32, i32
  }
  func.func @transform_6(%arg0: i32) -> (i32, i32) {
    %c0_i32 = arith.constant 0 : i32
    %c0_i32_0 = arith.constant 0 : i32
    %c0_i32_1 = arith.constant 0 : i32
    return %c0_i32, %c0_i32_0 : i32, i32
  }
  func.func @transform_7(%arg0: i32) -> (i32, i32) {
    %c0_i32 = arith.constant 0 : i32
    %c0_i32_0 = arith.constant 0 : i32
    %c0_i32_1 = arith.constant 0 : i32
    return %c0_i32, %c0_i32_0 : i32, i32
  }
  func.func @transform_8(%arg0: i32) -> (i32, i32) {
    %c0_i32 = arith.constant 0 : i32
    %c0_i32_0 = arith.constant 0 : i32
    %c0_i32_1 = arith.constant 0 : i32
    return %c0_i32, %c0_i32_0 : i32, i32
  }
  func.func @transform_9(%arg0: i32) -> (i32, i32) {
    %c0_i32 = arith.constant 0 : i32
    %c0_i32_0 = arith.constant 0 : i32
    %c0_i32_1 = arith.constant 0 : i32
    return %c0_i32, %c0_i32_0 : i32, i32
  }
  func.func @transform_10(%arg0: i32) -> (i32, i32) {
    %c0_i32 = arith.constant 0 : i32
    %c0_i32_0 = arith.constant 0 : i32
    %c0_i32_1 = arith.constant 0 : i32
    return %c0_i32, %c0_i32_0 : i32, i32
  }
  func.func @transform_11(%arg0: i32) -> (i32, i32) {
    %c0_i32 = arith.constant 0 : i32
    %c0_i32_0 = arith.constant 0 : i32
    %c0_i32_1 = arith.constant 0 : i32
    return %c0_i32, %c0_i32_0 : i32, i32
  }
  func.func @transform_12(%arg0: i32) -> (i32, i32) {
    %c0_i32 = arith.constant 0 : i32
    %c0_i32_0 = arith.constant 0 : i32
    %c0_i32_1 = arith.constant 0 : i32
    return %c0_i32, %c0_i32_0 : i32, i32
  }
  func.func @transform_13(%arg0: i32) -> (i32, i32) {
    %c0_i32 = arith.constant 0 : i32
    %c0_i32_0 = arith.constant 0 : i32
    %c0_i32_1 = arith.constant 0 : i32
    return %c0_i32, %c0_i32_0 : i32, i32
  }
  func.func @transform_14(%arg0: i32) -> (i32, i32) {
    %c0_i32 = arith.constant 0 : i32
    %c0_i32_0 = arith.constant 0 : i32
    %c0_i32_1 = arith.constant 0 : i32
    return %c0_i32, %c0_i32_0 : i32, i32
  }
  func.func @transform_15(%arg0: i32) -> (i32, i32) {
    %c0_i32 = arith.constant 0 : i32
    %c0_i32_0 = arith.constant 0 : i32
    %c0_i32_1 = arith.constant 0 : i32
    return %c0_i32, %c0_i32_0 : i32, i32
  }
  func.func @transform_16(%arg0: i32) -> (i32, i32) {
    %c0_i32 = arith.constant 0 : i32
    %c0_i32_0 = arith.constant 0 : i32
    %c0_i32_1 = arith.constant 0 : i32
    return %c0_i32, %c0_i32_0 : i32, i32
  }
  func.func @transform_17(%arg0: i32) -> (i32, i32) {
    %c0_i32 = arith.constant 0 : i32
    %c0_i32_0 = arith.constant 0 : i32
    %c0_i32_1 = arith.constant 0 : i32
    return %c0_i32, %c0_i32_0 : i32, i32
  }
  func.func @transform_18(%arg0: i32) -> (i32, i32) {
    %c0_i32 = arith.constant 0 : i32
    %c0_i32_0 = arith.constant 0 : i32
    %c0_i32_1 = arith.constant 0 : i32
    return %c0_i32, %c0_i32_0 : i32, i32
  }
  func.func @transform_19(%arg0: i32) -> (i32, i32) {
    %c0_i32 = arith.constant 0 : i32
    %c0_i32_0 = arith.constant 0 : i32
    %c0_i32_1 = arith.constant 0 : i32
    return %c0_i32, %c0_i32_0 : i32, i32
  }
  func.func @transform_20(%arg0: i32) -> (i32, i32) {
    %c0_i32 = arith.constant 0 : i32
    %c0_i32_0 = arith.constant 0 : i32
    %c0_i32_1 = arith.constant 0 : i32
    return %c0_i32, %c0_i32_0 : i32, i32
  }
  func.func @transform_21(%arg0: i32) -> (i32, i32) {
    %c0_i32 = arith.constant 0 : i32
    %c0_i32_0 = arith.constant 0 : i32
    return %arg0, %c0_i32 : i32, i32
  }
  func.func @transform_22(%arg0: i32) -> (i32, i32) {
    %c0_i32 = arith.constant 0 : i32
    %c0_i32_0 = arith.constant 0 : i32
    return %arg0, %c0_i32 : i32, i32
  }
}

</mosaic_0001>

<llo_original>
// kernel: autoenc_forward.1
$region0: #{autoenc_forward.1}
  #allocation0 [shape = 'u32[]', space=smem, size = 0x4, offset = 0x4, fixed_abs, tag = 'smem constant byte address 0x4 - core index']
  #allocation1 [shape = 'u32[144,128]{1,0:T(1,128)}', space=vmem, size = 0x12000, scoped, tag = 'internal scratch']
  %s0 = inlined_call_operand.vmem [shape: f32[8,896], index: 0, kind: input, shape index: {}]
  %s1 = inlined_call_operand.hbm [shape: bf16[896,512], index: 1, kind: input, shape index: {}]
  %s2 = inlined_call_operand.hbm [shape: bf16[512,512], index: 2, kind: input, shape index: {}]
  %s3 = inlined_call_operand.hbm [shape: bf16[512,256], index: 3, kind: input, shape index: {}]
  %s4 = inlined_call_operand.vmem [shape: bf16[256,256], index: 4, kind: input, shape index: {}]
  %s5 = inlined_call_operand.hbm [shape: bf16[256,128], index: 5, kind: input, shape index: {}]
  %s6 = inlined_call_operand.hbm [shape: bf16[128,256], index: 6, kind: input, shape index: {}]
  %s7 = inlined_call_operand.hbm [shape: bf16[256,256], index: 7, kind: input, shape index: {}]
  %s8 = inlined_call_operand.hbm [shape: bf16[256,512], index: 8, kind: input, shape index: {}]
  %s9 = inlined_call_operand.hbm [shape: bf16[512,512], index: 9, kind: input, shape index: {}]
  %s10 = inlined_call_operand.hbm [shape: bf16[512,896], index: 10, kind: input, shape index: {}]
  %s11 = inlined_call_operand.vmem [shape: f32[1,512], index: 11, kind: input, shape index: {}]
  %s12 = inlined_call_operand.vmem [shape: f32[1,512], index: 12, kind: input, shape index: {}]
  %s13 = inlined_call_operand.vmem [shape: f32[1,256], index: 13, kind: input, shape index: {}]
  %s14 = inlined_call_operand.vmem [shape: f32[1,256], index: 14, kind: input, shape index: {}]
  %s15 = inlined_call_operand.vmem [shape: f32[1,128], index: 15, kind: input, shape index: {}]
  %s16 = inlined_call_operand.vmem [shape: f32[1,256], index: 16, kind: input, shape index: {}]
  %s17 = inlined_call_operand.vmem [shape: f32[1,256], index: 17, kind: input, shape index: {}]
  %s18 = inlined_call_operand.vmem [shape: f32[1,512], index: 18, kind: input, shape index: {}]
  %s19 = inlined_call_operand.vmem [shape: f32[1,512], index: 19, kind: input, shape index: {}]
  %s20 = inlined_call_operand.vmem [shape: f32[1,896], index: 20, kind: input, shape index: {}]
  %s21 = inlined_call_operand.vmem [shape: f32[8,128], index: 21, kind: output, shape index: {0}]
  %s22 = inlined_call_operand.vmem [shape: f32[8,896], index: 22, kind: output, shape index: {1}]
  %23 = xla_tuple %s21, %s22
  %s24 = sld [smem:[#allocation0]]
  $region138: #{autoenc_forward.1} parent=0
    _
  %s26 = ssub.s32 1, %s24
  %s27 = scalar_select 0, %s26, %s24
  $region1: #{autoenc_forward.1} parent=0
    #allocation2 [shape = 'u8[917504]{0}', space=vmem, size = 0xe0000, scoped, tag = 'input window, operand 1, single buffered']
    #allocation3 [shape = 's32[1]{0}', space=sflag, size = 0x4, scoped, tag = 'scoped memory for autoenc_forward.1']
    #allocation4 [shape = 'u8[524288]{0}', space=vmem, size = 0x80000, scoped, tag = 'input window, operand 2, single buffered']
    #allocation5 [shape = 's32[1]{0}', space=sflag, size = 0x4, scoped, tag = 'scoped memory for autoenc_forward.1']
    #allocation6 [shape = 'u8[262144]{0}', space=vmem, size = 0x40000, scoped, tag = 'input window, operand 3, single buffered']
    #allocation7 [shape = 'u8[65536]{0}', space=vmem, size = 0x10000, scoped, tag = 'input window, operand 5, single buffered']
    #allocation8 [shape = 's32[1]{0}', space=sflag, size = 0x4, scoped, tag = 'scoped memory for autoenc_forward.1']
    #allocation9 [shape = 'u8[65536]{0}', space=vmem, size = 0x10000, scoped, tag = 'input window, operand 6, single buffered']
    #allocation10 [shape = 'u8[131072]{0}', space=vmem, size = 0x20000, scoped, tag = 'input window, operand 7, single buffered']
    #allocation11 [shape = 's32[1]{0}', space=sflag, size = 0x4, scoped, tag = 'scoped memory for autoenc_forward.1']
    #allocation12 [shape = 'u8[262144]{0}', space=vmem, size = 0x40000, scoped, tag = 'input window, operand 8, single buffered']
    #allocation13 [shape = 'u8[524288]{0}', space=vmem, size = 0x80000, scoped, tag = 'input window, operand 9, single buffered']
    #allocation14 [shape = 's32[1]{0}', space=sflag, size = 0x4, scoped, tag = 'scoped memory for autoenc_forward.1']
    #allocation15 [shape = 'u8[917504]{0}', space=vmem, size = 0xe0000, scoped, tag = 'input window, operand 10, single buffered']
    %28 = vsyncpa [#allocation3], 0
    %29 = vsyncpa [#allocation5], 0
    %30 = vsyncpa [#allocation8], 0
    %31 = vsyncpa [#allocation11], 0
    %32 = vsyncpa [#allocation14], 0
    // Predicated region
    $region2: #{autoenc_forward.1} parent=1 // pred_check
      _
    $region3: #{autoenc_forward.1} parent=1 // pred_check_branch
      %34 = sbr.rel (0) target = $region5
    $region4: #{autoenc_forward.1} parent=1 // pred_region
      _
    $region5: #{autoenc_forward.1} parent=1 // pred_fallthru
      _
    // Predicated region
    $region6: #{autoenc_forward.1} parent=1 // pred_check
      _
    $region7: #{autoenc_forward.1} parent=1 // pred_check_branch
      %36 = sbr.rel (0) target = $region9
    $region8: #{autoenc_forward.1} parent=1 // pred_region
      %s38 = ssub.s32 28672, 28672
      %39 = vsyncadd [#allocation3], %s38
      %s40 = sshll.u32 [#allocation2], 4
      %s41 = int_to_ptr.vmem [resolvable:$true] %s40
      %46 = dma.hbm_to_vmem [thread:$0]  %s1, 28672, %s41, [#allocation3], 256, 256, 16
    $region9: #{autoenc_forward.1} parent=1 // pred_fallthru
      _
    // Predicated region
    $region10: #{autoenc_forward.1} parent=1 // pred_check
      _
    $region11: #{autoenc_forward.1} parent=1 // pred_check_branch
      %48 = sbr.rel (0) target = $region13
    $region12: #{autoenc_forward.1} parent=1 // pred_region
      %s50 = ssub.s32 16384, 16384
      %51 = vsyncadd [#allocation5], %s50
      %s52 = sshll.u32 [#allocation4], 4
      %s53 = int_to_ptr.vmem [resolvable:$true] %s52
      %58 = dma.hbm_to_vmem [thread:$0]  %s2, 16384, %s53, [#allocation5], 256, 256, 16
    $region13: #{autoenc_forward.1} parent=1 // pred_fallthru
      _
    // Predicated region
    $region14: #{autoenc_forward.1} parent=1 // pred_check
      _
    $region15: #{autoenc_forward.1} parent=1 // pred_check_branch
      %60 = sbr.rel (0) target = $region17
    $region16: #{autoenc_forward.1} parent=1 // pred_region
      %s62 = ssub.s32 8192, 8192
      %63 = vsyncadd [#allocation5], %s62
      %s64 = sshll.u32 [#allocation6], 4
      %s65 = int_to_ptr.vmem [resolvable:$true] %s64
      %70 = dma.hbm_to_vmem [thread:$0]  %s3, 8192, %s65, [#allocation5], 128, 128, 8
    $region17: #{autoenc_forward.1} parent=1 // pred_fallthru
      _
    // Predicated region
    $region18: #{autoenc_forward.1} parent=1 // pred_check
      _
    $region19: #{autoenc_forward.1} parent=1 // pred_check_branch
      %72 = sbr.rel (0) target = $region21
    $region20: #{autoenc_forward.1} parent=1 // pred_region
      _
    $region21: #{autoenc_forward.1} parent=1 // pred_fallthru
      _
    // Predicated region
    $region22: #{autoenc_forward.1} parent=1 // pred_check
      _
    $region23: #{autoenc_forward.1} parent=1 // pred_check_branch
      %74 = sbr.rel (0) target = $region25
    $region24: #{autoenc_forward.1} parent=1 // pred_region
      %s76 = ssub.s32 2048, 2048
      %77 = vsyncadd [#allocation8], %s76
      %s78 = sshll.u32 [#allocation7], 4
      %s79 = int_to_ptr.vmem [resolvable:$true] %s78
      %84 = dma.hbm_to_vmem [thread:$0]  %s5, 2048, %s79, [#allocation8], 64, 64, 4
    $region25: #{autoenc_forward.1} parent=1 // pred_fallthru
      _
    // Predicated region
    $region26: #{autoenc_forward.1} parent=1 // pred_check
      _
    $region27: #{autoenc_forward.1} parent=1 // pred_check_branch
      %86 = sbr.rel (0) target = $region29
    $region28: #{autoenc_forward.1} parent=1 // pred_region
      %s88 = ssub.s32 2048, 2048
      %89 = vsyncadd [#allocation8], %s88
      %s90 = sshll.u32 [#allocation9], 4
      %s91 = int_to_ptr.vmem [resolvable:$true] %s90
      %96 = dma.hbm_to_vmem [thread:$0]  %s6, 2048, %s91, [#allocation8], 128, 128, 8
    $region29: #{autoenc_forward.1} parent=1 // pred_fallthru
      _
    // Predicated region
    $region30: #{autoenc_forward.1} parent=1 // pred_check
      _
    $region31: #{autoenc_forward.1} parent=1 // pred_check_branch
      %98 = sbr.rel (0) target = $region33
    $region32: #{autoenc_forward.1} parent=1 // pred_region
      %s100 = ssub.s32 4096, 4096
      %101 = vsyncadd [#allocation11], %s100
      %s102 = sshll.u32 [#allocation10], 4
      %s103 = int_to_ptr.vmem [resolvable:$true] %s102
      %108 = dma.hbm_to_vmem [thread:$0]  %s7, 4096, %s103, [#allocation11], 128, 128, 8
    $region33: #{autoenc_forward.1} parent=1 // pred_fallthru
      _
    // Predicated region
    $region34: #{autoenc_forward.1} parent=1 // pred_check
      _
    $region35: #{autoenc_forward.1} parent=1 // pred_check_branch
      %110 = sbr.rel (0) target = $region37
    $region36: #{autoenc_forward.1} parent=1 // pred_region
      %s112 = ssub.s32 8192, 8192
      %113 = vsyncadd [#allocation11], %s112
      %s114 = sshll.u32 [#allocation12], 4
      %s115 = int_to_ptr.vmem [resolvable:$true] %s114
      %120 = dma.hbm_to_vmem [thread:$0]  %s8, 8192, %s115, [#allocation11], 256, 256, 16
    $region37: #{autoenc_forward.1} parent=1 // pred_fallthru
      _
    // Predicated region
    $region38: #{autoenc_forward.1} parent=1 // pred_check
      _
    $region39: #{autoenc_forward.1} parent=1 // pred_check_branch
      %122 = sbr.rel (0) target = $region41
    $region40: #{autoenc_forward.1} parent=1 // pred_region
      %s124 = ssub.s32 16384, 16384
      %125 = vsyncadd [#allocation14], %s124
      %s126 = sshll.u32 [#allocation13], 4
      %s127 = int_to_ptr.vmem [resolvable:$true] %s126
      %132 = dma.hbm_to_vmem [thread:$0]  %s9, 16384, %s127, [#allocation14], 256, 256, 16
    $region41: #{autoenc_forward.1} parent=1 // pred_fallthru
      _
    // Predicated region
    $region42: #{autoenc_forward.1} parent=1 // pred_check
      _
    $region43: #{autoenc_forward.1} parent=1 // pred_check_branch
      %134 = sbr.rel (0) target = $region45
    $region44: #{autoenc_forward.1} parent=1 // pred_region
      %s136 = ssub.s32 28672, 28672
      %137 = vsyncadd [#allocation14], %s136
      %s138 = sshll.u32 [#allocation15], 4
      %s139 = int_to_ptr.vmem [resolvable:$true] %s138
      %144 = dma.hbm_to_vmem [thread:$0]  %s10, 28672, %s139, [#allocation14], 448, 448, 28
    $region45: #{autoenc_forward.1} parent=1 // pred_fallthru
      _
    // Predicated region
    $region46: #{autoenc_forward.1} parent=1 // pred_check
      _
    $region47: #{autoenc_forward.1} parent=1 // pred_check_branch
      %146 = sbr.rel (0) target = $region49
    $region48: #{autoenc_forward.1} parent=1 // pred_region
      _
    $region49: #{autoenc_forward.1} parent=1 // pred_fallthru
      _
    // Predicated region
    $region50: #{autoenc_forward.1} parent=1 // pred_check
      _
    $region51: #{autoenc_forward.1} parent=1 // pred_check_branch
      %148 = sbr.rel (0) target = $region53
    $region52: #{autoenc_forward.1} parent=1 // pred_region
      _
    $region53: #{autoenc_forward.1} parent=1 // pred_fallthru
      _
    // Predicated region
    $region54: #{autoenc_forward.1} parent=1 // pred_check
      _
    $region55: #{autoenc_forward.1} parent=1 // pred_check_branch
      %150 = sbr.rel (0) target = $region57
    $region56: #{autoenc_forward.1} parent=1 // pred_region
      _
    $region57: #{autoenc_forward.1} parent=1 // pred_fallthru
      _
    // Predicated region
    $region58: #{autoenc_forward.1} parent=1 // pred_check
      _
    $region59: #{autoenc_forward.1} parent=1 // pred_check_branch
      %152 = sbr.rel (0) target = $region61
    $region60: #{autoenc_forward.1} parent=1 // pred_region
      _
    $region61: #{autoenc_forward.1} parent=1 // pred_fallthru
      _
    // Predicated region
    $region62: #{autoenc_forward.1} parent=1 // pred_check
      _
    $region63: #{autoenc_forward.1} parent=1 // pred_check_branch
      %154 = sbr.rel (0) target = $region65
    $region64: #{autoenc_forward.1} parent=1 // pred_region
      _
    $region65: #{autoenc_forward.1} parent=1 // pred_fallthru
      _
    // Predicated region
    $region66: #{autoenc_forward.1} parent=1 // pred_check
      _
    $region67: #{autoenc_forward.1} parent=1 // pred_check_branch
      %156 = sbr.rel (0) target = $region69
    $region68: #{autoenc_forward.1} parent=1 // pred_region
      _
    $region69: #{autoenc_forward.1} parent=1 // pred_fallthru
      _
    // Predicated region
    $region70: #{autoenc_forward.1} parent=1 // pred_check
      _
    $region71: #{autoenc_forward.1} parent=1 // pred_check_branch
      %158 = sbr.rel (0) target = $region73
    $region72: #{autoenc_forward.1} parent=1 // pred_region
      _
    $region73: #{autoenc_forward.1} parent=1 // pred_fallthru
      _
    // Predicated region
    $region74: #{autoenc_forward.1} parent=1 // pred_check
      _
    $region75: #{autoenc_forward.1} parent=1 // pred_check_branch
      %160 = sbr.rel (0) target = $region77
    $region76: #{autoenc_forward.1} parent=1 // pred_region
      _
    $region77: #{autoenc_forward.1} parent=1 // pred_fallthru
      _
    // Predicated region
    $region78: #{autoenc_forward.1} parent=1 // pred_check
      _
    $region79: #{autoenc_forward.1} parent=1 // pred_check_branch
      %162 = sbr.rel (0) target = $region81
    $region80: #{autoenc_forward.1} parent=1 // pred_region
      _
    $region81: #{autoenc_forward.1} parent=1 // pred_fallthru
      _
    // Predicated region
    $region82: #{autoenc_forward.1} parent=1 // pred_check
      _
    $region83: #{autoenc_forward.1} parent=1 // pred_check_branch
      %164 = sbr.rel (0) target = $region85
    $region84: #{autoenc_forward.1} parent=1 // pred_region
      _
    $region85: #{autoenc_forward.1} parent=1 // pred_fallthru
      _
    // Predicated region
    $region86: #{autoenc_forward.1} parent=1 // pred_check
      _
    $region87: #{autoenc_forward.1} parent=1 // pred_check_branch
      %166 = sbr.rel (0) target = $region89
    $region88: #{autoenc_forward.1} parent=1 // pred_region
      %167 = dma.done [#allocation3], 28672
    $region89: #{autoenc_forward.1} parent=1 // pred_fallthru
      _
    // Predicated region
    $region90: #{autoenc_forward.1} parent=1 // pred_check
      _
    $region91: #{autoenc_forward.1} parent=1 // pred_check_branch
      %169 = sbr.rel (0) target = $region93
    $region92: #{autoenc_forward.1} parent=1 // pred_region
      %170 = dma.done [#allocation5], 16384
    $region93: #{autoenc_forward.1} parent=1 // pred_fallthru
      _
    // Predicated region
    $region94: #{autoenc_forward.1} parent=1 // pred_check
      _
    $region95: #{autoenc_forward.1} parent=1 // pred_check_branch
      %172 = sbr.rel (0) target = $region97
    $region96: #{autoenc_forward.1} parent=1 // pred_region
      %173 = dma.done [#allocation5], 8192
    $region97: #{autoenc_forward.1} parent=1 // pred_fallthru
      _
    // Predicated region
    $region98: #{autoenc_forward.1} parent=1 // pred_check
      _
    $region99: #{autoenc_forward.1} parent=1 // pred_check_branch
      %175 = sbr.rel (0) target = $region101
    $region100: #{autoenc_forward.1} parent=1 // pred_region
      %176 = dma.done [#allocation8], 2048
    $region101: #{autoenc_forward.1} parent=1 // pred_fallthru
      _
    // Predicated region
    $region102: #{autoenc_forward.1} parent=1 // pred_check
      _
    $region103: #{autoenc_forward.1} parent=1 // pred_check_branch
      %178 = sbr.rel (0) target = $region105
    $region104: #{autoenc_forward.1} parent=1 // pred_region
      %179 = dma.done [#allocation8], 2048
    $region105: #{autoenc_forward.1} parent=1 // pred_fallthru
      _
    // Predicated region
    $region106: #{autoenc_forward.1} parent=1 // pred_check
      _
    $region107: #{autoenc_forward.1} parent=1 // pred_check_branch
      %181 = sbr.rel (0) target = $region109
    $region108: #{autoenc_forward.1} parent=1 // pred_region
      %182 = dma.done [#allocation11], 4096
    $region109: #{autoenc_forward.1} parent=1 // pred_fallthru
      _
    // Predicated region
    $region110: #{autoenc_forward.1} parent=1 // pred_check
      _
    $region111: #{autoenc_forward.1} parent=1 // pred_check_branch
      %184 = sbr.rel (0) target = $region113
    $region112: #{autoenc_forward.1} parent=1 // pred_region
      %185 = dma.done [#allocation11], 8192
    $region113: #{autoenc_forward.1} parent=1 // pred_fallthru
      _
    // Predicated region
    $region114: #{autoenc_forward.1} parent=1 // pred_check
      _
    $region115: #{autoenc_forward.1} parent=1 // pred_check_branch
      %187 = sbr.rel (0) target = $region117
    $region116: #{autoenc_forward.1} parent=1 // pred_region
      %188 = dma.done [#allocation14], 16384
    $region117: #{autoenc_forward.1} parent=1 // pred_fallthru
      _
    // Predicated region
    $region118: #{autoenc_forward.1} parent=1 // pred_check
      _
    $region119: #{autoenc_forward.1} parent=1 // pred_check_branch
      %190 = sbr.rel (0) target = $region121
    $region120: #{autoenc_forward.1} parent=1 // pred_region
      %191 = dma.done [#allocation14], 28672
    $region121: #{autoenc_forward.1} parent=1 // pred_fallthru
      _
    %v193 = vld [vmem:[%s0] sm:$0xff]
    %v194 = vld [vmem:[%s0 + $0x8] sm:$0xff]
    %v195 = vld [vmem:[%s0 + $0x10] sm:$0xff]
    %v196 = vld [vmem:[%s0 + $0x18] sm:$0xff]
    %v197 = vld [vmem:[%s0 + $0x20] sm:$0xff]
    %v198 = vld [vmem:[%s0 + $0x28] sm:$0xff]
    %v199 = vld [vmem:[%s0 + $0x30] sm:$0xff]
    %v200 = vld [vmem:[#allocation2] sm:$0xff]
    %v201 = vld [vmem:[#allocation2 + $0x8] sm:$0xff]
    %v202 = vld [vmem:[#allocation2 + $0x10] sm:$0xff]
    %v203 = vld [vmem:[#allocation2 + $0x18] sm:$0xff]
    %v204 = vld [vmem:[#allocation2 + $0x20] sm:$0xff]
    %v205 = vld [vmem:[#allocation2 + $0x28] sm:$0xff]
    %v206 = vld [vmem:[#allocation2 + $0x30] sm:$0xff]
    %v207 = vld [vmem:[#allocation2 + $0x38] sm:$0xff]
    %v208 = vld [vmem:[#allocation2 + $0x40] sm:$0xff]
    %v209 = vld [vmem:[#allocation2 + $0x48] sm:$0xff]
    %v210 = vld [vmem:[#allocation2 + $0x50] sm:$0xff]
    %v211 = vld [vmem:[#allocation2 + $0x58] sm:$0xff]
    %v212 = vld [vmem:[#allocation2 + $0x60] sm:$0xff]
    %v213 = vld [vmem:[#allocation2 + $0x68] sm:$0xff]
    %v214 = vld [vmem:[#allocation2 + $0x70] sm:$0xff]
    %v215 = vld [vmem:[#allocation2 + $0x78] sm:$0xff]
    %v216 = vld [vmem:[#allocation2 + $0x80] sm:$0xff]
    %v217 = vld [vmem:[#allocation2 + $0x88] sm:$0xff]
    %v218 = vld [vmem:[#allocation2 + $0x90] sm:$0xff]
    %v219 = vld [vmem:[#allocation2 + $0x98] sm:$0xff]
    %v220 = vld [vmem:[#allocation2 + $0xa0] sm:$0xff]
    %v221 = vld [vmem:[#allocation2 + $0xa8] sm:$0xff]
    %v222 = vld [vmem:[#allocation2 + $0xb0] sm:$0xff]
    %v223 = vld [vmem:[#allocation2 + $0xb8] sm:$0xff]
    %v224 = vld [vmem:[#allocation2 + $0xc0] sm:$0xff]
    %v225 = vld [vmem:[#allocation2 + $0xc8] sm:$0xff]
    %v226 = vld [vmem:[#allocation2 + $0xd0] sm:$0xff]
    %v227 = vld [vmem:[#allocation2 + $0xd8] sm:$0xff]
    %v228 = vld [vmem:[#allocation2 + $0xe0] sm:$0xff]
    %v229 = vld [vmem:[#allocation2 + $0xe8] sm:$0xff]
    %v230 = vld [vmem:[#allocation2 + $0xf0] sm:$0xff]
    %v231 = vld [vmem:[#allocation2 + $0xf8] sm:$0xff]
    %v232 = vld [vmem:[#allocation2 + $0x100] sm:$0xff]
    %v233 = vld [vmem:[#allocation2 + $0x108] sm:$0xff]
    %v234 = vld [vmem:[#allocation2 + $0x110] sm:$0xff]
    %v235 = vld [vmem:[#allocation2 + $0x118] sm:$0xff]
    %v236 = vld [vmem:[#allocation2 + $0x120] sm:$0xff]
    %v237 = vld [vmem:[#allocation2 + $0x128] sm:$0xff]
    %v238 = vld [vmem:[#allocation2 + $0x130] sm:$0xff]
    %v239 = vld [vmem:[#allocation2 + $0x138] sm:$0xff]
    %v240 = vld [vmem:[#allocation2 + $0x140] sm:$0xff]
    %v241 = vld [vmem:[#allocation2 + $0x148] sm:$0xff]
    %v242 = vld [vmem:[#allocation2 + $0x150] sm:$0xff]
    %v243 = vld [vmem:[#allocation2 + $0x158] sm:$0xff]
    %v244 = vld [vmem:[#allocation2 + $0x160] sm:$0xff]
    %v245 = vld [vmem:[#allocation2 + $0x168] sm:$0xff]
    %v246 = vld [vmem:[#allocation2 + $0x170] sm:$0xff]
    %v247 = vld [vmem:[#allocation2 + $0x178] sm:$0xff]
    %v248 = vld [vmem:[#allocation2 + $0x180] sm:$0xff]
    %v249 = vld [vmem:[#allocation2 + $0x188] sm:$0xff]
    %v250 = vld [vmem:[#allocation2 + $0x190] sm:$0xff]
    %v251 = vld [vmem:[#allocation2 + $0x198] sm:$0xff]
    %v252 = vld [vmem:[#allocation2 + $0x1a0] sm:$0xff]
    %v253 = vld [vmem:[#allocation2 + $0x1a8] sm:$0xff]
    %v254 = vld [vmem:[#allocation2 + $0x1b0] sm:$0xff]
    %v255 = vld [vmem:[#allocation2 + $0x1b8] sm:$0xff]
    %v256 = vld [vmem:[#allocation2 + $0x1c0] sm:$0xff]
    %v257 = vld [vmem:[#allocation2 + $0x1c8] sm:$0xff]
    %v258 = vld [vmem:[#allocation2 + $0x1d0] sm:$0xff]
    %v259 = vld [vmem:[#allocation2 + $0x1d8] sm:$0xff]
    %v260 = vld [vmem:[#allocation2 + $0x1e0] sm:$0xff]
    %v261 = vld [vmem:[#allocation2 + $0x1e8] sm:$0xff]
    %v262 = vld [vmem:[#allocation2 + $0x1f0] sm:$0xff]
    %v263 = vld [vmem:[#allocation2 + $0x1f8] sm:$0xff]
    %v264 = vld [vmem:[#allocation2 + $0x200] sm:$0xff]
    %v265 = vld [vmem:[#allocation2 + $0x208] sm:$0xff]
    %v266 = vld [vmem:[#allocation2 + $0x210] sm:$0xff]
    %v267 = vld [vmem:[#allocation2 + $0x218] sm:$0xff]
    %v268 = vld [vmem:[#allocation2 + $0x220] sm:$0xff]
    %v269 = vld [vmem:[#allocation2 + $0x228] sm:$0xff]
    %v270 = vld [vmem:[#allocation2 + $0x230] sm:$0xff]
    %v271 = vld [vmem:[#allocation2 + $0x238] sm:$0xff]
    %v272 = vld [vmem:[#allocation2 + $0x240] sm:$0xff]
    %v273 = vld [vmem:[#allocation2 + $0x248] sm:$0xff]
    %v274 = vld [vmem:[#allocation2 + $0x250] sm:$0xff]
    %v275 = vld [vmem:[#allocation2 + $0x258] sm:$0xff]
    %v276 = vld [vmem:[#allocation2 + $0x260] sm:$0xff]
    %v277 = vld [vmem:[#allocation2 + $0x268] sm:$0xff]
    %v278 = vld [vmem:[#allocation2 + $0x270] sm:$0xff]
    %v279 = vld [vmem:[#allocation2 + $0x278] sm:$0xff]
    %v280 = vld [vmem:[#allocation2 + $0x280] sm:$0xff]
    %v281 = vld [vmem:[#allocation2 + $0x288] sm:$0xff]
    %v282 = vld [vmem:[#allocation2 + $0x290] sm:$0xff]
    %v283 = vld [vmem:[#allocation2 + $0x298] sm:$0xff]
    %v284 = vld [vmem:[#allocation2 + $0x2a0] sm:$0xff]
    %v285 = vld [vmem:[#allocation2 + $0x2a8] sm:$0xff]
    %v286 = vld [vmem:[#allocation2 + $0x2b0] sm:$0xff]
    %v287 = vld [vmem:[#allocation2 + $0x2b8] sm:$0xff]
    %v288 = vld [vmem:[#allocation2 + $0x2c0] sm:$0xff]
    %v289 = vld [vmem:[#allocation2 + $0x2c8] sm:$0xff]
    %v290 = vld [vmem:[#allocation2 + $0x2d0] sm:$0xff]
    %v291 = vld [vmem:[#allocation2 + $0x2d8] sm:$0xff]
    %v292 = vld [vmem:[#allocation2 + $0x2e0] sm:$0xff]
    %v293 = vld [vmem:[#allocation2 + $0x2e8] sm:$0xff]
    %v294 = vld [vmem:[#allocation2 + $0x2f0] sm:$0xff]
    %v295 = vld [vmem:[#allocation2 + $0x2f8] sm:$0xff]
    %v296 = vld [vmem:[#allocation2 + $0x300] sm:$0xff]
    %v297 = vld [vmem:[#allocation2 + $0x308] sm:$0xff]
    %v298 = vld [vmem:[#allocation2 + $0x310] sm:$0xff]
    %v299 = vld [vmem:[#allocation2 + $0x318] sm:$0xff]
    %v300 = vld [vmem:[#allocation2 + $0x320] sm:$0xff]
    %v301 = vld [vmem:[#allocation2 + $0x328] sm:$0xff]
    %v302 = vld [vmem:[#allocation2 + $0x330] sm:$0xff]
    %v303 = vld [vmem:[#allocation2 + $0x338] sm:$0xff]
    %v304 = vld [vmem:[#allocation2 + $0x340] sm:$0xff]
    %v305 = vld [vmem:[#allocation2 + $0x348] sm:$0xff]
    %v306 = vld [vmem:[#allocation2 + $0x350] sm:$0xff]
    %v307 = vld [vmem:[#allocation2 + $0x358] sm:$0xff]
    %v308 = vld [vmem:[#allocation2 + $0x360] sm:$0xff]
    %v309 = vld [vmem:[#allocation2 + $0x368] sm:$0xff]
    %v310 = vld [vmem:[#allocation2 + $0x370] sm:$0xff]
    %v311 = vld [vmem:[#allocation2 + $0x378] sm:$0xff]
    %v312 = vld [vmem:[#allocation2 + $0x380] sm:$0xff]
    %v313 = vld [vmem:[#allocation2 + $0x388] sm:$0xff]
    %v314 = vld [vmem:[#allocation2 + $0x390] sm:$0xff]
    %v315 = vld [vmem:[#allocation2 + $0x398] sm:$0xff]
    %v316 = vld [vmem:[#allocation2 + $0x3a0] sm:$0xff]
    %v317 = vld [vmem:[#allocation2 + $0x3a8] sm:$0xff]
    %v318 = vld [vmem:[#allocation2 + $0x3b0] sm:$0xff]
    %v319 = vld [vmem:[#allocation2 + $0x3b8] sm:$0xff]
    %v320 = vld [vmem:[#allocation2 + $0x3c0] sm:$0xff]
    %v321 = vld [vmem:[#allocation2 + $0x3c8] sm:$0xff]
    %v322 = vld [vmem:[#allocation2 + $0x3d0] sm:$0xff]
    %v323 = vld [vmem:[#allocation2 + $0x3d8] sm:$0xff]
    %v324 = vld [vmem:[#allocation2 + $0x3e0] sm:$0xff]
    %v325 = vld [vmem:[#allocation2 + $0x3e8] sm:$0xff]
    %v326 = vld [vmem:[#allocation2 + $0x3f0] sm:$0xff]
    %v327 = vld [vmem:[#allocation2 + $0x3f8] sm:$0xff]
    %v328 = vld [vmem:[#allocation2 + $0x400] sm:$0xff]
    %v329 = vld [vmem:[#allocation2 + $0x408] sm:$0xff]
    %v330 = vld [vmem:[#allocation2 + $0x410] sm:$0xff]
    %v331 = vld [vmem:[#allocation2 + $0x418] sm:$0xff]
    %v332 = vld [vmem:[#allocation2 + $0x420] sm:$0xff]
    %v333 = vld [vmem:[#allocation2 + $0x428] sm:$0xff]
    %v334 = vld [vmem:[#allocation2 + $0x430] sm:$0xff]
    %v335 = vld [vmem:[#allocation2 + $0x438] sm:$0xff]
    %v336 = vld [vmem:[#allocation2 + $0x440] sm:$0xff]
    %v337 = vld [vmem:[#allocation2 + $0x448] sm:$0xff]
    %v338 = vld [vmem:[#allocation2 + $0x450] sm:$0xff]
    %v339 = vld [vmem:[#allocation2 + $0x458] sm:$0xff]
    %v340 = vld [vmem:[#allocation2 + $0x460] sm:$0xff]
    %v341 = vld [vmem:[#allocation2 + $0x468] sm:$0xff]
    %v342 = vld [vmem:[#allocation2 + $0x470] sm:$0xff]
    %v343 = vld [vmem:[#allocation2 + $0x478] sm:$0xff]
    %v344 = vld [vmem:[#allocation2 + $0x480] sm:$0xff]
    %v345 = vld [vmem:[#allocation2 + $0x488] sm:$0xff]
    %v346 = vld [vmem:[#allocation2 + $0x490] sm:$0xff]
    %v347 = vld [vmem:[#allocation2 + $0x498] sm:$0xff]
    %v348 = vld [vmem:[#allocation2 + $0x4a0] sm:$0xff]
    %v349 = vld [vmem:[#allocation2 + $0x4a8] sm:$0xff]
    %v350 = vld [vmem:[#allocation2 + $0x4b0] sm:$0xff]
    %v351 = vld [vmem:[#allocation2 + $0x4b8] sm:$0xff]
    %v352 = vld [vmem:[#allocation2 + $0x4c0] sm:$0xff]
    %v353 = vld [vmem:[#allocation2 + $0x4c8] sm:$0xff]
    %v354 = vld [vmem:[#allocation2 + $0x4d0] sm:$0xff]
    %v355 = vld [vmem:[#allocation2 + $0x4d8] sm:$0xff]
    %v356 = vld [vmem:[#allocation2 + $0x4e0] sm:$0xff]
    %v357 = vld [vmem:[#allocation2 + $0x4e8] sm:$0xff]
    %v358 = vld [vmem:[#allocation2 + $0x4f0] sm:$0xff]
    %v359 = vld [vmem:[#allocation2 + $0x4f8] sm:$0xff]
    %v360 = vld [vmem:[#allocation2 + $0x500] sm:$0xff]
    %v361 = vld [vmem:[#allocation2 + $0x508] sm:$0xff]
    %v362 = vld [vmem:[#allocation2 + $0x510] sm:$0xff]
    %v363 = vld [vmem:[#allocation2 + $0x518] sm:$0xff]
    %v364 = vld [vmem:[#allocation2 + $0x520] sm:$0xff]
    %v365 = vld [vmem:[#allocation2 + $0x528] sm:$0xff]
    %v366 = vld [vmem:[#allocation2 + $0x530] sm:$0xff]
    %v367 = vld [vmem:[#allocation2 + $0x538] sm:$0xff]
    %v368 = vld [vmem:[#allocation2 + $0x540] sm:$0xff]
    %v369 = vld [vmem:[#allocation2 + $0x548] sm:$0xff]
    %v370 = vld [vmem:[#allocation2 + $0x550] sm:$0xff]
    %v371 = vld [vmem:[#allocation2 + $0x558] sm:$0xff]
    %v372 = vld [vmem:[#allocation2 + $0x560] sm:$0xff]
    %v373 = vld [vmem:[#allocation2 + $0x568] sm:$0xff]
    %v374 = vld [vmem:[#allocation2 + $0x570] sm:$0xff]
    %v375 = vld [vmem:[#allocation2 + $0x578] sm:$0xff]
    %v376 = vld [vmem:[#allocation2 + $0x580] sm:$0xff]
    %v377 = vld [vmem:[#allocation2 + $0x588] sm:$0xff]
    %v378 = vld [vmem:[#allocation2 + $0x590] sm:$0xff]
    %v379 = vld [vmem:[#allocation2 + $0x598] sm:$0xff]
    %v380 = vld [vmem:[#allocation2 + $0x5a0] sm:$0xff]
    %v381 = vld [vmem:[#allocation2 + $0x5a8] sm:$0xff]
    %v382 = vld [vmem:[#allocation2 + $0x5b0] sm:$0xff]
    %v383 = vld [vmem:[#allocation2 + $0x5b8] sm:$0xff]
    %v384 = vld [vmem:[#allocation2 + $0x5c0] sm:$0xff]
    %v385 = vld [vmem:[#allocation2 + $0x5c8] sm:$0xff]
    %v386 = vld [vmem:[#allocation2 + $0x5d0] sm:$0xff]
    %v387 = vld [vmem:[#allocation2 + $0x5d8] sm:$0xff]
    %v388 = vld [vmem:[#allocation2 + $0x5e0] sm:$0xff]
    %v389 = vld [vmem:[#allocation2 + $0x5e8] sm:$0xff]
    %v390 = vld [vmem:[#allocation2 + $0x5f0] sm:$0xff]
    %v391 = vld [vmem:[#allocation2 + $0x5f8] sm:$0xff]
    %v392 = vld [vmem:[#allocation2 + $0x600] sm:$0xff]
    %v393 = vld [vmem:[#allocation2 + $0x608] sm:$0xff]
    %v394 = vld [vmem:[#allocation2 + $0x610] sm:$0xff]
    %v395 = vld [vmem:[#allocation2 + $0x618] sm:$0xff]
    %v396 = vld [vmem:[#allocation2 + $0x620] sm:$0xff]
    %v397 = vld [vmem:[#allocation2 + $0x628] sm:$0xff]
    %v398 = vld [vmem:[#allocation2 + $0x630] sm:$0xff]
    %v399 = vld [vmem:[#allocation2 + $0x638] sm:$0xff]
    %v400 = vld [vmem:[#allocation2 + $0x640] sm:$0xff]
    %v401 = vld [vmem:[#allocation2 + $0x648] sm:$0xff]
    %v402 = vld [vmem:[#allocation2 + $0x650] sm:$0xff]
    %v403 = vld [vmem:[#allocation2 + $0x658] sm:$0xff]
    %v404 = vld [vmem:[#allocation2 + $0x660] sm:$0xff]
    %v405 = vld [vmem:[#allocation2 + $0x668] sm:$0xff]
    %v406 = vld [vmem:[#allocation2 + $0x670] sm:$0xff]
    %v407 = vld [vmem:[#allocation2 + $0x678] sm:$0xff]
    %v408 = vld [vmem:[#allocation2 + $0x680] sm:$0xff]
    %v409 = vld [vmem:[#allocation2 + $0x688] sm:$0xff]
    %v410 = vld [vmem:[#allocation2 + $0x690] sm:$0xff]
    %v411 = vld [vmem:[#allocation2 + $0x698] sm:$0xff]
    %v412 = vld [vmem:[#allocation2 + $0x6a0] sm:$0xff]
    %v413 = vld [vmem:[#allocation2 + $0x6a8] sm:$0xff]
    %v414 = vld [vmem:[#allocation2 + $0x6b0] sm:$0xff]
    %v415 = vld [vmem:[#allocation2 + $0x6b8] sm:$0xff]
    %v416 = vld [vmem:[#allocation2 + $0x6c0] sm:$0xff]
    %v417 = vld [vmem:[#allocation2 + $0x6c8] sm:$0xff]
    %v418 = vld [vmem:[#allocation2 + $0x6d0] sm:$0xff]
    %v419 = vld [vmem:[#allocation2 + $0x6d8] sm:$0xff]
    %v420 = vld [vmem:[#allocation2 + $0x6e0] sm:$0xff]
    %v421 = vld [vmem:[#allocation2 + $0x6e8] sm:$0xff]
    %v422 = vld [vmem:[#allocation2 + $0x6f0] sm:$0xff]
    %v423 = vld [vmem:[#allocation2 + $0x6f8] sm:$0xff]
    %v424 = vld [vmem:[%s11] sm:$0xf]
    %v425 = vpack.c.bf16 %v193, %v193
    %v426 = vpack.c.bf16 %v194, %v194
    %v427 = vpack.c.bf16 %v195, %v195
    %v428 = vpack.c.bf16 %v196, %v196
    %v429 = vpack.c.bf16 %v197, %v197
    %v430 = vpack.c.bf16 %v198, %v198
    %v431 = vpack.c.bf16 %v199, %v199
    %v433 = vlaneseq
    %v434 = vshrl.u32 %v433, 7
    %v435 = vsub.s32 0, %v434
    %v436 = vrot.slane %v424, %v435
    %v437 = vlaneseq
    %v438 = vshrl.u32 %v437, 7
    %v439 = vsub.s32 1, %v438
    %v440 = vrot.slane %v424, %v439
    %v441 = vlaneseq
    %v442 = vshrl.u32 %v441, 7
    %v443 = vsub.s32 2, %v442
    %v444 = vrot.slane %v424, %v443
    %v445 = vlaneseq
    %v446 = vshrl.u32 %v445, 7
    %v447 = vsub.s32 3, %v446
    %v448 = vrot.slane %v424, %v447
    %v677 = vunpack.c.l.b16 %v200
    %v678 = vunpack.c.h.b16 %v200
    %v679 = vunpack.c.l.b16 %v201
    %v680 = vunpack.c.h.b16 %v201
    %v681 = vunpack.c.l.b16 %v202
    %v682 = vunpack.c.h.b16 %v202
    %v683 = vunpack.c.l.b16 %v203
    %v684 = vunpack.c.h.b16 %v203
    %v685 = vunpack.c.l.b16 %v204
    %v686 = vunpack.c.h.b16 %v204
    %v687 = vunpack.c.l.b16 %v205
    %v688 = vunpack.c.h.b16 %v205
    %v689 = vunpack.c.l.b16 %v206
    %v690 = vunpack.c.h.b16 %v206
    %v691 = vunpack.c.l.b16 %v207
    %v692 = vunpack.c.h.b16 %v207
    %v693 = vunpack.c.l.b16 %v208
    %v694 = vunpack.c.h.b16 %v208
    %v695 = vunpack.c.l.b16 %v209
    %v696 = vunpack.c.h.b16 %v209
    %v697 = vunpack.c.l.b16 %v210
    %v698 = vunpack.c.h.b16 %v210
    %v699 = vunpack.c.l.b16 %v211
    %v700 = vunpack.c.h.b16 %v211
    %v701 = vunpack.c.l.b16 %v212
    %v702 = vunpack.c.h.b16 %v212
    %v703 = vunpack.c.l.b16 %v213
    %v704 = vunpack.c.h.b16 %v213
    %v705 = vunpack.c.l.b16 %v214
    %v706 = vunpack.c.h.b16 %v214
    %v707 = vunpack.c.l.b16 %v215
    %v708 = vunpack.c.h.b16 %v215
    %v709 = vunpack.c.l.b16 %v216
    %v710 = vunpack.c.h.b16 %v216
    %v711 = vunpack.c.l.b16 %v217
    %v712 = vunpack.c.h.b16 %v217
    %v713 = vunpack.c.l.b16 %v218
    %v714 = vunpack.c.h.b16 %v218
    %v715 = vunpack.c.l.b16 %v219
    %v716 = vunpack.c.h.b16 %v219
    %v717 = vunpack.c.l.b16 %v220
    %v718 = vunpack.c.h.b16 %v220
    %v719 = vunpack.c.l.b16 %v221
    %v720 = vunpack.c.h.b16 %v221
    %v721 = vunpack.c.l.b16 %v222
    %v722 = vunpack.c.h.b16 %v222
    %v723 = vunpack.c.l.b16 %v223
    %v724 = vunpack.c.h.b16 %v223
    %v725 = vunpack.c.l.b16 %v224
    %v726 = vunpack.c.h.b16 %v224
    %v727 = vunpack.c.l.b16 %v225
    %v728 = vunpack.c.h.b16 %v225
    %v729 = vunpack.c.l.b16 %v226
    %v730 = vunpack.c.h.b16 %v226
    %v731 = vunpack.c.l.b16 %v227
    %v732 = vunpack.c.h.b16 %v227
    %v733 = vunpack.c.l.b16 %v228
    %v734 = vunpack.c.h.b16 %v228
    %v735 = vunpack.c.l.b16 %v229
    %v736 = vunpack.c.h.b16 %v229
    %v737 = vunpack.c.l.b16 %v230
    %v738 = vunpack.c.h.b16 %v230
    %v739 = vunpack.c.l.b16 %v231
    %v740 = vunpack.c.h.b16 %v231
    %v741 = vunpack.c.l.b16 %v232
    %v742 = vunpack.c.h.b16 %v232
    %v743 = vunpack.c.l.b16 %v233
    %v744 = vunpack.c.h.b16 %v233
    %v745 = vunpack.c.l.b16 %v234
    %v746 = vunpack.c.h.b16 %v234
    %v747 = vunpack.c.l.b16 %v235
    %v748 = vunpack.c.h.b16 %v235
    %v749 = vunpack.c.l.b16 %v236
    %v750 = vunpack.c.h.b16 %v236
    %v751 = vunpack.c.l.b16 %v237
    %v752 = vunpack.c.h.b16 %v237
    %v753 = vunpack.c.l.b16 %v238
    %v754 = vunpack.c.h.b16 %v238
    %v755 = vunpack.c.l.b16 %v239
    %v756 = vunpack.c.h.b16 %v239
    %v757 = vunpack.c.l.b16 %v240
    %v758 = vunpack.c.h.b16 %v240
    %v759 = vunpack.c.l.b16 %v241
    %v760 = vunpack.c.h.b16 %v241
    %v761 = vunpack.c.l.b16 %v242
    %v762 = vunpack.c.h.b16 %v242
    %v763 = vunpack.c.l.b16 %v243
    %v764 = vunpack.c.h.b16 %v243
    %v765 = vunpack.c.l.b16 %v244
    %v766 = vunpack.c.h.b16 %v244
    %v767 = vunpack.c.l.b16 %v245
    %v768 = vunpack.c.h.b16 %v245
    %v769 = vunpack.c.l.b16 %v246
    %v770 = vunpack.c.h.b16 %v246
    %v771 = vunpack.c.l.b16 %v247
    %v772 = vunpack.c.h.b16 %v247
    %v773 = vunpack.c.l.b16 %v248
    %v774 = vunpack.c.h.b16 %v248
    %v775 = vunpack.c.l.b16 %v249
    %v776 = vunpack.c.h.b16 %v249
    %v777 = vunpack.c.l.b16 %v250
    %v778 = vunpack.c.h.b16 %v250
    %v779 = vunpack.c.l.b16 %v251
    %v780 = vunpack.c.h.b16 %v251
    %v781 = vunpack.c.l.b16 %v252
    %v782 = vunpack.c.h.b16 %v252
    %v783 = vunpack.c.l.b16 %v253
    %v784 = vunpack.c.h.b16 %v253
    %v785 = vunpack.c.l.b16 %v254
    %v786 = vunpack.c.h.b16 %v254
    %v787 = vunpack.c.l.b16 %v255
    %v788 = vunpack.c.h.b16 %v255
    %v789 = vunpack.c.l.b16 %v256
    %v790 = vunpack.c.h.b16 %v256
    %v791 = vunpack.c.l.b16 %v257
    %v792 = vunpack.c.h.b16 %v257
    %v793 = vunpack.c.l.b16 %v258
    %v794 = vunpack.c.h.b16 %v258
    %v795 = vunpack.c.l.b16 %v259
    %v796 = vunpack.c.h.b16 %v259
    %v797 = vunpack.c.l.b16 %v260
    %v798 = vunpack.c.h.b16 %v260
    %v799 = vunpack.c.l.b16 %v261
    %v800 = vunpack.c.h.b16 %v261
    %v801 = vunpack.c.l.b16 %v262
    %v802 = vunpack.c.h.b16 %v262
    %v803 = vunpack.c.l.b16 %v263
    %v804 = vunpack.c.h.b16 %v263
    %v805 = vunpack.c.l.b16 %v264
    %v806 = vunpack.c.h.b16 %v264
    %v807 = vunpack.c.l.b16 %v265
    %v808 = vunpack.c.h.b16 %v265
    %v809 = vunpack.c.l.b16 %v266
    %v810 = vunpack.c.h.b16 %v266
    %v811 = vunpack.c.l.b16 %v267
    %v812 = vunpack.c.h.b16 %v267
    %v813 = vunpack.c.l.b16 %v268
    %v814 = vunpack.c.h.b16 %v268
    %v815 = vunpack.c.l.b16 %v269
    %v816 = vunpack.c.h.b16 %v269
    %v817 = vunpack.c.l.b16 %v270
    %v818 = vunpack.c.h.b16 %v270
    %v819 = vunpack.c.l.b16 %v271
    %v820 = vunpack.c.h.b16 %v271
    %v821 = vunpack.c.l.b16 %v272
    %v822 = vunpack.c.h.b16 %v272
    %v823 = vunpack.c.l.b16 %v273
    %v824 = vunpack.c.h.b16 %v273
    %v825 = vunpack.c.l.b16 %v274
    %v826 = vunpack.c.h.b16 %v274
    %v827 = vunpack.c.l.b16 %v275
    %v828 = vunpack.c.h.b16 %v275
    %v829 = vunpack.c.l.b16 %v276
    %v830 = vunpack.c.h.b16 %v276
    %v831 = vunpack.c.l.b16 %v277
    %v832 = vunpack.c.h.b16 %v277
    %v833 = vunpack.c.l.b16 %v278
    %v834 = vunpack.c.h.b16 %v278
    %v835 = vunpack.c.l.b16 %v279
    %v836 = vunpack.c.h.b16 %v279
    %v837 = vunpack.c.l.b16 %v280
    %v838 = vunpack.c.h.b16 %v280
    %v839 = vunpack.c.l.b16 %v281
    %v840 = vunpack.c.h.b16 %v281
    %v841 = vunpack.c.l.b16 %v282
    %v842 = vunpack.c.h.b16 %v282
    %v843 = vunpack.c.l.b16 %v283
    %v844 = vunpack.c.h.b16 %v283
    %v845 = vunpack.c.l.b16 %v284
    %v846 = vunpack.c.h.b16 %v284
    %v847 = vunpack.c.l.b16 %v285
    %v848 = vunpack.c.h.b16 %v285
    %v849 = vunpack.c.l.b16 %v286
    %v850 = vunpack.c.h.b16 %v286
    %v851 = vunpack.c.l.b16 %v287
    %v852 = vunpack.c.h.b16 %v287
    %v853 = vunpack.c.l.b16 %v288
    %v854 = vunpack.c.h.b16 %v288
    %v855 = vunpack.c.l.b16 %v289
    %v856 = vunpack.c.h.b16 %v289
    %v857 = vunpack.c.l.b16 %v290
    %v858 = vunpack.c.h.b16 %v290
    %v859 = vunpack.c.l.b16 %v291
    %v860 = vunpack.c.h.b16 %v291
    %v861 = vunpack.c.l.b16 %v292
    %v862 = vunpack.c.h.b16 %v292
    %v863 = vunpack.c.l.b16 %v293
    %v864 = vunpack.c.h.b16 %v293
    %v865 = vunpack.c.l.b16 %v294
    %v866 = vunpack.c.h.b16 %v294
    %v867 = vunpack.c.l.b16 %v295
    %v868 = vunpack.c.h.b16 %v295
    %v869 = vunpack.c.l.b16 %v296
    %v870 = vunpack.c.h.b16 %v296
    %v871 = vunpack.c.l.b16 %v297
    %v872 = vunpack.c.h.b16 %v297
    %v873 = vunpack.c.l.b16 %v298
    %v874 = vunpack.c.h.b16 %v298
    %v875 = vunpack.c.l.b16 %v299
    %v876 = vunpack.c.h.b16 %v299
    %v877 = vunpack.c.l.b16 %v300
    %v878 = vunpack.c.h.b16 %v300
    %v879 = vunpack.c.l.b16 %v301
    %v880 = vunpack.c.h.b16 %v301
    %v881 = vunpack.c.l.b16 %v302
    %v882 = vunpack.c.h.b16 %v302
    %v883 = vunpack.c.l.b16 %v303
    %v884 = vunpack.c.h.b16 %v303
    %v885 = vunpack.c.l.b16 %v304
    %v886 = vunpack.c.h.b16 %v304
    %v887 = vunpack.c.l.b16 %v305
    %v888 = vunpack.c.h.b16 %v305
    %v889 = vunpack.c.l.b16 %v306
    %v890 = vunpack.c.h.b16 %v306
    %v891 = vunpack.c.l.b16 %v307
    %v892 = vunpack.c.h.b16 %v307
    %v893 = vunpack.c.l.b16 %v308
    %v894 = vunpack.c.h.b16 %v308
    %v895 = vunpack.c.l.b16 %v309
    %v896 = vunpack.c.h.b16 %v309
    %v897 = vunpack.c.l.b16 %v310
    %v898 = vunpack.c.h.b16 %v310
    %v899 = vunpack.c.l.b16 %v311
    %v900 = vunpack.c.h.b16 %v311
    %v901 = vunpack.c.l.b16 %v312
    %v902 = vunpack.c.h.b16 %v312
    %v903 = vunpack.c.l.b16 %v313
    %v904 = vunpack.c.h.b16 %v313
    %v905 = vunpack.c.l.b16 %v314
    %v906 = vunpack.c.h.b16 %v314
    %v907 = vunpack.c.l.b16 %v315
    %v908 = vunpack.c.h.b16 %v315
    %v909 = vunpack.c.l.b16 %v316
    %v910 = vunpack.c.h.b16 %v316
    %v911 = vunpack.c.l.b16 %v317
    %v912 = vunpack.c.h.b16 %v317
    %v913 = vunpack.c.l.b16 %v318
    %v914 = vunpack.c.h.b16 %v318
    %v915 = vunpack.c.l.b16 %v319
    %v916 = vunpack.c.h.b16 %v319
    %v917 = vunpack.c.l.b16 %v320
    %v918 = vunpack.c.h.b16 %v320
    %v919 = vunpack.c.l.b16 %v321
    %v920 = vunpack.c.h.b16 %v321
    %v921 = vunpack.c.l.b16 %v322
    %v922 = vunpack.c.h.b16 %v322
    %v923 = vunpack.c.l.b16 %v323
    %v924 = vunpack.c.h.b16 %v323
    %v925 = vunpack.c.l.b16 %v324
    %v926 = vunpack.c.h.b16 %v324
    %v927 = vunpack.c.l.b16 %v325
    %v928 = vunpack.c.h.b16 %v325
    %v929 = vunpack.c.l.b16 %v326
    %v930 = vunpack.c.h.b16 %v326
    %v931 = vunpack.c.l.b16 %v327
    %v932 = vunpack.c.h.b16 %v327
    %v933 = vunpack.c.l.b16 %v328
    %v934 = vunpack.c.h.b16 %v328
    %v935 = vunpack.c.l.b16 %v329
    %v936 = vunpack.c.h.b16 %v329
    %v937 = vunpack.c.l.b16 %v330
    %v938 = vunpack.c.h.b16 %v330
    %v939 = vunpack.c.l.b16 %v331
    %v940 = vunpack.c.h.b16 %v331
    %v941 = vunpack.c.l.b16 %v332
    %v942 = vunpack.c.h.b16 %v332
    %v943 = vunpack.c.l.b16 %v333
    %v944 = vunpack.c.h.b16 %v333
    %v945 = vunpack.c.l.b16 %v334
    %v946 = vunpack.c.h.b16 %v334
    %v947 = vunpack.c.l.b16 %v335
    %v948 = vunpack.c.h.b16 %v335
    %v949 = vunpack.c.l.b16 %v336
    %v950 = vunpack.c.h.b16 %v336
    %v951 = vunpack.c.l.b16 %v337
    %v952 = vunpack.c.h.b16 %v337
    %v953 = vunpack.c.l.b16 %v338
    %v954 = vunpack.c.h.b16 %v338
    %v955 = vunpack.c.l.b16 %v339
    %v956 = vunpack.c.h.b16 %v339
    %v957 = vunpack.c.l.b16 %v340
    %v958 = vunpack.c.h.b16 %v340
    %v959 = vunpack.c.l.b16 %v341
    %v960 = vunpack.c.h.b16 %v341
    %v961 = vunpack.c.l.b16 %v342
    %v962 = vunpack.c.h.b16 %v342
    %v963 = vunpack.c.l.b16 %v343
    %v964 = vunpack.c.h.b16 %v343
    %v965 = vunpack.c.l.b16 %v344
    %v966 = vunpack.c.h.b16 %v344
    %v967 = vunpack.c.l.b16 %v345
    %v968 = vunpack.c.h.b16 %v345
    %v969 = vunpack.c.l.b16 %v346
    %v970 = vunpack.c.h.b16 %v346
    %v971 = vunpack.c.l.b16 %v347
    %v972 = vunpack.c.h.b16 %v347
    %v973 = vunpack.c.l.b16 %v348
    %v974 = vunpack.c.h.b16 %v348
    %v975 = vunpack.c.l.b16 %v349
    %v976 = vunpack.c.h.b16 %v349
    %v977 = vunpack.c.l.b16 %v350
    %v978 = vunpack.c.h.b16 %v350
    %v979 = vunpack.c.l.b16 %v351
    %v980 = vunpack.c.h.b16 %v351
    %v981 = vunpack.c.l.b16 %v352
    %v982 = vunpack.c.h.b16 %v352
    %v983 = vunpack.c.l.b16 %v353
    %v984 = vunpack.c.h.b16 %v353
    %v985 = vunpack.c.l.b16 %v354
    %v986 = vunpack.c.h.b16 %v354
    %v987 = vunpack.c.l.b16 %v355
    %v988 = vunpack.c.h.b16 %v355
    %v989 = vunpack.c.l.b16 %v356
    %v990 = vunpack.c.h.b16 %v356
    %v991 = vunpack.c.l.b16 %v357
    %v992 = vunpack.c.h.b16 %v357
    %v993 = vunpack.c.l.b16 %v358
    %v994 = vunpack.c.h.b16 %v358
    %v995 = vunpack.c.l.b16 %v359
    %v996 = vunpack.c.h.b16 %v359
    %v997 = vunpack.c.l.b16 %v360
    %v998 = vunpack.c.h.b16 %v360
    %v999 = vunpack.c.l.b16 %v361
    %v1000 = vunpack.c.h.b16 %v361
    %v1001 = vunpack.c.l.b16 %v362
    %v1002 = vunpack.c.h.b16 %v362
    %v1003 = vunpack.c.l.b16 %v363
    %v1004 = vunpack.c.h.b16 %v363
    %v1005 = vunpack.c.l.b16 %v364
    %v1006 = vunpack.c.h.b16 %v364
    %v1007 = vunpack.c.l.b16 %v365
    %v1008 = vunpack.c.h.b16 %v365
    %v1009 = vunpack.c.l.b16 %v366
    %v1010 = vunpack.c.h.b16 %v366
    %v1011 = vunpack.c.l.b16 %v367
    %v1012 = vunpack.c.h.b16 %v367
    %v1013 = vunpack.c.l.b16 %v368
    %v1014 = vunpack.c.h.b16 %v368
    %v1015 = vunpack.c.l.b16 %v369
    %v1016 = vunpack.c.h.b16 %v369
    %v1017 = vunpack.c.l.b16 %v370
    %v1018 = vunpack.c.h.b16 %v370
    %v1019 = vunpack.c.l.b16 %v371
    %v1020 = vunpack.c.h.b16 %v371
    %v1021 = vunpack.c.l.b16 %v372
    %v1022 = vunpack.c.h.b16 %v372
    %v1023 = vunpack.c.l.b16 %v373
    %v1024 = vunpack.c.h.b16 %v373
    %v1025 = vunpack.c.l.b16 %v374
    %v1026 = vunpack.c.h.b16 %v374
    %v1027 = vunpack.c.l.b16 %v375
    %v1028 = vunpack.c.h.b16 %v375
    %v1029 = vunpack.c.l.b16 %v376
    %v1030 = vunpack.c.h.b16 %v376
    %v1031 = vunpack.c.l.b16 %v377
    %v1032 = vunpack.c.h.b16 %v377
    %v1033 = vunpack.c.l.b16 %v378
    %v1034 = vunpack.c.h.b16 %v378
    %v1035 = vunpack.c.l.b16 %v379
    %v1036 = vunpack.c.h.b16 %v379
    %v1037 = vunpack.c.l.b16 %v380
    %v1038 = vunpack.c.h.b16 %v380
    %v1039 = vunpack.c.l.b16 %v381
    %v1040 = vunpack.c.h.b16 %v381
    %v1041 = vunpack.c.l.b16 %v382
    %v1042 = vunpack.c.h.b16 %v382
    %v1043 = vunpack.c.l.b16 %v383
    %v1044 = vunpack.c.h.b16 %v383
    %v1045 = vunpack.c.l.b16 %v384
    %v1046 = vunpack.c.h.b16 %v384
    %v1047 = vunpack.c.l.b16 %v385
    %v1048 = vunpack.c.h.b16 %v385
    %v1049 = vunpack.c.l.b16 %v386
    %v1050 = vunpack.c.h.b16 %v386
    %v1051 = vunpack.c.l.b16 %v387
    %v1052 = vunpack.c.h.b16 %v387
    %v1053 = vunpack.c.l.b16 %v388
    %v1054 = vunpack.c.h.b16 %v388
    %v1055 = vunpack.c.l.b16 %v389
    %v1056 = vunpack.c.h.b16 %v389
    %v1057 = vunpack.c.l.b16 %v390
    %v1058 = vunpack.c.h.b16 %v390
    %v1059 = vunpack.c.l.b16 %v391
    %v1060 = vunpack.c.h.b16 %v391
    %v1061 = vunpack.c.l.b16 %v392
    %v1062 = vunpack.c.h.b16 %v392
    %v1063 = vunpack.c.l.b16 %v393
    %v1064 = vunpack.c.h.b16 %v393
    %v1065 = vunpack.c.l.b16 %v394
    %v1066 = vunpack.c.h.b16 %v394
    %v1067 = vunpack.c.l.b16 %v395
    %v1068 = vunpack.c.h.b16 %v395
    %v1069 = vunpack.c.l.b16 %v396
    %v1070 = vunpack.c.h.b16 %v396
    %v1071 = vunpack.c.l.b16 %v397
    %v1072 = vunpack.c.h.b16 %v397
    %v1073 = vunpack.c.l.b16 %v398
    %v1074 = vunpack.c.h.b16 %v398
    %v1075 = vunpack.c.l.b16 %v399
    %v1076 = vunpack.c.h.b16 %v399
    %v1077 = vunpack.c.l.b16 %v400
    %v1078 = vunpack.c.h.b16 %v400
    %v1079 = vunpack.c.l.b16 %v401
    %v1080 = vunpack.c.h.b16 %v401
    %v1081 = vunpack.c.l.b16 %v402
    %v1082 = vunpack.c.h.b16 %v402
    %v1083 = vunpack.c.l.b16 %v403
    %v1084 = vunpack.c.h.b16 %v403
    %v1085 = vunpack.c.l.b16 %v404
    %v1086 = vunpack.c.h.b16 %v404
    %v1087 = vunpack.c.l.b16 %v405
    %v1088 = vunpack.c.h.b16 %v405
    %v1089 = vunpack.c.l.b16 %v406
    %v1090 = vunpack.c.h.b16 %v406
    %v1091 = vunpack.c.l.b16 %v407
    %v1092 = vunpack.c.h.b16 %v407
    %v1093 = vunpack.c.l.b16 %v408
    %v1094 = vunpack.c.h.b16 %v408
    %v1095 = vunpack.c.l.b16 %v409
    %v1096 = vunpack.c.h.b16 %v409
    %v1097 = vunpack.c.l.b16 %v410
    %v1098 = vunpack.c.h.b16 %v410
    %v1099 = vunpack.c.l.b16 %v411
    %v1100 = vunpack.c.h.b16 %v411
    %v1101 = vunpack.c.l.b16 %v412
    %v1102 = vunpack.c.h.b16 %v412
    %v1103 = vunpack.c.l.b16 %v413
    %v1104 = vunpack.c.h.b16 %v413
    %v1105 = vunpack.c.l.b16 %v414
    %v1106 = vunpack.c.h.b16 %v414
    %v1107 = vunpack.c.l.b16 %v415
    %v1108 = vunpack.c.h.b16 %v415
    %v1109 = vunpack.c.l.b16 %v416
    %v1110 = vunpack.c.h.b16 %v416
    %v1111 = vunpack.c.l.b16 %v417
    %v1112 = vunpack.c.h.b16 %v417
    %v1113 = vunpack.c.l.b16 %v418
    %v1114 = vunpack.c.h.b16 %v418
    %v1115 = vunpack.c.l.b16 %v419
    %v1116 = vunpack.c.h.b16 %v419
    %v1117 = vunpack.c.l.b16 %v420
    %v1118 = vunpack.c.h.b16 %v420
    %v1119 = vunpack.c.l.b16 %v421
    %v1120 = vunpack.c.h.b16 %v421
    %v1121 = vunpack.c.l.b16 %v422
    %v1122 = vunpack.c.h.b16 %v422
    %v1123 = vunpack.c.l.b16 %v423
    %v1124 = vunpack.c.h.b16 %v423
    %v1125 = vpack.c.b16 %v681, %v677
    %v1126 = vpack.c.b16 %v682, %v678
    %v1127 = vpack.c.b16 %v683, %v679
    %v1128 = vpack.c.b16 %v684, %v680
    %v1129 = vpack.c.b16 %v689, %v685
    %v1130 = vpack.c.b16 %v690, %v686
    %v1131 = vpack.c.b16 %v691, %v687
    %v1132 = vpack.c.b16 %v692, %v688
    %v1133 = vpack.c.b16 %v697, %v693
    %v1134 = vpack.c.b16 %v698, %v694
    %v1135 = vpack.c.b16 %v699, %v695
    %v1136 = vpack.c.b16 %v700, %v696
    %v1137 = vpack.c.b16 %v705, %v701
    %v1138 = vpack.c.b16 %v706, %v702
    %v1139 = vpack.c.b16 %v707, %v703
    %v1140 = vpack.c.b16 %v708, %v704
    %v1141 = vpack.c.b16 %v713, %v709
    %v1142 = vpack.c.b16 %v714, %v710
    %v1143 = vpack.c.b16 %v715, %v711
    %v1144 = vpack.c.b16 %v716, %v712
    %v1145 = vpack.c.b16 %v721, %v717
    %v1146 = vpack.c.b16 %v722, %v718
    %v1147 = vpack.c.b16 %v723, %v719
    %v1148 = vpack.c.b16 %v724, %v720
    %v1149 = vpack.c.b16 %v729, %v725
    %v1150 = vpack.c.b16 %v730, %v726
    %v1151 = vpack.c.b16 %v731, %v727
    %v1152 = vpack.c.b16 %v732, %v728
    %v1153 = vpack.c.b16 %v737, %v733
    %v1154 = vpack.c.b16 %v738, %v734
    %v1155 = vpack.c.b16 %v739, %v735
    %v1156 = vpack.c.b16 %v740, %v736
    %v1157 = vpack.c.b16 %v745, %v741
    %v1158 = vpack.c.b16 %v746, %v742
    %v1159 = vpack.c.b16 %v747, %v743
    %v1160 = vpack.c.b16 %v748, %v744
    %v1161 = vpack.c.b16 %v753, %v749
    %v1162 = vpack.c.b16 %v754, %v750
    %v1163 = vpack.c.b16 %v755, %v751
    %v1164 = vpack.c.b16 %v756, %v752
    %v1165 = vpack.c.b16 %v761, %v757
    %v1166 = vpack.c.b16 %v762, %v758
    %v1167 = vpack.c.b16 %v763, %v759
    %v1168 = vpack.c.b16 %v764, %v760
    %v1169 = vpack.c.b16 %v769, %v765
    %v1170 = vpack.c.b16 %v770, %v766
    %v1171 = vpack.c.b16 %v771, %v767
    %v1172 = vpack.c.b16 %v772, %v768
    %v1173 = vpack.c.b16 %v777, %v773
    %v1174 = vpack.c.b16 %v778, %v774
    %v1175 = vpack.c.b16 %v779, %v775
    %v1176 = vpack.c.b16 %v780, %v776
    %v1177 = vpack.c.b16 %v785, %v781
    %v1178 = vpack.c.b16 %v786, %v782
    %v1179 = vpack.c.b16 %v787, %v783
    %v1180 = vpack.c.b16 %v788, %v784
    %v1181 = vpack.c.b16 %v793, %v789
    %v1182 = vpack.c.b16 %v794, %v790
    %v1183 = vpack.c.b16 %v795, %v791
    %v1184 = vpack.c.b16 %v796, %v792
    %v1185 = vpack.c.b16 %v801, %v797
    %v1186 = vpack.c.b16 %v802, %v798
    %v1187 = vpack.c.b16 %v803, %v799
    %v1188 = vpack.c.b16 %v804, %v800
    %v1189 = vpack.c.b16 %v809, %v805
    %v1190 = vpack.c.b16 %v810, %v806
    %v1191 = vpack.c.b16 %v811, %v807
    %v1192 = vpack.c.b16 %v812, %v808
    %v1193 = vpack.c.b16 %v817, %v813
    %v1194 = vpack.c.b16 %v818, %v814
    %v1195 = vpack.c.b16 %v819, %v815
    %v1196 = vpack.c.b16 %v820, %v816
    %v1197 = vpack.c.b16 %v825, %v821
    %v1198 = vpack.c.b16 %v826, %v822
    %v1199 = vpack.c.b16 %v827, %v823
    %v1200 = vpack.c.b16 %v828, %v824
    %v1201 = vpack.c.b16 %v833, %v829
    %v1202 = vpack.c.b16 %v834, %v830
    %v1203 = vpack.c.b16 %v835, %v831
    %v1204 = vpack.c.b16 %v836, %v832
    %v1205 = vpack.c.b16 %v841, %v837
    %v1206 = vpack.c.b16 %v842, %v838
    %v1207 = vpack.c.b16 %v843, %v839
    %v1208 = vpack.c.b16 %v844, %v840
    %v1209 = vpack.c.b16 %v849, %v845
    %v1210 = vpack.c.b16 %v850, %v846
    %v1211 = vpack.c.b16 %v851, %v847
    %v1212 = vpack.c.b16 %v852, %v848
    %v1213 = vpack.c.b16 %v857, %v853
    %v1214 = vpack.c.b16 %v858, %v854
    %v1215 = vpack.c.b16 %v859, %v855
    %v1216 = vpack.c.b16 %v860, %v856
    %v1217 = vpack.c.b16 %v865, %v861
    %v1218 = vpack.c.b16 %v866, %v862
    %v1219 = vpack.c.b16 %v867, %v863
    %v1220 = vpack.c.b16 %v868, %v864
    %v1221 = vpack.c.b16 %v873, %v869
    %v1222 = vpack.c.b16 %v874, %v870
    %v1223 = vpack.c.b16 %v875, %v871
    %v1224 = vpack.c.b16 %v876, %v872
    %v1225 = vpack.c.b16 %v881, %v877
    %v1226 = vpack.c.b16 %v882, %v878
    %v1227 = vpack.c.b16 %v883, %v879
    %v1228 = vpack.c.b16 %v884, %v880
    %v1229 = vpack.c.b16 %v889, %v885
    %v1230 = vpack.c.b16 %v890, %v886
    %v1231 = vpack.c.b16 %v891, %v887
    %v1232 = vpack.c.b16 %v892, %v888
    %v1233 = vpack.c.b16 %v897, %v893
    %v1234 = vpack.c.b16 %v898, %v894
    %v1235 = vpack.c.b16 %v899, %v895
    %v1236 = vpack.c.b16 %v900, %v896
    %v1237 = vpack.c.b16 %v905, %v901
    %v1238 = vpack.c.b16 %v906, %v902
    %v1239 = vpack.c.b16 %v907, %v903
    %v1240 = vpack.c.b16 %v908, %v904
    %v1241 = vpack.c.b16 %v913, %v909
    %v1242 = vpack.c.b16 %v914, %v910
    %v1243 = vpack.c.b16 %v915, %v911
    %v1244 = vpack.c.b16 %v916, %v912
    %v1245 = vpack.c.b16 %v921, %v917
    %v1246 = vpack.c.b16 %v922, %v918
    %v1247 = vpack.c.b16 %v923, %v919
    %v1248 = vpack.c.b16 %v924, %v920
    %v1249 = vpack.c.b16 %v929, %v925
    %v1250 = vpack.c.b16 %v930, %v926
    %v1251 = vpack.c.b16 %v931, %v927
    %v1252 = vpack.c.b16 %v932, %v928
    %v1253 = vpack.c.b16 %v937, %v933
    %v1254 = vpack.c.b16 %v938, %v934
    %v1255 = vpack.c.b16 %v939, %v935
    %v1256 = vpack.c.b16 %v940, %v936
    %v1257 = vpack.c.b16 %v945, %v941
    %v1258 = vpack.c.b16 %v946, %v942
    %v1259 = vpack.c.b16 %v947, %v943
    %v1260 = vpack.c.b16 %v948, %v944
    %v1261 = vpack.c.b16 %v953, %v949
    %v1262 = vpack.c.b16 %v954, %v950
    %v1263 = vpack.c.b16 %v955, %v951
    %v1264 = vpack.c.b16 %v956, %v952
    %v1265 = vpack.c.b16 %v961, %v957
    %v1266 = vpack.c.b16 %v962, %v958
    %v1267 = vpack.c.b16 %v963, %v959
    %v1268 = vpack.c.b16 %v964, %v960
    %v1269 = vpack.c.b16 %v969, %v965
    %v1270 = vpack.c.b16 %v970, %v966
    %v1271 = vpack.c.b16 %v971, %v967
    %v1272 = vpack.c.b16 %v972, %v968
    %v1273 = vpack.c.b16 %v977, %v973
    %v1274 = vpack.c.b16 %v978, %v974
    %v1275 = vpack.c.b16 %v979, %v975
    %v1276 = vpack.c.b16 %v980, %v976
    %v1277 = vpack.c.b16 %v985, %v981
    %v1278 = vpack.c.b16 %v986, %v982
    %v1279 = vpack.c.b16 %v987, %v983
    %v1280 = vpack.c.b16 %v988, %v984
    %v1281 = vpack.c.b16 %v993, %v989
    %v1282 = vpack.c.b16 %v994, %v990
    %v1283 = vpack.c.b16 %v995, %v991
    %v1284 = vpack.c.b16 %v996, %v992
    %v1285 = vpack.c.b16 %v1001, %v997
    %v1286 = vpack.c.b16 %v1002, %v998
    %v1287 = vpack.c.b16 %v1003, %v999
    %v1288 = vpack.c.b16 %v1004, %v1000
    %v1289 = vpack.c.b16 %v1009, %v1005
    %v1290 = vpack.c.b16 %v1010, %v1006
    %v1291 = vpack.c.b16 %v1011, %v1007
    %v1292 = vpack.c.b16 %v1012, %v1008
    %v1293 = vpack.c.b16 %v1017, %v1013
    %v1294 = vpack.c.b16 %v1018, %v1014
    %v1295 = vpack.c.b16 %v1019, %v1015
    %v1296 = vpack.c.b16 %v1020, %v1016
    %v1297 = vpack.c.b16 %v1025, %v1021
    %v1298 = vpack.c.b16 %v1026, %v1022
    %v1299 = vpack.c.b16 %v1027, %v1023
    %v1300 = vpack.c.b16 %v1028, %v1024
    %v1301 = vpack.c.b16 %v1033, %v1029
    %v1302 = vpack.c.b16 %v1034, %v1030
    %v1303 = vpack.c.b16 %v1035, %v1031
    %v1304 = vpack.c.b16 %v1036, %v1032
    %v1305 = vpack.c.b16 %v1041, %v1037
    %v1306 = vpack.c.b16 %v1042, %v1038
    %v1307 = vpack.c.b16 %v1043, %v1039
    %v1308 = vpack.c.b16 %v1044, %v1040
    %v1309 = vpack.c.b16 %v1049, %v1045
    %v1310 = vpack.c.b16 %v1050, %v1046
    %v1311 = vpack.c.b16 %v1051, %v1047
    %v1312 = vpack.c.b16 %v1052, %v1048
    %v1313 = vpack.c.b16 %v1057, %v1053
    %v1314 = vpack.c.b16 %v1058, %v1054
    %v1315 = vpack.c.b16 %v1059, %v1055
    %v1316 = vpack.c.b16 %v1060, %v1056
    %v1317 = vpack.c.b16 %v1065, %v1061
    %v1318 = vpack.c.b16 %v1066, %v1062
    %v1319 = vpack.c.b16 %v1067, %v1063
    %v1320 = vpack.c.b16 %v1068, %v1064
    %v1321 = vpack.c.b16 %v1073, %v1069
    %v1322 = vpack.c.b16 %v1074, %v1070
    %v1323 = vpack.c.b16 %v1075, %v1071
    %v1324 = vpack.c.b16 %v1076, %v1072
    %v1325 = vpack.c.b16 %v1081, %v1077
    %v1326 = vpack.c.b16 %v1082, %v1078
    %v1327 = vpack.c.b16 %v1083, %v1079
    %v1328 = vpack.c.b16 %v1084, %v1080
    %v1329 = vpack.c.b16 %v1089, %v1085
    %v1330 = vpack.c.b16 %v1090, %v1086
    %v1331 = vpack.c.b16 %v1091, %v1087
    %v1332 = vpack.c.b16 %v1092, %v1088
    %v1333 = vpack.c.b16 %v1097, %v1093
    %v1334 = vpack.c.b16 %v1098, %v1094
    %v1335 = vpack.c.b16 %v1099, %v1095
    %v1336 = vpack.c.b16 %v1100, %v1096
    %v1337 = vpack.c.b16 %v1105, %v1101
    %v1338 = vpack.c.b16 %v1106, %v1102
    %v1339 = vpack.c.b16 %v1107, %v1103
    %v1340 = vpack.c.b16 %v1108, %v1104
    %v1341 = vpack.c.b16 %v1113, %v1109
    %v1342 = vpack.c.b16 %v1114, %v1110
    %v1343 = vpack.c.b16 %v1115, %v1111
    %v1344 = vpack.c.b16 %v1116, %v1112
    %v1345 = vpack.c.b16 %v1121, %v1117
    %v1346 = vpack.c.b16 %v1122, %v1118
    %v1347 = vpack.c.b16 %v1123, %v1119
    %v1348 = vpack.c.b16 %v1124, %v1120
    %1573 = vmatprep.subr.bf16.mxu0 %v1126
    %1574 = vmatpush1.bf16.msra.mxu0 %v1125
    %1575 = vmatprep.subr.bf16.mxu0 %v1130
    %1576 = vmatpush1.bf16.msra.mxu0 %v1129
    %1577 = vmatprep.subr.bf16.mxu0 %v1134
    %1578 = vmatpush1.bf16.msra.mxu0 %v1133
    %1579 = vmatprep.subr.bf16.mxu0 %v1138
    %1580 = vmatpush1.bf16.msra.mxu0 %v1137
    %1581 = vmatprep.subr.bf16.mxu0 %v1142
    %1582 = vmatpush1.bf16.msra.mxu0 %v1141
    %1583 = vmatprep.subr.bf16.mxu0 %v1146
    %1584 = vmatpush1.bf16.msra.mxu0 %v1145
    %1585 = vmatprep.subr.bf16.mxu0 %v1150
    %1586 = vmatpush1.bf16.msra.mxu0 %v1149
    %1587 = vmatprep.subr.bf16.mxu0 %v1154
    %1588 = vmatpush1.bf16.msra.mxu0 %v1153
    %1589 = vmatprep.subr.bf16.mxu0 %v1158
    %1590 = vmatpush1.bf16.msra.mxu0 %v1157
    %1591 = vmatprep.subr.bf16.mxu0 %v1162
    %1592 = vmatpush1.bf16.msra.mxu0 %v1161
    %1593 = vmatprep.subr.bf16.mxu0 %v1166
    %1594 = vmatpush1.bf16.msra.mxu0 %v1165
    %1595 = vmatprep.subr.bf16.mxu0 %v1170
    %1596 = vmatpush1.bf16.msra.mxu0 %v1169
    %1597 = vmatprep.subr.bf16.mxu0 %v1174
    %1598 = vmatpush1.bf16.msra.mxu0 %v1173
    %1599 = vmatprep.subr.bf16.mxu0 %v1178
    %1600 = vmatpush1.bf16.msra.mxu0 %v1177
    %1601 = vmatprep.subr.bf16.mxu0 %v1182
    %1602 = vmatpush1.bf16.msra.mxu0 %v1181
    %1603 = vmatprep.subr.bf16.mxu0 %v1186
    %1604 = vmatpush1.bf16.msra.mxu0 %v1185
    %1605 = vmatprep.mubr.bf16.mxu0 %v426
    %1606 = vmatmul.mubr.bf16.gmra.mrb[0].mxu0 %v425
    %v1607 = vpop.f32.mrb[0].mxu0
    %v1608 = vadd.f32 %v436, %v1607
    %v1609 = vpop.f32.mrb[0].mxu0
    %v1610 = vadd.f32 %v440, %v1609
    %v1611 = vpop.f32.mrb[0].mxu0
    %v1612 = vpop.f32.mrb[0].mxu0
    %1613 = vdwg.mxu0
    %1614 = vmatprep.subr.bf16.mxu0 %v1190
    %1615 = vmatpush1.bf16.msra.mxu0 %v1189
    %1616 = vmatprep.subr.bf16.mxu0 %v1194
    %1617 = vmatpush1.bf16.msra.mxu0 %v1193
    %1618 = vmatprep.subr.bf16.mxu0 %v1198
    %1619 = vmatpush1.bf16.msra.mxu0 %v1197
    %1620 = vmatprep.subr.bf16.mxu0 %v1202
    %1621 = vmatpush1.bf16.msra.mxu0 %v1201
    %1622 = vmatprep.subr.bf16.mxu0 %v1206
    %1623 = vmatpush1.bf16.msra.mxu0 %v1205
    %1624 = vmatprep.subr.bf16.mxu0 %v1210
    %1625 = vmatpush1.bf16.msra.mxu0 %v1209
    %1626 = vmatprep.subr.bf16.mxu0 %v1214
    %1627 = vmatpush1.bf16.msra.mxu0 %v1213
    %1628 = vmatprep.subr.bf16.mxu0 %v1218
    %1629 = vmatpush1.bf16.msra.mxu0 %v1217
    %1630 = vmatprep.subr.bf16.mxu0 %v1222
    %1631 = vmatpush1.bf16.msra.mxu0 %v1221
    %1632 = vmatprep.subr.bf16.mxu0 %v1226
    %1633 = vmatpush1.bf16.msra.mxu0 %v1225
    %1634 = vmatprep.subr.bf16.mxu0 %v1230
    %1635 = vmatpush1.bf16.msra.mxu0 %v1229
    %1636 = vmatprep.subr.bf16.mxu0 %v1234
    %1637 = vmatpush1.bf16.msra.mxu0 %v1233
    %1638 = vmatprep.subr.bf16.mxu0 %v1238
    %1639 = vmatpush1.bf16.msra.mxu0 %v1237
    %1640 = vmatprep.subr.bf16.mxu0 %v1242
    %1641 = vmatpush1.bf16.msra.mxu0 %v1241
    %1642 = vmatprep.subr.bf16.mxu0 %v1246
    %1643 = vmatpush1.bf16.msra.mxu0 %v1245
    %1644 = vmatprep.subr.bf16.mxu0 %v1250
    %1645 = vmatpush1.bf16.msra.mxu0 %v1249
    %1646 = vmatprep.mubr.bf16.mxu0 %v428
    %1647 = vmatmul.mubr.bf16.gmra.mrb[0].mxu0 %v427
    %v1648 = vpop.f32.mrb[0].mxu0
    %v1649 = vadd.f32 %v1608, %v1648
    %v1650 = vpop.f32.mrb[0].mxu0
    %v1651 = vadd.f32 %v1610, %v1650
    %v1652 = vpop.f32.mrb[0].mxu0
    %v1653 = vpop.f32.mrb[0].mxu0
    %1654 = vdwg.mxu0
    %1655 = vmatprep.subr.bf16.mxu0 %v1254
    %1656 = vmatpush1.bf16.msra.mxu0 %v1253
    %1657 = vmatprep.subr.bf16.mxu0 %v1258
    %1658 = vmatpush1.bf16.msra.mxu0 %v1257
    %1659 = vmatprep.subr.bf16.mxu0 %v1262
    %1660 = vmatpush1.bf16.msra.mxu0 %v1261
    %1661 = vmatprep.subr.bf16.mxu0 %v1266
    %1662 = vmatpush1.bf16.msra.mxu0 %v1265
    %1663 = vmatprep.subr.bf16.mxu0 %v1270
    %1664 = vmatpush1.bf16.msra.mxu0 %v1269
    %1665 = vmatprep.subr.bf16.mxu0 %v1274
    %1666 = vmatpush1.bf16.msra.mxu0 %v1273
    %1667 = vmatprep.subr.bf16.mxu0 %v1278
    %1668 = vmatpush1.bf16.msra.mxu0 %v1277
    %1669 = vmatprep.subr.bf16.mxu0 %v1282
    %1670 = vmatpush1.bf16.msra.mxu0 %v1281
    %1671 = vmatprep.subr.bf16.mxu0 %v1286
    %1672 = vmatpush1.bf16.msra.mxu0 %v1285
    %1673 = vmatprep.subr.bf16.mxu0 %v1290
    %1674 = vmatpush1.bf16.msra.mxu0 %v1289
    %1675 = vmatprep.subr.bf16.mxu0 %v1294
    %1676 = vmatpush1.bf16.msra.mxu0 %v1293
    %1677 = vmatprep.subr.bf16.mxu0 %v1298
    %1678 = vmatpush1.bf16.msra.mxu0 %v1297
    %1679 = vmatprep.subr.bf16.mxu0 %v1302
    %1680 = vmatpush1.bf16.msra.mxu0 %v1301
    %1681 = vmatprep.subr.bf16.mxu0 %v1306
    %1682 = vmatpush1.bf16.msra.mxu0 %v1305
    %1683 = vmatprep.subr.bf16.mxu0 %v1310
    %1684 = vmatpush1.bf16.msra.mxu0 %v1309
    %1685 = vmatprep.subr.bf16.mxu0 %v1314
    %1686 = vmatpush1.bf16.msra.mxu0 %v1313
    %1687 = vmatprep.mubr.bf16.mxu0 %v430
    %1688 = vmatmul.mubr.bf16.gmra.mrb[0].mxu0 %v429
    %v1689 = vpop.f32.mrb[0].mxu0
    %v1690 = vadd.f32 %v1649, %v1689
    %v1691 = vpop.f32.mrb[0].mxu0
    %v1692 = vadd.f32 %v1651, %v1691
    %v1693 = vpop.f32.mrb[0].mxu0
    %v1694 = vpop.f32.mrb[0].mxu0
    %1695 = vdwg.mxu0
    %1696 = vmatprep.subr.bf16.mxu0 %v1318
    %1697 = vmatpush1.bf16.msra.mxu0 %v1317
    %1698 = vmatprep.subr.bf16.mxu0 %v1322
    %1699 = vmatpush1.bf16.msra.mxu0 %v1321
    %1700 = vmatprep.subr.bf16.mxu0 %v1326
    %1701 = vmatpush1.bf16.msra.mxu0 %v1325
    %1702 = vmatprep.subr.bf16.mxu0 %v1330
    %1703 = vmatpush1.bf16.msra.mxu0 %v1329
    %1704 = vmatprep.subr.bf16.mxu0 %v1334
    %1705 = vmatpush1.bf16.msra.mxu0 %v1333
    %1706 = vmatprep.subr.bf16.mxu0 %v1338
    %1707 = vmatpush1.bf16.msra.mxu0 %v1337
    %1708 = vmatprep.subr.bf16.mxu0 %v1342
    %1709 = vmatpush1.bf16.msra.mxu0 %v1341
    %1710 = vmatprep.subr.bf16.mxu0 %v1346
    %1711 = vmatpush1.bf16.msra.mxu0 %v1345
    %1712 = vmatprep.subr.bf16.mxu0 0
    %1713 = vmatpush1.bf16.msra.mxu0 0
    %1714 = vmatprep.subr.bf16.mxu0 0
    %1715 = vmatpush1.bf16.msra.mxu0 0
    %1716 = vmatprep.subr.bf16.mxu0 0
    %1717 = vmatpush1.bf16.msra.mxu0 0
    %1718 = vmatprep.subr.bf16.mxu0 0
    %1719 = vmatpush1.bf16.msra.mxu0 0
    %1720 = vmatprep.subr.bf16.mxu0 0
    %1721 = vmatpush1.bf16.msra.mxu0 0
    %1722 = vmatprep.subr.bf16.mxu0 0
    %1723 = vmatpush1.bf16.msra.mxu0 0
    %1724 = vmatprep.subr.bf16.mxu0 0
    %1725 = vmatpush1.bf16.msra.mxu0 0
    %1726 = vmatprep.subr.bf16.mxu0 0
    %1727 = vmatpush1.bf16.msra.mxu0 0
    %1728 = vmatprep.mubr.bf16.mxu0 0
    %1729 = vmatmul.mubr.bf16.gmra.mrb[0].mxu0 %v431
    %v1730 = vpop.f32.mrb[0].mxu0
    %v1731 = vadd.f32 %v1690, %v1730
    %v1732 = vpop.f32.mrb[0].mxu0
    %v1733 = vadd.f32 %v1692, %v1732
    %v1734 = vpop.f32.mrb[0].mxu0
    %v1735 = vpop.f32.mrb[0].mxu0
    %1736 = vdwg.mxu0
    %1737 = vmatprep.subr.bf16.mxu0 %v1128
    %1738 = vmatpush1.bf16.msra.mxu0 %v1127
    %1739 = vmatprep.subr.bf16.mxu0 %v1132
    %1740 = vmatpush1.bf16.msra.mxu0 %v1131
    %1741 = vmatprep.subr.bf16.mxu0 %v1136
    %1742 = vmatpush1.bf16.msra.mxu0 %v1135
    %1743 = vmatprep.subr.bf16.mxu0 %v1140
    %1744 = vmatpush1.bf16.msra.mxu0 %v1139
    %1745 = vmatprep.subr.bf16.mxu0 %v1144
    %1746 = vmatpush1.bf16.msra.mxu0 %v1143
    %1747 = vmatprep.subr.bf16.mxu0 %v1148
    %1748 = vmatpush1.bf16.msra.mxu0 %v1147
    %1749 = vmatprep.subr.bf16.mxu0 %v1152
    %1750 = vmatpush1.bf16.msra.mxu0 %v1151
    %1751 = vmatprep.subr.bf16.mxu0 %v1156
    %1752 = vmatpush1.bf16.msra.mxu0 %v1155
    %1753 = vmatprep.subr.bf16.mxu0 %v1160
    %1754 = vmatpush1.bf16.msra.mxu0 %v1159
    %1755 = vmatprep.subr.bf16.mxu0 %v1164
    %1756 = vmatpush1.bf16.msra.mxu0 %v1163
    %1757 = vmatprep.subr.bf16.mxu0 %v1168
    %1758 = vmatpush1.bf16.msra.mxu0 %v1167
    %1759 = vmatprep.subr.bf16.mxu0 %v1172
    %1760 = vmatpush1.bf16.msra.mxu0 %v1171
    %1761 = vmatprep.subr.bf16.mxu0 %v1176
    %1762 = vmatpush1.bf16.msra.mxu0 %v1175
    %1763 = vmatprep.subr.bf16.mxu0 %v1180
    %1764 = vmatpush1.bf16.msra.mxu0 %v1179
    %1765 = vmatprep.subr.bf16.mxu0 %v1184
    %1766 = vmatpush1.bf16.msra.mxu0 %v1183
    %1767 = vmatprep.subr.bf16.mxu0 %v1188
    %1768 = vmatpush1.bf16.msra.mxu0 %v1187
    %1769 = vmatprep.mubr.bf16.mxu0 %v426
    %1770 = vmatmul.mubr.bf16.gmra.mrb[0].mxu0 %v425
    %v1771 = vpop.f32.mrb[0].mxu0
    %v1772 = vadd.f32 %v444, %v1771
    %v1773 = vpop.f32.mrb[0].mxu0
    %v1774 = vadd.f32 %v448, %v1773
    %v1775 = vpop.f32.mrb[0].mxu0
    %v1776 = vpop.f32.mrb[0].mxu0
    %1777 = vdwg.mxu0
    %1778 = vmatprep.subr.bf16.mxu0 %v1192
    %1779 = vmatpush1.bf16.msra.mxu0 %v1191
    %1780 = vmatprep.subr.bf16.mxu0 %v1196
    %1781 = vmatpush1.bf16.msra.mxu0 %v1195
    %1782 = vmatprep.subr.bf16.mxu0 %v1200
    %1783 = vmatpush1.bf16.msra.mxu0 %v1199
    %1784 = vmatprep.subr.bf16.mxu0 %v1204
    %1785 = vmatpush1.bf16.msra.mxu0 %v1203
    %1786 = vmatprep.subr.bf16.mxu0 %v1208
    %1787 = vmatpush1.bf16.msra.mxu0 %v1207
    %1788 = vmatprep.subr.bf16.mxu0 %v1212
    %1789 = vmatpush1.bf16.msra.mxu0 %v1211
    %1790 = vmatprep.subr.bf16.mxu0 %v1216
    %1791 = vmatpush1.bf16.msra.mxu0 %v1215
    %1792 = vmatprep.subr.bf16.mxu0 %v1220
    %1793 = vmatpush1.bf16.msra.mxu0 %v1219
    %1794 = vmatprep.subr.bf16.mxu0 %v1224
    %1795 = vmatpush1.bf16.msra.mxu0 %v1223
    %1796 = vmatprep.subr.bf16.mxu0 %v1228
    %1797 = vmatpush1.bf16.msra.mxu0 %v1227
    %1798 = vmatprep.subr.bf16.mxu0 %v1232
    %1799 = vmatpush1.bf16.msra.mxu0 %v1231
    %1800 = vmatprep.subr.bf16.mxu0 %v1236
    %1801 = vmatpush1.bf16.msra.mxu0 %v1235
    %1802 = vmatprep.subr.bf16.mxu0 %v1240
    %1803 = vmatpush1.bf16.msra.mxu0 %v1239
    %1804 = vmatprep.subr.bf16.mxu0 %v1244
    %1805 = vmatpush1.bf16.msra.mxu0 %v1243
    %1806 = vmatprep.subr.bf16.mxu0 %v1248
    %1807 = vmatpush1.bf16.msra.mxu0 %v1247
    %1808 = vmatprep.subr.bf16.mxu0 %v1252
    %1809 = vmatpush1.bf16.msra.mxu0 %v1251
    %1810 = vmatprep.mubr.bf16.mxu0 %v428
    %1811 = vmatmul.mubr.bf16.gmra.mrb[0].mxu0 %v427
    %v1812 = vpop.f32.mrb[0].mxu0
    %v1813 = vadd.f32 %v1772, %v1812
    %v1814 = vpop.f32.mrb[0].mxu0
    %v1815 = vadd.f32 %v1774, %v1814
    %v1816 = vpop.f32.mrb[0].mxu0
    %v1817 = vpop.f32.mrb[0].mxu0
    %1818 = vdwg.mxu0
    %1819 = vmatprep.subr.bf16.mxu0 %v1256
    %1820 = vmatpush1.bf16.msra.mxu0 %v1255
    %1821 = vmatprep.subr.bf16.mxu0 %v1260
    %1822 = vmatpush1.bf16.msra.mxu0 %v1259
    %1823 = vmatprep.subr.bf16.mxu0 %v1264
    %1824 = vmatpush1.bf16.msra.mxu0 %v1263
    %1825 = vmatprep.subr.bf16.mxu0 %v1268
    %1826 = vmatpush1.bf16.msra.mxu0 %v1267
    %1827 = vmatprep.subr.bf16.mxu0 %v1272
    %1828 = vmatpush1.bf16.msra.mxu0 %v1271
    %1829 = vmatprep.subr.bf16.mxu0 %v1276
    %1830 = vmatpush1.bf16.msra.mxu0 %v1275
    %1831 = vmatprep.subr.bf16.mxu0 %v1280
    %1832 = vmatpush1.bf16.msra.mxu0 %v1279
    %1833 = vmatprep.subr.bf16.mxu0 %v1284
    %1834 = vmatpush1.bf16.msra.mxu0 %v1283
    %1835 = vmatprep.subr.bf16.mxu0 %v1288
    %1836 = vmatpush1.bf16.msra.mxu0 %v1287
    %1837 = vmatprep.subr.bf16.mxu0 %v1292
    %1838 = vmatpush1.bf16.msra.mxu0 %v1291
    %1839 = vmatprep.subr.bf16.mxu0 %v1296
    %1840 = vmatpush1.bf16.msra.mxu0 %v1295
    %1841 = vmatprep.subr.bf16.mxu0 %v1300
    %1842 = vmatpush1.bf16.msra.mxu0 %v1299
    %1843 = vmatprep.subr.bf16.mxu0 %v1304
    %1844 = vmatpush1.bf16.msra.mxu0 %v1303
    %1845 = vmatprep.subr.bf16.mxu0 %v1308
    %1846 = vmatpush1.bf16.msra.mxu0 %v1307
    %1847 = vmatprep.subr.bf16.mxu0 %v1312
    %1848 = vmatpush1.bf16.msra.mxu0 %v1311
    %1849 = vmatprep.subr.bf16.mxu0 %v1316
    %1850 = vmatpush1.bf16.msra.mxu0 %v1315
    %1851 = vmatprep.mubr.bf16.mxu0 %v430
    %1852 = vmatmul.mubr.bf16.gmra.mrb[0].mxu0 %v429
    %v1853 = vpop.f32.mrb[0].mxu0
    %v1854 = vadd.f32 %v1813, %v1853
    %v1855 = vpop.f32.mrb[0].mxu0
    %v1856 = vadd.f32 %v1815, %v1855
    %v1857 = vpop.f32.mrb[0].mxu0
    %v1858 = vpop.f32.mrb[0].mxu0
    %1859 = vdwg.mxu0
    %1860 = vmatprep.subr.bf16.mxu0 %v1320
    %1861 = vmatpush1.bf16.msra.mxu0 %v1319
    %1862 = vmatprep.subr.bf16.mxu0 %v1324
    %1863 = vmatpush1.bf16.msra.mxu0 %v1323
    %1864 = vmatprep.subr.bf16.mxu0 %v1328
    %1865 = vmatpush1.bf16.msra.mxu0 %v1327
    %1866 = vmatprep.subr.bf16.mxu0 %v1332
    %1867 = vmatpush1.bf16.msra.mxu0 %v1331
    %1868 = vmatprep.subr.bf16.mxu0 %v1336
    %1869 = vmatpush1.bf16.msra.mxu0 %v1335
    %1870 = vmatprep.subr.bf16.mxu0 %v1340
    %1871 = vmatpush1.bf16.msra.mxu0 %v1339
    %1872 = vmatprep.subr.bf16.mxu0 %v1344
    %1873 = vmatpush1.bf16.msra.mxu0 %v1343
    %1874 = vmatprep.subr.bf16.mxu0 %v1348
    %1875 = vmatpush1.bf16.msra.mxu0 %v1347
    %1876 = vmatprep.subr.bf16.mxu0 0
    %1877 = vmatpush1.bf16.msra.mxu0 0
    %1878 = vmatprep.subr.bf16.mxu0 0
    %1879 = vmatpush1.bf16.msra.mxu0 0
    %1880 = vmatprep.subr.bf16.mxu0 0
    %1881 = vmatpush1.bf16.msra.mxu0 0
    %1882 = vmatprep.subr.bf16.mxu0 0
    %1883 = vmatpush1.bf16.msra.mxu0 0
    %1884 = vmatprep.subr.bf16.mxu0 0
    %1885 = vmatpush1.bf16.msra.mxu0 0
    %1886 = vmatprep.subr.bf16.mxu0 0
    %1887 = vmatpush1.bf16.msra.mxu0 0
    %1888 = vmatprep.subr.bf16.mxu0 0
    %1889 = vmatpush1.bf16.msra.mxu0 0
    %1890 = vmatprep.subr.bf16.mxu0 0
    %1891 = vmatpush1.bf16.msra.mxu0 0
    %1892 = vmatprep.mubr.bf16.mxu0 0
    %1893 = vmatmul.mubr.bf16.gmra.mrb[0].mxu0 %v431
    %v1894 = vpop.f32.mrb[0].mxu0
    %v1895 = vadd.f32 %v1854, %v1894
    %v1896 = vpop.f32.mrb[0].mxu0
    %v1897 = vadd.f32 %v1856, %v1896
    %v1898 = vpop.f32.mrb[0].mxu0
    %v1899 = vpop.f32.mrb[0].mxu0
    %1900 = vdwg.mxu0
    %v1901 = vmax.f32 %v1731, 0.0
    %v1902 = vmax.f32 %v1733, 0.0
    %v1903 = vmax.f32 %v1895, 0.0
    %v1904 = vmax.f32 %v1897, 0.0
    %v1905 = vld [vmem:[#allocation4] sm:$0xff]
    %v1906 = vld [vmem:[#allocation4 + $0x8] sm:$0xff]
    %v1907 = vld [vmem:[#allocation4 + $0x10] sm:$0xff]
    %v1908 = vld [vmem:[#allocation4 + $0x18] sm:$0xff]
    %v1909 = vld [vmem:[#allocation4 + $0x20] sm:$0xff]
    %v1910 = vld [vmem:[#allocation4 + $0x28] sm:$0xff]
    %v1911 = vld [vmem:[#allocation4 + $0x30] sm:$0xff]
    %v1912 = vld [vmem:[#allocation4 + $0x38] sm:$0xff]
    %v1913 = vld [vmem:[#allocation4 + $0x40] sm:$0xff]
    %v1914 = vld [vmem:[#allocation4 + $0x48] sm:$0xff]
    %v1915 = vld [vmem:[#allocation4 + $0x50] sm:$0xff]
    %v1916 = vld [vmem:[#allocation4 + $0x58] sm:$0xff]
    %v1917 = vld [vmem:[#allocation4 + $0x60] sm:$0xff]
    %v1918 = vld [vmem:[#allocation4 + $0x68] sm:$0xff]
    %v1919 = vld [vmem:[#allocation4 + $0x70] sm:$0xff]
    %v1920 = vld [vmem:[#allocation4 + $0x78] sm:$0xff]
    %v1921 = vld [vmem:[#allocation4 + $0x80] sm:$0xff]
    %v1922 = vld [vmem:[#allocation4 + $0x88] sm:$0xff]
    %v1923 = vld [vmem:[#allocation4 + $0x90] sm:$0xff]
    %v1924 = vld [vmem:[#allocation4 + $0x98] sm:$0xff]
    %v1925 = vld [vmem:[#allocation4 + $0xa0] sm:$0xff]
    %v1926 = vld [vmem:[#allocation4 + $0xa8] sm:$0xff]
    %v1927 = vld [vmem:[#allocation4 + $0xb0] sm:$0xff]
    %v1928 = vld [vmem:[#allocation4 + $0xb8] sm:$0xff]
    %v1929 = vld [vmem:[#allocation4 + $0xc0] sm:$0xff]
    %v1930 = vld [vmem:[#allocation4 + $0xc8] sm:$0xff]
    %v1931 = vld [vmem:[#allocation4 + $0xd0] sm:$0xff]
    %v1932 = vld [vmem:[#allocation4 + $0xd8] sm:$0xff]
    %v1933 = vld [vmem:[#allocation4 + $0xe0] sm:$0xff]
    %v1934 = vld [vmem:[#allocation4 + $0xe8] sm:$0xff]
    %v1935 = vld [vmem:[#allocation4 + $0xf0] sm:$0xff]
    %v1936 = vld [vmem:[#allocation4 + $0xf8] sm:$0xff]
    %v1937 = vld [vmem:[#allocation4 + $0x100] sm:$0xff]
    %v1938 = vld [vmem:[#allocation4 + $0x108] sm:$0xff]
    %v1939 = vld [vmem:[#allocation4 + $0x110] sm:$0xff]
    %v1940 = vld [vmem:[#allocation4 + $0x118] sm:$0xff]
    %v1941 = vld [vmem:[#allocation4 + $0x120] sm:$0xff]
    %v1942 = vld [vmem:[#allocation4 + $0x128] sm:$0xff]
    %v1943 = vld [vmem:[#allocation4 + $0x130] sm:$0xff]
    %v1944 = vld [vmem:[#allocation4 + $0x138] sm:$0xff]
    %v1945 = vld [vmem:[#allocation4 + $0x140] sm:$0xff]
    %v1946 = vld [vmem:[#allocation4 + $0x148] sm:$0xff]
    %v1947 = vld [vmem:[#allocation4 + $0x150] sm:$0xff]
    %v1948 = vld [vmem:[#allocation4 + $0x158] sm:$0xff]
    %v1949 = vld [vmem:[#allocation4 + $0x160] sm:$0xff]
    %v1950 = vld [vmem:[#allocation4 + $0x168] sm:$0xff]
    %v1951 = vld [vmem:[#allocation4 + $0x170] sm:$0xff]
    %v1952 = vld [vmem:[#allocation4 + $0x178] sm:$0xff]
    %v1953 = vld [vmem:[#allocation4 + $0x180] sm:$0xff]
    %v1954 = vld [vmem:[#allocation4 + $0x188] sm:$0xff]
    %v1955 = vld [vmem:[#allocation4 + $0x190] sm:$0xff]
    %v1956 = vld [vmem:[#allocation4 + $0x198] sm:$0xff]
    %v1957 = vld [vmem:[#allocation4 + $0x1a0] sm:$0xff]
    %v1958 = vld [vmem:[#allocation4 + $0x1a8] sm:$0xff]
    %v1959 = vld [vmem:[#allocation4 + $0x1b0] sm:$0xff]
    %v1960 = vld [vmem:[#allocation4 + $0x1b8] sm:$0xff]
    %v1961 = vld [vmem:[#allocation4 + $0x1c0] sm:$0xff]
    %v1962 = vld [vmem:[#allocation4 + $0x1c8] sm:$0xff]
    %v1963 = vld [vmem:[#allocation4 + $0x1d0] sm:$0xff]
    %v1964 = vld [vmem:[#allocation4 + $0x1d8] sm:$0xff]
    %v1965 = vld [vmem:[#allocation4 + $0x1e0] sm:$0xff]
    %v1966 = vld [vmem:[#allocation4 + $0x1e8] sm:$0xff]
    %v1967 = vld [vmem:[#allocation4 + $0x1f0] sm:$0xff]
    %v1968 = vld [vmem:[#allocation4 + $0x1f8] sm:$0xff]
    %v1969 = vld [vmem:[#allocation4 + $0x200] sm:$0xff]
    %v1970 = vld [vmem:[#allocation4 + $0x208] sm:$0xff]
    %v1971 = vld [vmem:[#allocation4 + $0x210] sm:$0xff]
    %v1972 = vld [vmem:[#allocation4 + $0x218] sm:$0xff]
    %v1973 = vld [vmem:[#allocation4 + $0x220] sm:$0xff]
    %v1974 = vld [vmem:[#allocation4 + $0x228] sm:$0xff]
    %v1975 = vld [vmem:[#allocation4 + $0x230] sm:$0xff]
    %v1976 = vld [vmem:[#allocation4 + $0x238] sm:$0xff]
    %v1977 = vld [vmem:[#allocation4 + $0x240] sm:$0xff]
    %v1978 = vld [vmem:[#allocation4 + $0x248] sm:$0xff]
    %v1979 = vld [vmem:[#allocation4 + $0x250] sm:$0xff]
    %v1980 = vld [vmem:[#allocation4 + $0x258] sm:$0xff]
    %v1981 = vld [vmem:[#allocation4 + $0x260] sm:$0xff]
    %v1982 = vld [vmem:[#allocation4 + $0x268] sm:$0xff]
    %v1983 = vld [vmem:[#allocation4 + $0x270] sm:$0xff]
    %v1984 = vld [vmem:[#allocation4 + $0x278] sm:$0xff]
    %v1985 = vld [vmem:[#allocation4 + $0x280] sm:$0xff]
    %v1986 = vld [vmem:[#allocation4 + $0x288] sm:$0xff]
    %v1987 = vld [vmem:[#allocation4 + $0x290] sm:$0xff]
    %v1988 = vld [vmem:[#allocation4 + $0x298] sm:$0xff]
    %v1989 = vld [vmem:[#allocation4 + $0x2a0] sm:$0xff]
    %v1990 = vld [vmem:[#allocation4 + $0x2a8] sm:$0xff]
    %v1991 = vld [vmem:[#allocation4 + $0x2b0] sm:$0xff]
    %v1992 = vld [vmem:[#allocation4 + $0x2b8] sm:$0xff]
    %v1993 = vld [vmem:[#allocation4 + $0x2c0] sm:$0xff]
    %v1994 = vld [vmem:[#allocation4 + $0x2c8] sm:$0xff]
    %v1995 = vld [vmem:[#allocation4 + $0x2d0] sm:$0xff]
    %v1996 = vld [vmem:[#allocation4 + $0x2d8] sm:$0xff]
    %v1997 = vld [vmem:[#allocation4 + $0x2e0] sm:$0xff]
    %v1998 = vld [vmem:[#allocation4 + $0x2e8] sm:$0xff]
    %v1999 = vld [vmem:[#allocation4 + $0x2f0] sm:$0xff]
    %v2000 = vld [vmem:[#allocation4 + $0x2f8] sm:$0xff]
    %v2001 = vld [vmem:[#allocation4 + $0x300] sm:$0xff]
    %v2002 = vld [vmem:[#allocation4 + $0x308] sm:$0xff]
    %v2003 = vld [vmem:[#allocation4 + $0x310] sm:$0xff]
    %v2004 = vld [vmem:[#allocation4 + $0x318] sm:$0xff]
    %v2005 = vld [vmem:[#allocation4 + $0x320] sm:$0xff]
    %v2006 = vld [vmem:[#allocation4 + $0x328] sm:$0xff]
    %v2007 = vld [vmem:[#allocation4 + $0x330] sm:$0xff]
    %v2008 = vld [vmem:[#allocation4 + $0x338] sm:$0xff]
    %v2009 = vld [vmem:[#allocation4 + $0x340] sm:$0xff]
    %v2010 = vld [vmem:[#allocation4 + $0x348] sm:$0xff]
    %v2011 = vld [vmem:[#allocation4 + $0x350] sm:$0xff]
    %v2012 = vld [vmem:[#allocation4 + $0x358] sm:$0xff]
    %v2013 = vld [vmem:[#allocation4 + $0x360] sm:$0xff]
    %v2014 = vld [vmem:[#allocation4 + $0x368] sm:$0xff]
    %v2015 = vld [vmem:[#allocation4 + $0x370] sm:$0xff]
    %v2016 = vld [vmem:[#allocation4 + $0x378] sm:$0xff]
    %v2017 = vld [vmem:[#allocation4 + $0x380] sm:$0xff]
    %v2018 = vld [vmem:[#allocation4 + $0x388] sm:$0xff]
    %v2019 = vld [vmem:[#allocation4 + $0x390] sm:$0xff]
    %v2020 = vld [vmem:[#allocation4 + $0x398] sm:$0xff]
    %v2021 = vld [vmem:[#allocation4 + $0x3a0] sm:$0xff]
    %v2022 = vld [vmem:[#allocation4 + $0x3a8] sm:$0xff]
    %v2023 = vld [vmem:[#allocation4 + $0x3b0] sm:$0xff]
    %v2024 = vld [vmem:[#allocation4 + $0x3b8] sm:$0xff]
    %v2025 = vld [vmem:[#allocation4 + $0x3c0] sm:$0xff]
    %v2026 = vld [vmem:[#allocation4 + $0x3c8] sm:$0xff]
    %v2027 = vld [vmem:[#allocation4 + $0x3d0] sm:$0xff]
    %v2028 = vld [vmem:[#allocation4 + $0x3d8] sm:$0xff]
    %v2029 = vld [vmem:[#allocation4 + $0x3e0] sm:$0xff]
    %v2030 = vld [vmem:[#allocation4 + $0x3e8] sm:$0xff]
    %v2031 = vld [vmem:[#allocation4 + $0x3f0] sm:$0xff]
    %v2032 = vld [vmem:[#allocation4 + $0x3f8] sm:$0xff]
    %v2033 = vld [vmem:[%s12] sm:$0xf]
    %v2034 = vpack.c.bf16 %v1901, %v1901
    %v2035 = vpack.c.bf16 %v1902, %v1902
    %v2036 = vpack.c.bf16 %v1903, %v1903
    %v2037 = vpack.c.bf16 %v1904, %v1904
    %v2039 = vlaneseq
    %v2040 = vshrl.u32 %v2039, 7
    %v2041 = vsub.s32 0, %v2040
    %v2042 = vrot.slane %v2033, %v2041
    %v2043 = vlaneseq
    %v2044 = vshrl.u32 %v2043, 7
    %v2045 = vsub.s32 1, %v2044
    %v2046 = vrot.slane %v2033, %v2045
    %v2047 = vlaneseq
    %v2048 = vshrl.u32 %v2047, 7
    %v2049 = vsub.s32 2, %v2048
    %v2050 = vrot.slane %v2033, %v2049
    %v2051 = vlaneseq
    %v2052 = vshrl.u32 %v2051, 7
    %v2053 = vsub.s32 3, %v2052
    %v2054 = vrot.slane %v2033, %v2053
    %v2187 = vunpack.c.l.b16 %v1905
    %v2188 = vunpack.c.h.b16 %v1905
    %v2189 = vunpack.c.l.b16 %v1906
    %v2190 = vunpack.c.h.b16 %v1906
    %v2191 = vunpack.c.l.b16 %v1907
    %v2192 = vunpack.c.h.b16 %v1907
    %v2193 = vunpack.c.l.b16 %v1908
    %v2194 = vunpack.c.h.b16 %v1908
    %v2195 = vunpack.c.l.b16 %v1909
    %v2196 = vunpack.c.h.b16 %v1909
    %v2197 = vunpack.c.l.b16 %v1910
    %v2198 = vunpack.c.h.b16 %v1910
    %v2199 = vunpack.c.l.b16 %v1911
    %v2200 = vunpack.c.h.b16 %v1911
    %v2201 = vunpack.c.l.b16 %v1912
    %v2202 = vunpack.c.h.b16 %v1912
    %v2203 = vunpack.c.l.b16 %v1913
    %v2204 = vunpack.c.h.b16 %v1913
    %v2205 = vunpack.c.l.b16 %v1914
    %v2206 = vunpack.c.h.b16 %v1914
    %v2207 = vunpack.c.l.b16 %v1915
    %v2208 = vunpack.c.h.b16 %v1915
    %v2209 = vunpack.c.l.b16 %v1916
    %v2210 = vunpack.c.h.b16 %v1916
    %v2211 = vunpack.c.l.b16 %v1917
    %v2212 = vunpack.c.h.b16 %v1917
    %v2213 = vunpack.c.l.b16 %v1918
    %v2214 = vunpack.c.h.b16 %v1918
    %v2215 = vunpack.c.l.b16 %v1919
    %v2216 = vunpack.c.h.b16 %v1919
    %v2217 = vunpack.c.l.b16 %v1920
    %v2218 = vunpack.c.h.b16 %v1920
    %v2219 = vunpack.c.l.b16 %v1921
    %v2220 = vunpack.c.h.b16 %v1921
    %v2221 = vunpack.c.l.b16 %v1922
    %v2222 = vunpack.c.h.b16 %v1922
    %v2223 = vunpack.c.l.b16 %v1923
    %v2224 = vunpack.c.h.b16 %v1923
    %v2225 = vunpack.c.l.b16 %v1924
    %v2226 = vunpack.c.h.b16 %v1924
    %v2227 = vunpack.c.l.b16 %v1925
    %v2228 = vunpack.c.h.b16 %v1925
    %v2229 = vunpack.c.l.b16 %v1926
    %v2230 = vunpack.c.h.b16 %v1926
    %v2231 = vunpack.c.l.b16 %v1927
    %v2232 = vunpack.c.h.b16 %v1927
    %v2233 = vunpack.c.l.b16 %v1928
    %v2234 = vunpack.c.h.b16 %v1928
    %v2235 = vunpack.c.l.b16 %v1929
    %v2236 = vunpack.c.h.b16 %v1929
    %v2237 = vunpack.c.l.b16 %v1930
    %v2238 = vunpack.c.h.b16 %v1930
    %v2239 = vunpack.c.l.b16 %v1931
    %v2240 = vunpack.c.h.b16 %v1931
    %v2241 = vunpack.c.l.b16 %v1932
    %v2242 = vunpack.c.h.b16 %v1932
    %v2243 = vunpack.c.l.b16 %v1933
    %v2244 = vunpack.c.h.b16 %v1933
    %v2245 = vunpack.c.l.b16 %v1934
    %v2246 = vunpack.c.h.b16 %v1934
    %v2247 = vunpack.c.l.b16 %v1935
    %v2248 = vunpack.c.h.b16 %v1935
    %v2249 = vunpack.c.l.b16 %v1936
    %v2250 = vunpack.c.h.b16 %v1936
    %v2251 = vunpack.c.l.b16 %v1937
    %v2252 = vunpack.c.h.b16 %v1937
    %v2253 = vunpack.c.l.b16 %v1938
    %v2254 = vunpack.c.h.b16 %v1938
    %v2255 = vunpack.c.l.b16 %v1939
    %v2256 = vunpack.c.h.b16 %v1939
    %v2257 = vunpack.c.l.b16 %v1940
    %v2258 = vunpack.c.h.b16 %v1940
    %v2259 = vunpack.c.l.b16 %v1941
    %v2260 = vunpack.c.h.b16 %v1941
    %v2261 = vunpack.c.l.b16 %v1942
    %v2262 = vunpack.c.h.b16 %v1942
    %v2263 = vunpack.c.l.b16 %v1943
    %v2264 = vunpack.c.h.b16 %v1943
    %v2265 = vunpack.c.l.b16 %v1944
    %v2266 = vunpack.c.h.b16 %v1944
    %v2267 = vunpack.c.l.b16 %v1945
    %v2268 = vunpack.c.h.b16 %v1945
    %v2269 = vunpack.c.l.b16 %v1946
    %v2270 = vunpack.c.h.b16 %v1946
    %v2271 = vunpack.c.l.b16 %v1947
    %v2272 = vunpack.c.h.b16 %v1947
    %v2273 = vunpack.c.l.b16 %v1948
    %v2274 = vunpack.c.h.b16 %v1948
    %v2275 = vunpack.c.l.b16 %v1949
    %v2276 = vunpack.c.h.b16 %v1949
    %v2277 = vunpack.c.l.b16 %v1950
    %v2278 = vunpack.c.h.b16 %v1950
    %v2279 = vunpack.c.l.b16 %v1951
    %v2280 = vunpack.c.h.b16 %v1951
    %v2281 = vunpack.c.l.b16 %v1952
    %v2282 = vunpack.c.h.b16 %v1952
    %v2283 = vunpack.c.l.b16 %v1953
    %v2284 = vunpack.c.h.b16 %v1953
    %v2285 = vunpack.c.l.b16 %v1954
    %v2286 = vunpack.c.h.b16 %v1954
    %v2287 = vunpack.c.l.b16 %v1955
    %v2288 = vunpack.c.h.b16 %v1955
    %v2289 = vunpack.c.l.b16 %v1956
    %v2290 = vunpack.c.h.b16 %v1956
    %v2291 = vunpack.c.l.b16 %v1957
    %v2292 = vunpack.c.h.b16 %v1957
    %v2293 = vunpack.c.l.b16 %v1958
    %v2294 = vunpack.c.h.b16 %v1958
    %v2295 = vunpack.c.l.b16 %v1959
    %v2296 = vunpack.c.h.b16 %v1959
    %v2297 = vunpack.c.l.b16 %v1960
    %v2298 = vunpack.c.h.b16 %v1960
    %v2299 = vunpack.c.l.b16 %v1961
    %v2300 = vunpack.c.h.b16 %v1961
    %v2301 = vunpack.c.l.b16 %v1962
    %v2302 = vunpack.c.h.b16 %v1962
    %v2303 = vunpack.c.l.b16 %v1963
    %v2304 = vunpack.c.h.b16 %v1963
    %v2305 = vunpack.c.l.b16 %v1964
    %v2306 = vunpack.c.h.b16 %v1964
    %v2307 = vunpack.c.l.b16 %v1965
    %v2308 = vunpack.c.h.b16 %v1965
    %v2309 = vunpack.c.l.b16 %v1966
    %v2310 = vunpack.c.h.b16 %v1966
    %v2311 = vunpack.c.l.b16 %v1967
    %v2312 = vunpack.c.h.b16 %v1967
    %v2313 = vunpack.c.l.b16 %v1968
    %v2314 = vunpack.c.h.b16 %v1968
    %v2315 = vunpack.c.l.b16 %v1969
    %v2316 = vunpack.c.h.b16 %v1969
    %v2317 = vunpack.c.l.b16 %v1970
    %v2318 = vunpack.c.h.b16 %v1970
    %v2319 = vunpack.c.l.b16 %v1971
    %v2320 = vunpack.c.h.b16 %v1971
    %v2321 = vunpack.c.l.b16 %v1972
    %v2322 = vunpack.c.h.b16 %v1972
    %v2323 = vunpack.c.l.b16 %v1973
    %v2324 = vunpack.c.h.b16 %v1973
    %v2325 = vunpack.c.l.b16 %v1974
    %v2326 = vunpack.c.h.b16 %v1974
    %v2327 = vunpack.c.l.b16 %v1975
    %v2328 = vunpack.c.h.b16 %v1975
    %v2329 = vunpack.c.l.b16 %v1976
    %v2330 = vunpack.c.h.b16 %v1976
    %v2331 = vunpack.c.l.b16 %v1977
    %v2332 = vunpack.c.h.b16 %v1977
    %v2333 = vunpack.c.l.b16 %v1978
    %v2334 = vunpack.c.h.b16 %v1978
    %v2335 = vunpack.c.l.b16 %v1979
    %v2336 = vunpack.c.h.b16 %v1979
    %v2337 = vunpack.c.l.b16 %v1980
    %v2338 = vunpack.c.h.b16 %v1980
    %v2339 = vunpack.c.l.b16 %v1981
    %v2340 = vunpack.c.h.b16 %v1981
    %v2341 = vunpack.c.l.b16 %v1982
    %v2342 = vunpack.c.h.b16 %v1982
    %v2343 = vunpack.c.l.b16 %v1983
    %v2344 = vunpack.c.h.b16 %v1983
    %v2345 = vunpack.c.l.b16 %v1984
    %v2346 = vunpack.c.h.b16 %v1984
    %v2347 = vunpack.c.l.b16 %v1985
    %v2348 = vunpack.c.h.b16 %v1985
    %v2349 = vunpack.c.l.b16 %v1986
    %v2350 = vunpack.c.h.b16 %v1986
    %v2351 = vunpack.c.l.b16 %v1987
    %v2352 = vunpack.c.h.b16 %v1987
    %v2353 = vunpack.c.l.b16 %v1988
    %v2354 = vunpack.c.h.b16 %v1988
    %v2355 = vunpack.c.l.b16 %v1989
    %v2356 = vunpack.c.h.b16 %v1989
    %v2357 = vunpack.c.l.b16 %v1990
    %v2358 = vunpack.c.h.b16 %v1990
    %v2359 = vunpack.c.l.b16 %v1991
    %v2360 = vunpack.c.h.b16 %v1991
    %v2361 = vunpack.c.l.b16 %v1992
    %v2362 = vunpack.c.h.b16 %v1992
    %v2363 = vunpack.c.l.b16 %v1993
    %v2364 = vunpack.c.h.b16 %v1993
    %v2365 = vunpack.c.l.b16 %v1994
    %v2366 = vunpack.c.h.b16 %v1994
    %v2367 = vunpack.c.l.b16 %v1995
    %v2368 = vunpack.c.h.b16 %v1995
    %v2369 = vunpack.c.l.b16 %v1996
    %v2370 = vunpack.c.h.b16 %v1996
    %v2371 = vunpack.c.l.b16 %v1997
    %v2372 = vunpack.c.h.b16 %v1997
    %v2373 = vunpack.c.l.b16 %v1998
    %v2374 = vunpack.c.h.b16 %v1998
    %v2375 = vunpack.c.l.b16 %v1999
    %v2376 = vunpack.c.h.b16 %v1999
    %v2377 = vunpack.c.l.b16 %v2000
    %v2378 = vunpack.c.h.b16 %v2000
    %v2379 = vunpack.c.l.b16 %v2001
    %v2380 = vunpack.c.h.b16 %v2001
    %v2381 = vunpack.c.l.b16 %v2002
    %v2382 = vunpack.c.h.b16 %v2002
    %v2383 = vunpack.c.l.b16 %v2003
    %v2384 = vunpack.c.h.b16 %v2003
    %v2385 = vunpack.c.l.b16 %v2004
    %v2386 = vunpack.c.h.b16 %v2004
    %v2387 = vunpack.c.l.b16 %v2005
    %v2388 = vunpack.c.h.b16 %v2005
    %v2389 = vunpack.c.l.b16 %v2006
    %v2390 = vunpack.c.h.b16 %v2006
    %v2391 = vunpack.c.l.b16 %v2007
    %v2392 = vunpack.c.h.b16 %v2007
    %v2393 = vunpack.c.l.b16 %v2008
    %v2394 = vunpack.c.h.b16 %v2008
    %v2395 = vunpack.c.l.b16 %v2009
    %v2396 = vunpack.c.h.b16 %v2009
    %v2397 = vunpack.c.l.b16 %v2010
    %v2398 = vunpack.c.h.b16 %v2010
    %v2399 = vunpack.c.l.b16 %v2011
    %v2400 = vunpack.c.h.b16 %v2011
    %v2401 = vunpack.c.l.b16 %v2012
    %v2402 = vunpack.c.h.b16 %v2012
    %v2403 = vunpack.c.l.b16 %v2013
    %v2404 = vunpack.c.h.b16 %v2013
    %v2405 = vunpack.c.l.b16 %v2014
    %v2406 = vunpack.c.h.b16 %v2014
    %v2407 = vunpack.c.l.b16 %v2015
    %v2408 = vunpack.c.h.b16 %v2015
    %v2409 = vunpack.c.l.b16 %v2016
    %v2410 = vunpack.c.h.b16 %v2016
    %v2411 = vunpack.c.l.b16 %v2017
    %v2412 = vunpack.c.h.b16 %v2017
    %v2413 = vunpack.c.l.b16 %v2018
    %v2414 = vunpack.c.h.b16 %v2018
    %v2415 = vunpack.c.l.b16 %v2019
    %v2416 = vunpack.c.h.b16 %v2019
    %v2417 = vunpack.c.l.b16 %v2020
    %v2418 = vunpack.c.h.b16 %v2020
    %v2419 = vunpack.c.l.b16 %v2021
    %v2420 = vunpack.c.h.b16 %v2021
    %v2421 = vunpack.c.l.b16 %v2022
    %v2422 = vunpack.c.h.b16 %v2022
    %v2423 = vunpack.c.l.b16 %v2023
    %v2424 = vunpack.c.h.b16 %v2023
    %v2425 = vunpack.c.l.b16 %v2024
    %v2426 = vunpack.c.h.b16 %v2024
    %v2427 = vunpack.c.l.b16 %v2025
    %v2428 = vunpack.c.h.b16 %v2025
    %v2429 = vunpack.c.l.b16 %v2026
    %v2430 = vunpack.c.h.b16 %v2026
    %v2431 = vunpack.c.l.b16 %v2027
    %v2432 = vunpack.c.h.b16 %v2027
    %v2433 = vunpack.c.l.b16 %v2028
    %v2434 = vunpack.c.h.b16 %v2028
    %v2435 = vunpack.c.l.b16 %v2029
    %v2436 = vunpack.c.h.b16 %v2029
    %v2437 = vunpack.c.l.b16 %v2030
    %v2438 = vunpack.c.h.b16 %v2030
    %v2439 = vunpack.c.l.b16 %v2031
    %v2440 = vunpack.c.h.b16 %v2031
    %v2441 = vunpack.c.l.b16 %v2032
    %v2442 = vunpack.c.h.b16 %v2032
    %v2443 = vpack.c.b16 %v2191, %v2187
    %v2444 = vpack.c.b16 %v2192, %v2188
    %v2445 = vpack.c.b16 %v2193, %v2189
    %v2446 = vpack.c.b16 %v2194, %v2190
    %v2447 = vpack.c.b16 %v2199, %v2195
    %v2448 = vpack.c.b16 %v2200, %v2196
    %v2449 = vpack.c.b16 %v2201, %v2197
    %v2450 = vpack.c.b16 %v2202, %v2198
    %v2451 = vpack.c.b16 %v2207, %v2203
    %v2452 = vpack.c.b16 %v2208, %v2204
    %v2453 = vpack.c.b16 %v2209, %v2205
    %v2454 = vpack.c.b16 %v2210, %v2206
    %v2455 = vpack.c.b16 %v2215, %v2211
    %v2456 = vpack.c.b16 %v2216, %v2212
    %v2457 = vpack.c.b16 %v2217, %v2213
    %v2458 = vpack.c.b16 %v2218, %v2214
    %v2459 = vpack.c.b16 %v2223, %v2219
    %v2460 = vpack.c.b16 %v2224, %v2220
    %v2461 = vpack.c.b16 %v2225, %v2221
    %v2462 = vpack.c.b16 %v2226, %v2222
    %v2463 = vpack.c.b16 %v2231, %v2227
    %v2464 = vpack.c.b16 %v2232, %v2228
    %v2465 = vpack.c.b16 %v2233, %v2229
    %v2466 = vpack.c.b16 %v2234, %v2230
    %v2467 = vpack.c.b16 %v2239, %v2235
    %v2468 = vpack.c.b16 %v2240, %v2236
    %v2469 = vpack.c.b16 %v2241, %v2237
    %v2470 = vpack.c.b16 %v2242, %v2238
    %v2471 = vpack.c.b16 %v2247, %v2243
    %v2472 = vpack.c.b16 %v2248, %v2244
    %v2473 = vpack.c.b16 %v2249, %v2245
    %v2474 = vpack.c.b16 %v2250, %v2246
    %v2475 = vpack.c.b16 %v2255, %v2251
    %v2476 = vpack.c.b16 %v2256, %v2252
    %v2477 = vpack.c.b16 %v2257, %v2253
    %v2478 = vpack.c.b16 %v2258, %v2254
    %v2479 = vpack.c.b16 %v2263, %v2259
    %v2480 = vpack.c.b16 %v2264, %v2260
    %v2481 = vpack.c.b16 %v2265, %v2261
    %v2482 = vpack.c.b16 %v2266, %v2262
    %v2483 = vpack.c.b16 %v2271, %v2267
    %v2484 = vpack.c.b16 %v2272, %v2268
    %v2485 = vpack.c.b16 %v2273, %v2269
    %v2486 = vpack.c.b16 %v2274, %v2270
    %v2487 = vpack.c.b16 %v2279, %v2275
    %v2488 = vpack.c.b16 %v2280, %v2276
    %v2489 = vpack.c.b16 %v2281, %v2277
    %v2490 = vpack.c.b16 %v2282, %v2278
    %v2491 = vpack.c.b16 %v2287, %v2283
    %v2492 = vpack.c.b16 %v2288, %v2284
    %v2493 = vpack.c.b16 %v2289, %v2285
    %v2494 = vpack.c.b16 %v2290, %v2286
    %v2495 = vpack.c.b16 %v2295, %v2291
    %v2496 = vpack.c.b16 %v2296, %v2292
    %v2497 = vpack.c.b16 %v2297, %v2293
    %v2498 = vpack.c.b16 %v2298, %v2294
    %v2499 = vpack.c.b16 %v2303, %v2299
    %v2500 = vpack.c.b16 %v2304, %v2300
    %v2501 = vpack.c.b16 %v2305, %v2301
    %v2502 = vpack.c.b16 %v2306, %v2302
    %v2503 = vpack.c.b16 %v2311, %v2307
    %v2504 = vpack.c.b16 %v2312, %v2308
    %v2505 = vpack.c.b16 %v2313, %v2309
    %v2506 = vpack.c.b16 %v2314, %v2310
    %v2507 = vpack.c.b16 %v2319, %v2315
    %v2508 = vpack.c.b16 %v2320, %v2316
    %v2509 = vpack.c.b16 %v2321, %v2317
    %v2510 = vpack.c.b16 %v2322, %v2318
    %v2511 = vpack.c.b16 %v2327, %v2323
    %v2512 = vpack.c.b16 %v2328, %v2324
    %v2513 = vpack.c.b16 %v2329, %v2325
    %v2514 = vpack.c.b16 %v2330, %v2326
    %v2515 = vpack.c.b16 %v2335, %v2331
    %v2516 = vpack.c.b16 %v2336, %v2332
    %v2517 = vpack.c.b16 %v2337, %v2333
    %v2518 = vpack.c.b16 %v2338, %v2334
    %v2519 = vpack.c.b16 %v2343, %v2339
    %v2520 = vpack.c.b16 %v2344, %v2340
    %v2521 = vpack.c.b16 %v2345, %v2341
    %v2522 = vpack.c.b16 %v2346, %v2342
    %v2523 = vpack.c.b16 %v2351, %v2347
    %v2524 = vpack.c.b16 %v2352, %v2348
    %v2525 = vpack.c.b16 %v2353, %v2349
    %v2526 = vpack.c.b16 %v2354, %v2350
    %v2527 = vpack.c.b16 %v2359, %v2355
    %v2528 = vpack.c.b16 %v2360, %v2356
    %v2529 = vpack.c.b16 %v2361, %v2357
    %v2530 = vpack.c.b16 %v2362, %v2358
    %v2531 = vpack.c.b16 %v2367, %v2363
    %v2532 = vpack.c.b16 %v2368, %v2364
    %v2533 = vpack.c.b16 %v2369, %v2365
    %v2534 = vpack.c.b16 %v2370, %v2366
    %v2535 = vpack.c.b16 %v2375, %v2371
    %v2536 = vpack.c.b16 %v2376, %v2372
    %v2537 = vpack.c.b16 %v2377, %v2373
    %v2538 = vpack.c.b16 %v2378, %v2374
    %v2539 = vpack.c.b16 %v2383, %v2379
    %v2540 = vpack.c.b16 %v2384, %v2380
    %v2541 = vpack.c.b16 %v2385, %v2381
    %v2542 = vpack.c.b16 %v2386, %v2382
    %v2543 = vpack.c.b16 %v2391, %v2387
    %v2544 = vpack.c.b16 %v2392, %v2388
    %v2545 = vpack.c.b16 %v2393, %v2389
    %v2546 = vpack.c.b16 %v2394, %v2390
    %v2547 = vpack.c.b16 %v2399, %v2395
    %v2548 = vpack.c.b16 %v2400, %v2396
    %v2549 = vpack.c.b16 %v2401, %v2397
    %v2550 = vpack.c.b16 %v2402, %v2398
    %v2551 = vpack.c.b16 %v2407, %v2403
    %v2552 = vpack.c.b16 %v2408, %v2404
    %v2553 = vpack.c.b16 %v2409, %v2405
    %v2554 = vpack.c.b16 %v2410, %v2406
    %v2555 = vpack.c.b16 %v2415, %v2411
    %v2556 = vpack.c.b16 %v2416, %v2412
    %v2557 = vpack.c.b16 %v2417, %v2413
    %v2558 = vpack.c.b16 %v2418, %v2414
    %v2559 = vpack.c.b16 %v2423, %v2419
    %v2560 = vpack.c.b16 %v2424, %v2420
    %v2561 = vpack.c.b16 %v2425, %v2421
    %v2562 = vpack.c.b16 %v2426, %v2422
    %v2563 = vpack.c.b16 %v2431, %v2427
    %v2564 = vpack.c.b16 %v2432, %v2428
    %v2565 = vpack.c.b16 %v2433, %v2429
    %v2566 = vpack.c.b16 %v2434, %v2430
    %v2567 = vpack.c.b16 %v2439, %v2435
    %v2568 = vpack.c.b16 %v2440, %v2436
    %v2569 = vpack.c.b16 %v2441, %v2437
    %v2570 = vpack.c.b16 %v2442, %v2438
    %2699 = vmatprep.subr.bf16.mxu0 %v2444
    %2700 = vmatpush1.bf16.msra.mxu0 %v2443
    %2701 = vmatprep.subr.bf16.mxu0 %v2448
    %2702 = vmatpush1.bf16.msra.mxu0 %v2447
    %2703 = vmatprep.subr.bf16.mxu0 %v2452
    %2704 = vmatpush1.bf16.msra.mxu0 %v2451
    %2705 = vmatprep.subr.bf16.mxu0 %v2456
    %2706 = vmatpush1.bf16.msra.mxu0 %v2455
    %2707 = vmatprep.subr.bf16.mxu0 %v2460
    %2708 = vmatpush1.bf16.msra.mxu0 %v2459
    %2709 = vmatprep.subr.bf16.mxu0 %v2464
    %2710 = vmatpush1.bf16.msra.mxu0 %v2463
    %2711 = vmatprep.subr.bf16.mxu0 %v2468
    %2712 = vmatpush1.bf16.msra.mxu0 %v2467
    %2713 = vmatprep.subr.bf16.mxu0 %v2472
    %2714 = vmatpush1.bf16.msra.mxu0 %v2471
    %2715 = vmatprep.subr.bf16.mxu0 %v2476
    %2716 = vmatpush1.bf16.msra.mxu0 %v2475
    %2717 = vmatprep.subr.bf16.mxu0 %v2480
    %2718 = vmatpush1.bf16.msra.mxu0 %v2479
    %2719 = vmatprep.subr.bf16.mxu0 %v2484
    %2720 = vmatpush1.bf16.msra.mxu0 %v2483
    %2721 = vmatprep.subr.bf16.mxu0 %v2488
    %2722 = vmatpush1.bf16.msra.mxu0 %v2487
    %2723 = vmatprep.subr.bf16.mxu0 %v2492
    %2724 = vmatpush1.bf16.msra.mxu0 %v2491
    %2725 = vmatprep.subr.bf16.mxu0 %v2496
    %2726 = vmatpush1.bf16.msra.mxu0 %v2495
    %2727 = vmatprep.subr.bf16.mxu0 %v2500
    %2728 = vmatpush1.bf16.msra.mxu0 %v2499
    %2729 = vmatprep.subr.bf16.mxu0 %v2504
    %2730 = vmatpush1.bf16.msra.mxu0 %v2503
    %2731 = vmatprep.mubr.bf16.mxu0 %v2035
    %2732 = vmatmul.mubr.bf16.gmra.mrb[0].mxu0 %v2034
    %v2733 = vpop.f32.mrb[0].mxu0
    %v2734 = vadd.f32 %v2042, %v2733
    %v2735 = vpop.f32.mrb[0].mxu0
    %v2736 = vadd.f32 %v2046, %v2735
    %v2737 = vpop.f32.mrb[0].mxu0
    %v2738 = vpop.f32.mrb[0].mxu0
    %2739 = vdwg.mxu0
    %2740 = vmatprep.subr.bf16.mxu0 %v2508
    %2741 = vmatpush1.bf16.msra.mxu0 %v2507
    %2742 = vmatprep.subr.bf16.mxu0 %v2512
    %2743 = vmatpush1.bf16.msra.mxu0 %v2511
    %2744 = vmatprep.subr.bf16.mxu0 %v2516
    %2745 = vmatpush1.bf16.msra.mxu0 %v2515
    %2746 = vmatprep.subr.bf16.mxu0 %v2520
    %2747 = vmatpush1.bf16.msra.mxu0 %v2519
    %2748 = vmatprep.subr.bf16.mxu0 %v2524
    %2749 = vmatpush1.bf16.msra.mxu0 %v2523
    %2750 = vmatprep.subr.bf16.mxu0 %v2528
    %2751 = vmatpush1.bf16.msra.mxu0 %v2527
    %2752 = vmatprep.subr.bf16.mxu0 %v2532
    %2753 = vmatpush1.bf16.msra.mxu0 %v2531
    %2754 = vmatprep.subr.bf16.mxu0 %v2536
    %2755 = vmatpush1.bf16.msra.mxu0 %v2535
    %2756 = vmatprep.subr.bf16.mxu0 %v2540
    %2757 = vmatpush1.bf16.msra.mxu0 %v2539
    %2758 = vmatprep.subr.bf16.mxu0 %v2544
    %2759 = vmatpush1.bf16.msra.mxu0 %v2543
    %2760 = vmatprep.subr.bf16.mxu0 %v2548
    %2761 = vmatpush1.bf16.msra.mxu0 %v2547
    %2762 = vmatprep.subr.bf16.mxu0 %v2552
    %2763 = vmatpush1.bf16.msra.mxu0 %v2551
    %2764 = vmatprep.subr.bf16.mxu0 %v2556
    %2765 = vmatpush1.bf16.msra.mxu0 %v2555
    %2766 = vmatprep.subr.bf16.mxu0 %v2560
    %2767 = vmatpush1.bf16.msra.mxu0 %v2559
    %2768 = vmatprep.subr.bf16.mxu0 %v2564
    %2769 = vmatpush1.bf16.msra.mxu0 %v2563
    %2770 = vmatprep.subr.bf16.mxu0 %v2568
    %2771 = vmatpush1.bf16.msra.mxu0 %v2567
    %2772 = vmatprep.mubr.bf16.mxu0 %v2037
    %2773 = vmatmul.mubr.bf16.gmra.mrb[0].mxu0 %v2036
    %v2774 = vpop.f32.mrb[0].mxu0
    %v2775 = vadd.f32 %v2734, %v2774
    %v2776 = vpop.f32.mrb[0].mxu0
    %v2777 = vadd.f32 %v2736, %v2776
    %v2778 = vpop.f32.mrb[0].mxu0
    %v2779 = vpop.f32.mrb[0].mxu0
    %2780 = vdwg.mxu0
    %2781 = vmatprep.subr.bf16.mxu0 %v2446
    %2782 = vmatpush1.bf16.msra.mxu0 %v2445
    %2783 = vmatprep.subr.bf16.mxu0 %v2450
    %2784 = vmatpush1.bf16.msra.mxu0 %v2449
    %2785 = vmatprep.subr.bf16.mxu0 %v2454
    %2786 = vmatpush1.bf16.msra.mxu0 %v2453
    %2787 = vmatprep.subr.bf16.mxu0 %v2458
    %2788 = vmatpush1.bf16.msra.mxu0 %v2457
    %2789 = vmatprep.subr.bf16.mxu0 %v2462
    %2790 = vmatpush1.bf16.msra.mxu0 %v2461
    %2791 = vmatprep.subr.bf16.mxu0 %v2466
    %2792 = vmatpush1.bf16.msra.mxu0 %v2465
    %2793 = vmatprep.subr.bf16.mxu0 %v2470
    %2794 = vmatpush1.bf16.msra.mxu0 %v2469
    %2795 = vmatprep.subr.bf16.mxu0 %v2474
    %2796 = vmatpush1.bf16.msra.mxu0 %v2473
    %2797 = vmatprep.subr.bf16.mxu0 %v2478
    %2798 = vmatpush1.bf16.msra.mxu0 %v2477
    %2799 = vmatprep.subr.bf16.mxu0 %v2482
    %2800 = vmatpush1.bf16.msra.mxu0 %v2481
    %2801 = vmatprep.subr.bf16.mxu0 %v2486
    %2802 = vmatpush1.bf16.msra.mxu0 %v2485
    %2803 = vmatprep.subr.bf16.mxu0 %v2490
    %2804 = vmatpush1.bf16.msra.mxu0 %v2489
    %2805 = vmatprep.subr.bf16.mxu0 %v2494
    %2806 = vmatpush1.bf16.msra.mxu0 %v2493
    %2807 = vmatprep.subr.bf16.mxu0 %v2498
    %2808 = vmatpush1.bf16.msra.mxu0 %v2497
    %2809 = vmatprep.subr.bf16.mxu0 %v2502
    %2810 = vmatpush1.bf16.msra.mxu0 %v2501
    %2811 = vmatprep.subr.bf16.mxu0 %v2506
    %2812 = vmatpush1.bf16.msra.mxu0 %v2505
    %2813 = vmatprep.mubr.bf16.mxu0 %v2035
    %2814 = vmatmul.mubr.bf16.gmra.mrb[0].mxu0 %v2034
    %v2815 = vpop.f32.mrb[0].mxu0
    %v2816 = vadd.f32 %v2050, %v2815
    %v2817 = vpop.f32.mrb[0].mxu0
    %v2818 = vadd.f32 %v2054, %v2817
    %v2819 = vpop.f32.mrb[0].mxu0
    %v2820 = vpop.f32.mrb[0].mxu0
    %2821 = vdwg.mxu0
    %2822 = vmatprep.subr.bf16.mxu0 %v2510
    %2823 = vmatpush1.bf16.msra.mxu0 %v2509
    %2824 = vmatprep.subr.bf16.mxu0 %v2514
    %2825 = vmatpush1.bf16.msra.mxu0 %v2513
    %2826 = vmatprep.subr.bf16.mxu0 %v2518
    %2827 = vmatpush1.bf16.msra.mxu0 %v2517
    %2828 = vmatprep.subr.bf16.mxu0 %v2522
    %2829 = vmatpush1.bf16.msra.mxu0 %v2521
    %2830 = vmatprep.subr.bf16.mxu0 %v2526
    %2831 = vmatpush1.bf16.msra.mxu0 %v2525
    %2832 = vmatprep.subr.bf16.mxu0 %v2530
    %2833 = vmatpush1.bf16.msra.mxu0 %v2529
    %2834 = vmatprep.subr.bf16.mxu0 %v2534
    %2835 = vmatpush1.bf16.msra.mxu0 %v2533
    %2836 = vmatprep.subr.bf16.mxu0 %v2538
    %2837 = vmatpush1.bf16.msra.mxu0 %v2537
    %2838 = vmatprep.subr.bf16.mxu0 %v2542
    %2839 = vmatpush1.bf16.msra.mxu0 %v2541
    %2840 = vmatprep.subr.bf16.mxu0 %v2546
    %2841 = vmatpush1.bf16.msra.mxu0 %v2545
    %2842 = vmatprep.subr.bf16.mxu0 %v2550
    %2843 = vmatpush1.bf16.msra.mxu0 %v2549
    %2844 = vmatprep.subr.bf16.mxu0 %v2554
    %2845 = vmatpush1.bf16.msra.mxu0 %v2553
    %2846 = vmatprep.subr.bf16.mxu0 %v2558
    %2847 = vmatpush1.bf16.msra.mxu0 %v2557
    %2848 = vmatprep.subr.bf16.mxu0 %v2562
    %2849 = vmatpush1.bf16.msra.mxu0 %v2561
    %2850 = vmatprep.subr.bf16.mxu0 %v2566
    %2851 = vmatpush1.bf16.msra.mxu0 %v2565
    %2852 = vmatprep.subr.bf16.mxu0 %v2570
    %2853 = vmatpush1.bf16.msra.mxu0 %v2569
    %2854 = vmatprep.mubr.bf16.mxu0 %v2037
    %2855 = vmatmul.mubr.bf16.gmra.mrb[0].mxu0 %v2036
    %v2856 = vpop.f32.mrb[0].mxu0
    %v2857 = vadd.f32 %v2816, %v2856
    %v2858 = vpop.f32.mrb[0].mxu0
    %v2859 = vadd.f32 %v2818, %v2858
    %v2860 = vpop.f32.mrb[0].mxu0
    %v2861 = vpop.f32.mrb[0].mxu0
    %2862 = vdwg.mxu0
    %v2863 = vmax.f32 %v2775, 0.0
    %v2864 = vmax.f32 %v2777, 0.0
    %v2865 = vmax.f32 %v2857, 0.0
    %v2866 = vmax.f32 %v2859, 0.0
    %v2867 = vld [vmem:[#allocation6] sm:$0xff]
    %v2868 = vld [vmem:[#allocation6 + $0x8] sm:$0xff]
    %v2869 = vld [vmem:[#allocation6 + $0x10] sm:$0xff]
    %v2870 = vld [vmem:[#allocation6 + $0x18] sm:$0xff]
    %v2871 = vld [vmem:[#allocation6 + $0x20] sm:$0xff]
    %v2872 = vld [vmem:[#allocation6 + $0x28] sm:$0xff]
    %v2873 = vld [vmem:[#allocation6 + $0x30] sm:$0xff]
    %v2874 = vld [vmem:[#allocation6 + $0x38] sm:$0xff]
    %v2875 = vld [vmem:[#allocation6 + $0x40] sm:$0xff]
    %v2876 = vld [vmem:[#allocation6 + $0x48] sm:$0xff]
    %v2877 = vld [vmem:[#allocation6 + $0x50] sm:$0xff]
    %v2878 = vld [vmem:[#allocation6 + $0x58] sm:$0xff]
    %v2879 = vld [vmem:[#allocation6 + $0x60] sm:$0xff]
    %v2880 = vld [vmem:[#allocation6 + $0x68] sm:$0xff]
    %v2881 = vld [vmem:[#allocation6 + $0x70] sm:$0xff]
    %v2882 = vld [vmem:[#allocation6 + $0x78] sm:$0xff]
    %v2883 = vld [vmem:[#allocation6 + $0x80] sm:$0xff]
    %v2884 = vld [vmem:[#allocation6 + $0x88] sm:$0xff]
    %v2885 = vld [vmem:[#allocation6 + $0x90] sm:$0xff]
    %v2886 = vld [vmem:[#allocation6 + $0x98] sm:$0xff]
    %v2887 = vld [vmem:[#allocation6 + $0xa0] sm:$0xff]
    %v2888 = vld [vmem:[#allocation6 + $0xa8] sm:$0xff]
    %v2889 = vld [vmem:[#allocation6 + $0xb0] sm:$0xff]
    %v2890 = vld [vmem:[#allocation6 + $0xb8] sm:$0xff]
    %v2891 = vld [vmem:[#allocation6 + $0xc0] sm:$0xff]
    %v2892 = vld [vmem:[#allocation6 + $0xc8] sm:$0xff]
    %v2893 = vld [vmem:[#allocation6 + $0xd0] sm:$0xff]
    %v2894 = vld [vmem:[#allocation6 + $0xd8] sm:$0xff]
    %v2895 = vld [vmem:[#allocation6 + $0xe0] sm:$0xff]
    %v2896 = vld [vmem:[#allocation6 + $0xe8] sm:$0xff]
    %v2897 = vld [vmem:[#allocation6 + $0xf0] sm:$0xff]
    %v2898 = vld [vmem:[#allocation6 + $0xf8] sm:$0xff]
    %v2899 = vld [vmem:[#allocation6 + $0x100] sm:$0xff]
    %v2900 = vld [vmem:[#allocation6 + $0x108] sm:$0xff]
    %v2901 = vld [vmem:[#allocation6 + $0x110] sm:$0xff]
    %v2902 = vld [vmem:[#allocation6 + $0x118] sm:$0xff]
    %v2903 = vld [vmem:[#allocation6 + $0x120] sm:$0xff]
    %v2904 = vld [vmem:[#allocation6 + $0x128] sm:$0xff]
    %v2905 = vld [vmem:[#allocation6 + $0x130] sm:$0xff]
    %v2906 = vld [vmem:[#allocation6 + $0x138] sm:$0xff]
    %v2907 = vld [vmem:[#allocation6 + $0x140] sm:$0xff]
    %v2908 = vld [vmem:[#allocation6 + $0x148] sm:$0xff]
    %v2909 = vld [vmem:[#allocation6 + $0x150] sm:$0xff]
    %v2910 = vld [vmem:[#allocation6 + $0x158] sm:$0xff]
    %v2911 = vld [vmem:[#allocation6 + $0x160] sm:$0xff]
    %v2912 = vld [vmem:[#allocation6 + $0x168] sm:$0xff]
    %v2913 = vld [vmem:[#allocation6 + $0x170] sm:$0xff]
    %v2914 = vld [vmem:[#allocation6 + $0x178] sm:$0xff]
    %v2915 = vld [vmem:[#allocation6 + $0x180] sm:$0xff]
    %v2916 = vld [vmem:[#allocation6 + $0x188] sm:$0xff]
    %v2917 = vld [vmem:[#allocation6 + $0x190] sm:$0xff]
    %v2918 = vld [vmem:[#allocation6 + $0x198] sm:$0xff]
    %v2919 = vld [vmem:[#allocation6 + $0x1a0] sm:$0xff]
    %v2920 = vld [vmem:[#allocation6 + $0x1a8] sm:$0xff]
    %v2921 = vld [vmem:[#allocation6 + $0x1b0] sm:$0xff]
    %v2922 = vld [vmem:[#allocation6 + $0x1b8] sm:$0xff]
    %v2923 = vld [vmem:[#allocation6 + $0x1c0] sm:$0xff]
    %v2924 = vld [vmem:[#allocation6 + $0x1c8] sm:$0xff]
    %v2925 = vld [vmem:[#allocation6 + $0x1d0] sm:$0xff]
    %v2926 = vld [vmem:[#allocation6 + $0x1d8] sm:$0xff]
    %v2927 = vld [vmem:[#allocation6 + $0x1e0] sm:$0xff]
    %v2928 = vld [vmem:[#allocation6 + $0x1e8] sm:$0xff]
    %v2929 = vld [vmem:[#allocation6 + $0x1f0] sm:$0xff]
    %v2930 = vld [vmem:[#allocation6 + $0x1f8] sm:$0xff]
    %v2931 = vld [vmem:[%s13] sm:$0x3]
    %v2932 = vpack.c.bf16 %v2863, %v2863
    %v2933 = vpack.c.bf16 %v2864, %v2864
    %v2934 = vpack.c.bf16 %v2865, %v2865
    %v2935 = vpack.c.bf16 %v2866, %v2866
    %v2937 = vlaneseq
    %v2938 = vshrl.u32 %v2937, 7
    %v2939 = vsub.s32 0, %v2938
    %v2940 = vrot.slane %v2931, %v2939
    %v2941 = vlaneseq
    %v2942 = vshrl.u32 %v2941, 7
    %v2943 = vsub.s32 1, %v2942
    %v2944 = vrot.slane %v2931, %v2943
    %v3011 = vunpack.c.l.b16 %v2867
    %v3012 = vunpack.c.h.b16 %v2867
    %v3013 = vunpack.c.l.b16 %v2868
    %v3014 = vunpack.c.h.b16 %v2868
    %v3015 = vunpack.c.l.b16 %v2869
    %v3016 = vunpack.c.h.b16 %v2869
    %v3017 = vunpack.c.l.b16 %v2870
    %v3018 = vunpack.c.h.b16 %v2870
    %v3019 = vunpack.c.l.b16 %v2871
    %v3020 = vunpack.c.h.b16 %v2871
    %v3021 = vunpack.c.l.b16 %v2872
    %v3022 = vunpack.c.h.b16 %v2872
    %v3023 = vunpack.c.l.b16 %v2873
    %v3024 = vunpack.c.h.b16 %v2873
    %v3025 = vunpack.c.l.b16 %v2874
    %v3026 = vunpack.c.h.b16 %v2874
    %v3027 = vunpack.c.l.b16 %v2875
    %v3028 = vunpack.c.h.b16 %v2875
    %v3029 = vunpack.c.l.b16 %v2876
    %v3030 = vunpack.c.h.b16 %v2876
    %v3031 = vunpack.c.l.b16 %v2877
    %v3032 = vunpack.c.h.b16 %v2877
    %v3033 = vunpack.c.l.b16 %v2878
    %v3034 = vunpack.c.h.b16 %v2878
    %v3035 = vunpack.c.l.b16 %v2879
    %v3036 = vunpack.c.h.b16 %v2879
    %v3037 = vunpack.c.l.b16 %v2880
    %v3038 = vunpack.c.h.b16 %v2880
    %v3039 = vunpack.c.l.b16 %v2881
    %v3040 = vunpack.c.h.b16 %v2881
    %v3041 = vunpack.c.l.b16 %v2882
    %v3042 = vunpack.c.h.b16 %v2882
    %v3043 = vunpack.c.l.b16 %v2883
    %v3044 = vunpack.c.h.b16 %v2883
    %v3045 = vunpack.c.l.b16 %v2884
    %v3046 = vunpack.c.h.b16 %v2884
    %v3047 = vunpack.c.l.b16 %v2885
    %v3048 = vunpack.c.h.b16 %v2885
    %v3049 = vunpack.c.l.b16 %v2886
    %v3050 = vunpack.c.h.b16 %v2886
    %v3051 = vunpack.c.l.b16 %v2887
    %v3052 = vunpack.c.h.b16 %v2887
    %v3053 = vunpack.c.l.b16 %v2888
    %v3054 = vunpack.c.h.b16 %v2888
    %v3055 = vunpack.c.l.b16 %v2889
    %v3056 = vunpack.c.h.b16 %v2889
    %v3057 = vunpack.c.l.b16 %v2890
    %v3058 = vunpack.c.h.b16 %v2890
    %v3059 = vunpack.c.l.b16 %v2891
    %v3060 = vunpack.c.h.b16 %v2891
    %v3061 = vunpack.c.l.b16 %v2892
    %v3062 = vunpack.c.h.b16 %v2892
    %v3063 = vunpack.c.l.b16 %v2893
    %v3064 = vunpack.c.h.b16 %v2893
    %v3065 = vunpack.c.l.b16 %v2894
    %v3066 = vunpack.c.h.b16 %v2894
    %v3067 = vunpack.c.l.b16 %v2895
    %v3068 = vunpack.c.h.b16 %v2895
    %v3069 = vunpack.c.l.b16 %v2896
    %v3070 = vunpack.c.h.b16 %v2896
    %v3071 = vunpack.c.l.b16 %v2897
    %v3072 = vunpack.c.h.b16 %v2897
    %v3073 = vunpack.c.l.b16 %v2898
    %v3074 = vunpack.c.h.b16 %v2898
    %v3075 = vunpack.c.l.b16 %v2899
    %v3076 = vunpack.c.h.b16 %v2899
    %v3077 = vunpack.c.l.b16 %v2900
    %v3078 = vunpack.c.h.b16 %v2900
    %v3079 = vunpack.c.l.b16 %v2901
    %v3080 = vunpack.c.h.b16 %v2901
    %v3081 = vunpack.c.l.b16 %v2902
    %v3082 = vunpack.c.h.b16 %v2902
    %v3083 = vunpack.c.l.b16 %v2903
    %v3084 = vunpack.c.h.b16 %v2903
    %v3085 = vunpack.c.l.b16 %v2904
    %v3086 = vunpack.c.h.b16 %v2904
    %v3087 = vunpack.c.l.b16 %v2905
    %v3088 = vunpack.c.h.b16 %v2905
    %v3089 = vunpack.c.l.b16 %v2906
    %v3090 = vunpack.c.h.b16 %v2906
    %v3091 = vunpack.c.l.b16 %v2907
    %v3092 = vunpack.c.h.b16 %v2907
    %v3093 = vunpack.c.l.b16 %v2908
    %v3094 = vunpack.c.h.b16 %v2908
    %v3095 = vunpack.c.l.b16 %v2909
    %v3096 = vunpack.c.h.b16 %v2909
    %v3097 = vunpack.c.l.b16 %v2910
    %v3098 = vunpack.c.h.b16 %v2910
    %v3099 = vunpack.c.l.b16 %v2911
    %v3100 = vunpack.c.h.b16 %v2911
    %v3101 = vunpack.c.l.b16 %v2912
    %v3102 = vunpack.c.h.b16 %v2912
    %v3103 = vunpack.c.l.b16 %v2913
    %v3104 = vunpack.c.h.b16 %v2913
    %v3105 = vunpack.c.l.b16 %v2914
    %v3106 = vunpack.c.h.b16 %v2914
    %v3107 = vunpack.c.l.b16 %v2915
    %v3108 = vunpack.c.h.b16 %v2915
    %v3109 = vunpack.c.l.b16 %v2916
    %v3110 = vunpack.c.h.b16 %v2916
    %v3111 = vunpack.c.l.b16 %v2917
    %v3112 = vunpack.c.h.b16 %v2917
    %v3113 = vunpack.c.l.b16 %v2918
    %v3114 = vunpack.c.h.b16 %v2918
    %v3115 = vunpack.c.l.b16 %v2919
    %v3116 = vunpack.c.h.b16 %v2919
    %v3117 = vunpack.c.l.b16 %v2920
    %v3118 = vunpack.c.h.b16 %v2920
    %v3119 = vunpack.c.l.b16 %v2921
    %v3120 = vunpack.c.h.b16 %v2921
    %v3121 = vunpack.c.l.b16 %v2922
    %v3122 = vunpack.c.h.b16 %v2922
    %v3123 = vunpack.c.l.b16 %v2923
    %v3124 = vunpack.c.h.b16 %v2923
    %v3125 = vunpack.c.l.b16 %v2924
    %v3126 = vunpack.c.h.b16 %v2924
    %v3127 = vunpack.c.l.b16 %v2925
    %v3128 = vunpack.c.h.b16 %v2925
    %v3129 = vunpack.c.l.b16 %v2926
    %v3130 = vunpack.c.h.b16 %v2926
    %v3131 = vunpack.c.l.b16 %v2927
    %v3132 = vunpack.c.h.b16 %v2927
    %v3133 = vunpack.c.l.b16 %v2928
    %v3134 = vunpack.c.h.b16 %v2928
    %v3135 = vunpack.c.l.b16 %v2929
    %v3136 = vunpack.c.h.b16 %v2929
    %v3137 = vunpack.c.l.b16 %v2930
    %v3138 = vunpack.c.h.b16 %v2930
    %v3139 = vpack.c.b16 %v3013, %v3011
    %v3140 = vpack.c.b16 %v3014, %v3012
    %v3141 = vpack.c.b16 %v3017, %v3015
    %v3142 = vpack.c.b16 %v3018, %v3016
    %v3143 = vpack.c.b16 %v3021, %v3019
    %v3144 = vpack.c.b16 %v3022, %v3020
    %v3145 = vpack.c.b16 %v3025, %v3023
    %v3146 = vpack.c.b16 %v3026, %v3024
    %v3147 = vpack.c.b16 %v3029, %v3027
    %v3148 = vpack.c.b16 %v3030, %v3028
    %v3149 = vpack.c.b16 %v3033, %v3031
    %v3150 = vpack.c.b16 %v3034, %v3032
    %v3151 = vpack.c.b16 %v3037, %v3035
    %v3152 = vpack.c.b16 %v3038, %v3036
    %v3153 = vpack.c.b16 %v3041, %v3039
    %v3154 = vpack.c.b16 %v3042, %v3040
    %v3155 = vpack.c.b16 %v3045, %v3043
    %v3156 = vpack.c.b16 %v3046, %v3044
    %v3157 = vpack.c.b16 %v3049, %v3047
    %v3158 = vpack.c.b16 %v3050, %v3048
    %v3159 = vpack.c.b16 %v3053, %v3051
    %v3160 = vpack.c.b16 %v3054, %v3052
    %v3161 = vpack.c.b16 %v3057, %v3055
    %v3162 = vpack.c.b16 %v3058, %v3056
    %v3163 = vpack.c.b16 %v3061, %v3059
    %v3164 = vpack.c.b16 %v3062, %v3060
    %v3165 = vpack.c.b16 %v3065, %v3063
    %v3166 = vpack.c.b16 %v3066, %v3064
    %v3167 = vpack.c.b16 %v3069, %v3067
    %v3168 = vpack.c.b16 %v3070, %v3068
    %v3169 = vpack.c.b16 %v3073, %v3071
    %v3170 = vpack.c.b16 %v3074, %v3072
    %v3171 = vpack.c.b16 %v3077, %v3075
    %v3172 = vpack.c.b16 %v3078, %v3076
    %v3173 = vpack.c.b16 %v3081, %v3079
    %v3174 = vpack.c.b16 %v3082, %v3080
    %v3175 = vpack.c.b16 %v3085, %v3083
    %v3176 = vpack.c.b16 %v3086, %v3084
    %v3177 = vpack.c.b16 %v3089, %v3087
    %v3178 = vpack.c.b16 %v3090, %v3088
    %v3179 = vpack.c.b16 %v3093, %v3091
    %v3180 = vpack.c.b16 %v3094, %v3092
    %v3181 = vpack.c.b16 %v3097, %v3095
    %v3182 = vpack.c.b16 %v3098, %v3096
    %v3183 = vpack.c.b16 %v3101, %v3099
    %v3184 = vpack.c.b16 %v3102, %v3100
    %v3185 = vpack.c.b16 %v3105, %v3103
    %v3186 = vpack.c.b16 %v3106, %v3104
    %v3187 = vpack.c.b16 %v3109, %v3107
    %v3188 = vpack.c.b16 %v3110, %v3108
    %v3189 = vpack.c.b16 %v3113, %v3111
    %v3190 = vpack.c.b16 %v3114, %v3112
    %v3191 = vpack.c.b16 %v3117, %v3115
    %v3192 = vpack.c.b16 %v3118, %v3116
    %v3193 = vpack.c.b16 %v3121, %v3119
    %v3194 = vpack.c.b16 %v3122, %v3120
    %v3195 = vpack.c.b16 %v3125, %v3123
    %v3196 = vpack.c.b16 %v3126, %v3124
    %v3197 = vpack.c.b16 %v3129, %v3127
    %v3198 = vpack.c.b16 %v3130, %v3128
    %v3199 = vpack.c.b16 %v3133, %v3131
    %v3200 = vpack.c.b16 %v3134, %v3132
    %v3201 = vpack.c.b16 %v3137, %v3135
    %v3202 = vpack.c.b16 %v3138, %v3136
    %3267 = vmatprep.subr.bf16.mxu0 %v3140
    %3268 = vmatpush1.bf16.msra.mxu0 %v3139
    %3269 = vmatprep.subr.bf16.mxu0 %v3142
    %3270 = vmatpush1.bf16.msra.mxu0 %v3141
    %3271 = vmatprep.subr.bf16.mxu0 %v3144
    %3272 = vmatpush1.bf16.msra.mxu0 %v3143
    %3273 = vmatprep.subr.bf16.mxu0 %v3146
    %3274 = vmatpush1.bf16.msra.mxu0 %v3145
    %3275 = vmatprep.subr.bf16.mxu0 %v3148
    %3276 = vmatpush1.bf16.msra.mxu0 %v3147
    %3277 = vmatprep.subr.bf16.mxu0 %v3150
    %3278 = vmatpush1.bf16.msra.mxu0 %v3149
    %3279 = vmatprep.subr.bf16.mxu0 %v3152
    %3280 = vmatpush1.bf16.msra.mxu0 %v3151
    %3281 = vmatprep.subr.bf16.mxu0 %v3154
    %3282 = vmatpush1.bf16.msra.mxu0 %v3153
    %3283 = vmatprep.subr.bf16.mxu0 %v3156
    %3284 = vmatpush1.bf16.msra.mxu0 %v3155
    %3285 = vmatprep.subr.bf16.mxu0 %v3158
    %3286 = vmatpush1.bf16.msra.mxu0 %v3157
    %3287 = vmatprep.subr.bf16.mxu0 %v3160
    %3288 = vmatpush1.bf16.msra.mxu0 %v3159
    %3289 = vmatprep.subr.bf16.mxu0 %v3162
    %3290 = vmatpush1.bf16.msra.mxu0 %v3161
    %3291 = vmatprep.subr.bf16.mxu0 %v3164
    %3292 = vmatpush1.bf16.msra.mxu0 %v3163
    %3293 = vmatprep.subr.bf16.mxu0 %v3166
    %3294 = vmatpush1.bf16.msra.mxu0 %v3165
    %3295 = vmatprep.subr.bf16.mxu0 %v3168
    %3296 = vmatpush1.bf16.msra.mxu0 %v3167
    %3297 = vmatprep.subr.bf16.mxu0 %v3170
    %3298 = vmatpush1.bf16.msra.mxu0 %v3169
    %3299 = vmatprep.mubr.bf16.mxu0 %v2933
    %3300 = vmatmul.mubr.bf16.gmra.mrb[0].mxu0 %v2932
    %v3301 = vpop.f32.mrb[0].mxu0
    %v3302 = vadd.f32 %v2940, %v3301
    %v3303 = vpop.f32.mrb[0].mxu0
    %v3304 = vadd.f32 %v2944, %v3303
    %v3305 = vpop.f32.mrb[0].mxu0
    %v3306 = vpop.f32.mrb[0].mxu0
    %3307 = vdwg.mxu0
    %3308 = vmatprep.subr.bf16.mxu0 %v3172
    %3309 = vmatpush1.bf16.msra.mxu0 %v3171
    %3310 = vmatprep.subr.bf16.mxu0 %v3174
    %3311 = vmatpush1.bf16.msra.mxu0 %v3173
    %3312 = vmatprep.subr.bf16.mxu0 %v3176
    %3313 = vmatpush1.bf16.msra.mxu0 %v3175
    %3314 = vmatprep.subr.bf16.mxu0 %v3178
    %3315 = vmatpush1.bf16.msra.mxu0 %v3177
    %3316 = vmatprep.subr.bf16.mxu0 %v3180
    %3317 = vmatpush1.bf16.msra.mxu0 %v3179
    %3318 = vmatprep.subr.bf16.mxu0 %v3182
    %3319 = vmatpush1.bf16.msra.mxu0 %v3181
    %3320 = vmatprep.subr.bf16.mxu0 %v3184
    %3321 = vmatpush1.bf16.msra.mxu0 %v3183
    %3322 = vmatprep.subr.bf16.mxu0 %v3186
    %3323 = vmatpush1.bf16.msra.mxu0 %v3185
    %3324 = vmatprep.subr.bf16.mxu0 %v3188
    %3325 = vmatpush1.bf16.msra.mxu0 %v3187
    %3326 = vmatprep.subr.bf16.mxu0 %v3190
    %3327 = vmatpush1.bf16.msra.mxu0 %v3189
    %3328 = vmatprep.subr.bf16.mxu0 %v3192
    %3329 = vmatpush1.bf16.msra.mxu0 %v3191
    %3330 = vmatprep.subr.bf16.mxu0 %v3194
    %3331 = vmatpush1.bf16.msra.mxu0 %v3193
    %3332 = vmatprep.subr.bf16.mxu0 %v3196
    %3333 = vmatpush1.bf16.msra.mxu0 %v3195
    %3334 = vmatprep.subr.bf16.mxu0 %v3198
    %3335 = vmatpush1.bf16.msra.mxu0 %v3197
    %3336 = vmatprep.subr.bf16.mxu0 %v3200
    %3337 = vmatpush1.bf16.msra.mxu0 %v3199
    %3338 = vmatprep.subr.bf16.mxu0 %v3202
    %3339 = vmatpush1.bf16.msra.mxu0 %v3201
    %3340 = vmatprep.mubr.bf16.mxu0 %v2935
    %3341 = vmatmul.mubr.bf16.gmra.mrb[0].mxu0 %v2934
    %v3342 = vpop.f32.mrb[0].mxu0
    %v3343 = vadd.f32 %v3302, %v3342
    %v3344 = vpop.f32.mrb[0].mxu0
    %v3345 = vadd.f32 %v3304, %v3344
    %v3346 = vpop.f32.mrb[0].mxu0
    %v3347 = vpop.f32.mrb[0].mxu0
    %3348 = vdwg.mxu0
    %v3349 = vmax.f32 %v3343, 0.0
    %v3350 = vmax.f32 %v3345, 0.0
    %v3351 = vld [vmem:[%s4] sm:$0xff]
    %v3352 = vld [vmem:[%s4 + $0x8] sm:$0xff]
    %v3353 = vld [vmem:[%s4 + $0x10] sm:$0xff]
    %v3354 = vld [vmem:[%s4 + $0x18] sm:$0xff]
    %v3355 = vld [vmem:[%s4 + $0x20] sm:$0xff]
    %v3356 = vld [vmem:[%s4 + $0x28] sm:$0xff]
    %v3357 = vld [vmem:[%s4 + $0x30] sm:$0xff]
    %v3358 = vld [vmem:[%s4 + $0x38] sm:$0xff]
    %v3359 = vld [vmem:[%s4 + $0x40] sm:$0xff]
    %v3360 = vld [vmem:[%s4 + $0x48] sm:$0xff]
    %v3361 = vld [vmem:[%s4 + $0x50] sm:$0xff]
    %v3362 = vld [vmem:[%s4 + $0x58] sm:$0xff]
    %v3363 = vld [vmem:[%s4 + $0x60] sm:$0xff]
    %v3364 = vld [vmem:[%s4 + $0x68] sm:$0xff]
    %v3365 = vld [vmem:[%s4 + $0x70] sm:$0xff]
    %v3366 = vld [vmem:[%s4 + $0x78] sm:$0xff]
    %v3367 = vld [vmem:[%s4 + $0x80] sm:$0xff]
    %v3368 = vld [vmem:[%s4 + $0x88] sm:$0xff]
    %v3369 = vld [vmem:[%s4 + $0x90] sm:$0xff]
    %v3370 = vld [vmem:[%s4 + $0x98] sm:$0xff]
    %v3371 = vld [vmem:[%s4 + $0xa0] sm:$0xff]
    %v3372 = vld [vmem:[%s4 + $0xa8] sm:$0xff]
    %v3373 = vld [vmem:[%s4 + $0xb0] sm:$0xff]
    %v3374 = vld [vmem:[%s4 + $0xb8] sm:$0xff]
    %v3375 = vld [vmem:[%s4 + $0xc0] sm:$0xff]
    %v3376 = vld [vmem:[%s4 + $0xc8] sm:$0xff]
    %v3377 = vld [vmem:[%s4 + $0xd0] sm:$0xff]
    %v3378 = vld [vmem:[%s4 + $0xd8] sm:$0xff]
    %v3379 = vld [vmem:[%s4 + $0xe0] sm:$0xff]
    %v3380 = vld [vmem:[%s4 + $0xe8] sm:$0xff]
    %v3381 = vld [vmem:[%s4 + $0xf0] sm:$0xff]
    %v3382 = vld [vmem:[%s4 + $0xf8] sm:$0xff]
    %v3383 = vld [vmem:[%s14] sm:$0x3]
    %v3384 = vpack.c.bf16 %v3349, %v3349
    %v3385 = vpack.c.bf16 %v3350, %v3350
    %v3387 = vlaneseq
    %v3388 = vshrl.u32 %v3387, 7
    %v3389 = vsub.s32 0, %v3388
    %v3390 = vrot.slane %v3383, %v3389
    %v3391 = vlaneseq
    %v3392 = vshrl.u32 %v3391, 7
    %v3393 = vsub.s32 1, %v3392
    %v3394 = vrot.slane %v3383, %v3393
    %v3429 = vunpack.c.l.b16 %v3351
    %v3430 = vunpack.c.h.b16 %v3351
    %v3431 = vunpack.c.l.b16 %v3352
    %v3432 = vunpack.c.h.b16 %v3352
    %v3433 = vunpack.c.l.b16 %v3353
    %v3434 = vunpack.c.h.b16 %v3353
    %v3435 = vunpack.c.l.b16 %v3354
    %v3436 = vunpack.c.h.b16 %v3354
    %v3437 = vunpack.c.l.b16 %v3355
    %v3438 = vunpack.c.h.b16 %v3355
    %v3439 = vunpack.c.l.b16 %v3356
    %v3440 = vunpack.c.h.b16 %v3356
    %v3441 = vunpack.c.l.b16 %v3357
    %v3442 = vunpack.c.h.b16 %v3357
    %v3443 = vunpack.c.l.b16 %v3358
    %v3444 = vunpack.c.h.b16 %v3358
    %v3445 = vunpack.c.l.b16 %v3359
    %v3446 = vunpack.c.h.b16 %v3359
    %v3447 = vunpack.c.l.b16 %v3360
    %v3448 = vunpack.c.h.b16 %v3360
    %v3449 = vunpack.c.l.b16 %v3361
    %v3450 = vunpack.c.h.b16 %v3361
    %v3451 = vunpack.c.l.b16 %v3362
    %v3452 = vunpack.c.h.b16 %v3362
    %v3453 = vunpack.c.l.b16 %v3363
    %v3454 = vunpack.c.h.b16 %v3363
    %v3455 = vunpack.c.l.b16 %v3364
    %v3456 = vunpack.c.h.b16 %v3364
    %v3457 = vunpack.c.l.b16 %v3365
    %v3458 = vunpack.c.h.b16 %v3365
    %v3459 = vunpack.c.l.b16 %v3366
    %v3460 = vunpack.c.h.b16 %v3366
    %v3461 = vunpack.c.l.b16 %v3367
    %v3462 = vunpack.c.h.b16 %v3367
    %v3463 = vunpack.c.l.b16 %v3368
    %v3464 = vunpack.c.h.b16 %v3368
    %v3465 = vunpack.c.l.b16 %v3369
    %v3466 = vunpack.c.h.b16 %v3369
    %v3467 = vunpack.c.l.b16 %v3370
    %v3468 = vunpack.c.h.b16 %v3370
    %v3469 = vunpack.c.l.b16 %v3371
    %v3470 = vunpack.c.h.b16 %v3371
    %v3471 = vunpack.c.l.b16 %v3372
    %v3472 = vunpack.c.h.b16 %v3372
    %v3473 = vunpack.c.l.b16 %v3373
    %v3474 = vunpack.c.h.b16 %v3373
    %v3475 = vunpack.c.l.b16 %v3374
    %v3476 = vunpack.c.h.b16 %v3374
    %v3477 = vunpack.c.l.b16 %v3375
    %v3478 = vunpack.c.h.b16 %v3375
    %v3479 = vunpack.c.l.b16 %v3376
    %v3480 = vunpack.c.h.b16 %v3376
    %v3481 = vunpack.c.l.b16 %v3377
    %v3482 = vunpack.c.h.b16 %v3377
    %v3483 = vunpack.c.l.b16 %v3378
    %v3484 = vunpack.c.h.b16 %v3378
    %v3485 = vunpack.c.l.b16 %v3379
    %v3486 = vunpack.c.h.b16 %v3379
    %v3487 = vunpack.c.l.b16 %v3380
    %v3488 = vunpack.c.h.b16 %v3380
    %v3489 = vunpack.c.l.b16 %v3381
    %v3490 = vunpack.c.h.b16 %v3381
    %v3491 = vunpack.c.l.b16 %v3382
    %v3492 = vunpack.c.h.b16 %v3382
    %v3493 = vpack.c.b16 %v3431, %v3429
    %v3494 = vpack.c.b16 %v3432, %v3430
    %v3495 = vpack.c.b16 %v3435, %v3433
    %v3496 = vpack.c.b16 %v3436, %v3434
    %v3497 = vpack.c.b16 %v3439, %v3437
    %v3498 = vpack.c.b16 %v3440, %v3438
    %v3499 = vpack.c.b16 %v3443, %v3441
    %v3500 = vpack.c.b16 %v3444, %v3442
    %v3501 = vpack.c.b16 %v3447, %v3445
    %v3502 = vpack.c.b16 %v3448, %v3446
    %v3503 = vpack.c.b16 %v3451, %v3449
    %v3504 = vpack.c.b16 %v3452, %v3450
    %v3505 = vpack.c.b16 %v3455, %v3453
    %v3506 = vpack.c.b16 %v3456, %v3454
    %v3507 = vpack.c.b16 %v3459, %v3457
    %v3508 = vpack.c.b16 %v3460, %v3458
    %v3509 = vpack.c.b16 %v3463, %v3461
    %v3510 = vpack.c.b16 %v3464, %v3462
    %v3511 = vpack.c.b16 %v3467, %v3465
    %v3512 = vpack.c.b16 %v3468, %v3466
    %v3513 = vpack.c.b16 %v3471, %v3469
    %v3514 = vpack.c.b16 %v3472, %v3470
    %v3515 = vpack.c.b16 %v3475, %v3473
    %v3516 = vpack.c.b16 %v3476, %v3474
    %v3517 = vpack.c.b16 %v3479, %v3477
    %v3518 = vpack.c.b16 %v3480, %v3478
    %v3519 = vpack.c.b16 %v3483, %v3481
    %v3520 = vpack.c.b16 %v3484, %v3482
    %v3521 = vpack.c.b16 %v3487, %v3485
    %v3522 = vpack.c.b16 %v3488, %v3486
    %v3523 = vpack.c.b16 %v3491, %v3489
    %v3524 = vpack.c.b16 %v3492, %v3490
    %3557 = vmatprep.subr.bf16.mxu0 %v3494
    %3558 = vmatpush1.bf16.msra.mxu0 %v3493
    %3559 = vmatprep.subr.bf16.mxu0 %v3496
    %3560 = vmatpush1.bf16.msra.mxu0 %v3495
    %3561 = vmatprep.subr.bf16.mxu0 %v3498
    %3562 = vmatpush1.bf16.msra.mxu0 %v3497
    %3563 = vmatprep.subr.bf16.mxu0 %v3500
    %3564 = vmatpush1.bf16.msra.mxu0 %v3499
    %3565 = vmatprep.subr.bf16.mxu0 %v3502
    %3566 = vmatpush1.bf16.msra.mxu0 %v3501
    %3567 = vmatprep.subr.bf16.mxu0 %v3504
    %3568 = vmatpush1.bf16.msra.mxu0 %v3503
    %3569 = vmatprep.subr.bf16.mxu0 %v3506
    %3570 = vmatpush1.bf16.msra.mxu0 %v3505
    %3571 = vmatprep.subr.bf16.mxu0 %v3508
    %3572 = vmatpush1.bf16.msra.mxu0 %v3507
    %3573 = vmatprep.subr.bf16.mxu0 %v3510
    %3574 = vmatpush1.bf16.msra.mxu0 %v3509
    %3575 = vmatprep.subr.bf16.mxu0 %v3512
    %3576 = vmatpush1.bf16.msra.mxu0 %v3511
    %3577 = vmatprep.subr.bf16.mxu0 %v3514
    %3578 = vmatpush1.bf16.msra.mxu0 %v3513
    %3579 = vmatprep.subr.bf16.mxu0 %v3516
    %3580 = vmatpush1.bf16.msra.mxu0 %v3515
    %3581 = vmatprep.subr.bf16.mxu0 %v3518
    %3582 = vmatpush1.bf16.msra.mxu0 %v3517
    %3583 = vmatprep.subr.bf16.mxu0 %v3520
    %3584 = vmatpush1.bf16.msra.mxu0 %v3519
    %3585 = vmatprep.subr.bf16.mxu0 %v3522
    %3586 = vmatpush1.bf16.msra.mxu0 %v3521
    %3587 = vmatprep.subr.bf16.mxu0 %v3524
    %3588 = vmatpush1.bf16.msra.mxu0 %v3523
    %3589 = vmatprep.mubr.bf16.mxu0 %v3385
    %3590 = vmatmul.mubr.bf16.gmra.mrb[0].mxu0 %v3384
    %v3591 = vpop.f32.mrb[0].mxu0
    %v3592 = vadd.f32 %v3390, %v3591
    %v3593 = vpop.f32.mrb[0].mxu0
    %v3594 = vadd.f32 %v3394, %v3593
    %v3595 = vpop.f32.mrb[0].mxu0
    %v3596 = vpop.f32.mrb[0].mxu0
    %3597 = vdwg.mxu0
    %v3598 = vmax.f32 %v3592, 0.0
    %v3599 = vmax.f32 %v3594, 0.0
    %v3600 = vld [vmem:[#allocation7] sm:$0xf]
    %v3601 = vld [vmem:[#allocation7 + $0x4] sm:$0xf]
    %v3602 = vld [vmem:[#allocation7 + $0x8] sm:$0xf]
    %v3603 = vld [vmem:[#allocation7 + $0xc] sm:$0xf]
    %v3604 = vld [vmem:[#allocation7 + $0x10] sm:$0xf]
    %v3605 = vld [vmem:[#allocation7 + $0x14] sm:$0xf]
    %v3606 = vld [vmem:[#allocation7 + $0x18] sm:$0xf]
    %v3607 = vld [vmem:[#allocation7 + $0x1c] sm:$0xf]
    %v3608 = vld [vmem:[#allocation7 + $0x20] sm:$0xf]
    %v3609 = vld [vmem:[#allocation7 + $0x24] sm:$0xf]
    %v3610 = vld [vmem:[#allocation7 + $0x28] sm:$0xf]
    %v3611 = vld [vmem:[#allocation7 + $0x2c] sm:$0xf]
    %v3612 = vld [vmem:[#allocation7 + $0x30] sm:$0xf]
    %v3613 = vld [vmem:[#allocation7 + $0x34] sm:$0xf]
    %v3614 = vld [vmem:[#allocation7 + $0x38] sm:$0xf]
    %v3615 = vld [vmem:[#allocation7 + $0x3c] sm:$0xf]
    %v3616 = vld [vmem:[#allocation7 + $0x40] sm:$0xf]
    %v3617 = vld [vmem:[#allocation7 + $0x44] sm:$0xf]
    %v3618 = vld [vmem:[#allocation7 + $0x48] sm:$0xf]
    %v3619 = vld [vmem:[#allocation7 + $0x4c] sm:$0xf]
    %v3620 = vld [vmem:[#allocation7 + $0x50] sm:$0xf]
    %v3621 = vld [vmem:[#allocation7 + $0x54] sm:$0xf]
    %v3622 = vld [vmem:[#allocation7 + $0x58] sm:$0xf]
    %v3623 = vld [vmem:[#allocation7 + $0x5c] sm:$0xf]
    %v3624 = vld [vmem:[#allocation7 + $0x60] sm:$0xf]
    %v3625 = vld [vmem:[#allocation7 + $0x64] sm:$0xf]
    %v3626 = vld [vmem:[#allocation7 + $0x68] sm:$0xf]
    %v3627 = vld [vmem:[#allocation7 + $0x6c] sm:$0xf]
    %v3628 = vld [vmem:[#allocation7 + $0x70] sm:$0xf]
    %v3629 = vld [vmem:[#allocation7 + $0x74] sm:$0xf]
    %v3630 = vld [vmem:[#allocation7 + $0x78] sm:$0xf]
    %v3631 = vld [vmem:[#allocation7 + $0x7c] sm:$0xf]
    %v3632 = vld [vmem:[%s15] sm:$0x1]
    %v3633 = vpack.c.bf16 %v3598, %v3598
    %v3634 = vpack.c.bf16 %v3599, %v3599
    %v3636 = vlaneseq
    %v3637 = vshrl.u32 %v3636, 7
    %v3638 = vsub.s32 0, %v3637
    %v3639 = vrot.slane %v3632, %v3638
    %v3673 = vunpack.c.l.b16 %v3600
    %v3674 = vunpack.c.l.b16 %v3601
    %v3675 = vunpack.c.l.b16 %v3602
    %v3676 = vunpack.c.l.b16 %v3603
    %v3677 = vunpack.c.l.b16 %v3604
    %v3678 = vunpack.c.l.b16 %v3605
    %v3679 = vunpack.c.l.b16 %v3606
    %v3680 = vunpack.c.l.b16 %v3607
    %v3681 = vunpack.c.l.b16 %v3608
    %v3682 = vunpack.c.l.b16 %v3609
    %v3683 = vunpack.c.l.b16 %v3610
    %v3684 = vunpack.c.l.b16 %v3611
    %v3685 = vunpack.c.l.b16 %v3612
    %v3686 = vunpack.c.l.b16 %v3613
    %v3687 = vunpack.c.l.b16 %v3614
    %v3688 = vunpack.c.l.b16 %v3615
    %v3689 = vunpack.c.l.b16 %v3616
    %v3690 = vunpack.c.l.b16 %v3617
    %v3691 = vunpack.c.l.b16 %v3618
    %v3692 = vunpack.c.l.b16 %v3619
    %v3693 = vunpack.c.l.b16 %v3620
    %v3694 = vunpack.c.l.b16 %v3621
    %v3695 = vunpack.c.l.b16 %v3622
    %v3696 = vunpack.c.l.b16 %v3623
    %v3697 = vunpack.c.l.b16 %v3624
    %v3698 = vunpack.c.l.b16 %v3625
    %v3699 = vunpack.c.l.b16 %v3626
    %v3700 = vunpack.c.l.b16 %v3627
    %v3701 = vunpack.c.l.b16 %v3628
    %v3702 = vunpack.c.l.b16 %v3629
    %v3703 = vunpack.c.l.b16 %v3630
    %v3704 = vunpack.c.l.b16 %v3631
    %v3705 = vpack.c.b16 %v3674, %v3673
    %v3706 = vpack.c.b16 %v3676, %v3675
    %v3707 = vpack.c.b16 %v3678, %v3677
    %v3708 = vpack.c.b16 %v3680, %v3679
    %v3709 = vpack.c.b16 %v3682, %v3681
    %v3710 = vpack.c.b16 %v3684, %v3683
    %v3711 = vpack.c.b16 %v3686, %v3685
    %v3712 = vpack.c.b16 %v3688, %v3687
    %v3713 = vpack.c.b16 %v3690, %v3689
    %v3714 = vpack.c.b16 %v3692, %v3691
    %v3715 = vpack.c.b16 %v3694, %v3693
    %v3716 = vpack.c.b16 %v3696, %v3695
    %v3717 = vpack.c.b16 %v3698, %v3697
    %v3718 = vpack.c.b16 %v3700, %v3699
    %v3719 = vpack.c.b16 %v3702, %v3701
    %v3720 = vpack.c.b16 %v3704, %v3703
    %3737 = vmatprep.subr.bf16.mxu0 0
    %3738 = vmatpush1.bf16.msra.mxu0 %v3705
    %3739 = vmatprep.subr.bf16.mxu0 0
    %3740 = vmatpush1.bf16.msra.mxu0 %v3706
    %3741 = vmatprep.subr.bf16.mxu0 0
    %3742 = vmatpush1.bf16.msra.mxu0 %v3707
    %3743 = vmatprep.subr.bf16.mxu0 0
    %3744 = vmatpush1.bf16.msra.mxu0 %v3708
    %3745 = vmatprep.subr.bf16.mxu0 0
    %3746 = vmatpush1.bf16.msra.mxu0 %v3709
    %3747 = vmatprep.subr.bf16.mxu0 0
    %3748 = vmatpush1.bf16.msra.mxu0 %v3710
    %3749 = vmatprep.subr.bf16.mxu0 0
    %3750 = vmatpush1.bf16.msra.mxu0 %v3711
    %3751 = vmatprep.subr.bf16.mxu0 0
    %3752 = vmatpush1.bf16.msra.mxu0 %v3712
    %3753 = vmatprep.subr.bf16.mxu0 0
    %3754 = vmatpush1.bf16.msra.mxu0 %v3713
    %3755 = vmatprep.subr.bf16.mxu0 0
    %3756 = vmatpush1.bf16.msra.mxu0 %v3714
    %3757 = vmatprep.subr.bf16.mxu0 0
    %3758 = vmatpush1.bf16.msra.mxu0 %v3715
    %3759 = vmatprep.subr.bf16.mxu0 0
    %3760 = vmatpush1.bf16.msra.mxu0 %v3716
    %3761 = vmatprep.subr.bf16.mxu0 0
    %3762 = vmatpush1.bf16.msra.mxu0 %v3717
    %3763 = vmatprep.subr.bf16.mxu0 0
    %3764 = vmatpush1.bf16.msra.mxu0 %v3718
    %3765 = vmatprep.subr.bf16.mxu0 0
    %3766 = vmatpush1.bf16.msra.mxu0 %v3719
    %3767 = vmatprep.subr.bf16.mxu0 0
    %3768 = vmatpush1.bf16.msra.mxu0 %v3720
    %3769 = vmatprep.mubr.bf16.mxu0 %v3634
    %3770 = vmatmul.mubr.bf16.gmra.mrb[0].mxu0 %v3633
    %v3771 = vpop.f32.mrb[0].mxu0
    %v3772 = vadd.f32 %v3639, %v3771
    %v3773 = vpop.f32.mrb[0].mxu0
    %v3774 = vpop.f32.mrb[0].mxu0
    %v3775 = vpop.f32.mrb[0].mxu0
    %3776 = vdwg.mxu0
    %v3777 = vmax.f32 %v3772, 0.0
    %3778 = vst [vmem:[%s21] sm:$0xff] %v3777
    %v3779 = vld [vmem:[#allocation9] sm:$0xff]
    %v3780 = vld [vmem:[#allocation9 + $0x8] sm:$0xff]
    %v3781 = vld [vmem:[#allocation9 + $0x10] sm:$0xff]
    %v3782 = vld [vmem:[#allocation9 + $0x18] sm:$0xff]
    %v3783 = vld [vmem:[#allocation9 + $0x20] sm:$0xff]
    %v3784 = vld [vmem:[#allocation9 + $0x28] sm:$0xff]
    %v3785 = vld [vmem:[#allocation9 + $0x30] sm:$0xff]
    %v3786 = vld [vmem:[#allocation9 + $0x38] sm:$0xff]
    %v3787 = vld [vmem:[#allocation9 + $0x40] sm:$0xff]
    %v3788 = vld [vmem:[#allocation9 + $0x48] sm:$0xff]
    %v3789 = vld [vmem:[#allocation9 + $0x50] sm:$0xff]
    %v3790 = vld [vmem:[#allocation9 + $0x58] sm:$0xff]
    %v3791 = vld [vmem:[#allocation9 + $0x60] sm:$0xff]
    %v3792 = vld [vmem:[#allocation9 + $0x68] sm:$0xff]
    %v3793 = vld [vmem:[#allocation9 + $0x70] sm:$0xff]
    %v3794 = vld [vmem:[#allocation9 + $0x78] sm:$0xff]
    %v3795 = vld [vmem:[%s16] sm:$0x3]
    %v3796 = vpack.c.bf16 %v3777, %v3777
    %v3798 = vlaneseq
    %v3799 = vshrl.u32 %v3798, 7
    %v3800 = vsub.s32 0, %v3799
    %v3801 = vrot.slane %v3795, %v3800
    %v3802 = vlaneseq
    %v3803 = vshrl.u32 %v3802, 7
    %v3804 = vsub.s32 1, %v3803
    %v3805 = vrot.slane %v3795, %v3804
    %v3824 = vunpack.c.l.b16 %v3779
    %v3825 = vunpack.c.h.b16 %v3779
    %v3826 = vunpack.c.l.b16 %v3780
    %v3827 = vunpack.c.h.b16 %v3780
    %v3828 = vunpack.c.l.b16 %v3781
    %v3829 = vunpack.c.h.b16 %v3781
    %v3830 = vunpack.c.l.b16 %v3782
    %v3831 = vunpack.c.h.b16 %v3782
    %v3832 = vunpack.c.l.b16 %v3783
    %v3833 = vunpack.c.h.b16 %v3783
    %v3834 = vunpack.c.l.b16 %v3784
    %v3835 = vunpack.c.h.b16 %v3784
    %v3836 = vunpack.c.l.b16 %v3785
    %v3837 = vunpack.c.h.b16 %v3785
    %v3838 = vunpack.c.l.b16 %v3786
    %v3839 = vunpack.c.h.b16 %v3786
    %v3840 = vunpack.c.l.b16 %v3787
    %v3841 = vunpack.c.h.b16 %v3787
    %v3842 = vunpack.c.l.b16 %v3788
    %v3843 = vunpack.c.h.b16 %v3788
    %v3844 = vunpack.c.l.b16 %v3789
    %v3845 = vunpack.c.h.b16 %v3789
    %v3846 = vunpack.c.l.b16 %v3790
    %v3847 = vunpack.c.h.b16 %v3790
    %v3848 = vunpack.c.l.b16 %v3791
    %v3849 = vunpack.c.h.b16 %v3791
    %v3850 = vunpack.c.l.b16 %v3792
    %v3851 = vunpack.c.h.b16 %v3792
    %v3852 = vunpack.c.l.b16 %v3793
    %v3853 = vunpack.c.h.b16 %v3793
    %v3854 = vunpack.c.l.b16 %v3794
    %v3855 = vunpack.c.h.b16 %v3794
    %v3856 = vpack.c.b16 %v3826, %v3824
    %v3857 = vpack.c.b16 %v3827, %v3825
    %v3858 = vpack.c.b16 %v3830, %v3828
    %v3859 = vpack.c.b16 %v3831, %v3829
    %v3860 = vpack.c.b16 %v3834, %v3832
    %v3861 = vpack.c.b16 %v3835, %v3833
    %v3862 = vpack.c.b16 %v3838, %v3836
    %v3863 = vpack.c.b16 %v3839, %v3837
    %v3864 = vpack.c.b16 %v3842, %v3840
    %v3865 = vpack.c.b16 %v3843, %v3841
    %v3866 = vpack.c.b16 %v3846, %v3844
    %v3867 = vpack.c.b16 %v3847, %v3845
    %v3868 = vpack.c.b16 %v3850, %v3848
    %v3869 = vpack.c.b16 %v3851, %v3849
    %v3870 = vpack.c.b16 %v3854, %v3852
    %v3871 = vpack.c.b16 %v3855, %v3853
    %3888 = vmatprep.subr.bf16.mxu0 %v3857
    %3889 = vmatpush1.bf16.msra.mxu0 %v3856
    %3890 = vmatprep.subr.bf16.mxu0 %v3859
    %3891 = vmatpush1.bf16.msra.mxu0 %v3858
    %3892 = vmatprep.subr.bf16.mxu0 %v3861
    %3893 = vmatpush1.bf16.msra.mxu0 %v3860
    %3894 = vmatprep.subr.bf16.mxu0 %v3863
    %3895 = vmatpush1.bf16.msra.mxu0 %v3862
    %3896 = vmatprep.subr.bf16.mxu0 %v3865
    %3897 = vmatpush1.bf16.msra.mxu0 %v3864
    %3898 = vmatprep.subr.bf16.mxu0 %v3867
    %3899 = vmatpush1.bf16.msra.mxu0 %v3866
    %3900 = vmatprep.subr.bf16.mxu0 %v3869
    %3901 = vmatpush1.bf16.msra.mxu0 %v3868
    %3902 = vmatprep.subr.bf16.mxu0 %v3871
    %3903 = vmatpush1.bf16.msra.mxu0 %v3870
    %3904 = vmatprep.subr.bf16.mxu0 0
    %3905 = vmatpush1.bf16.msra.mxu0 0
    %3906 = vmatprep.subr.bf16.mxu0 0
    %3907 = vmatpush1.bf16.msra.mxu0 0
    %3908 = vmatprep.subr.bf16.mxu0 0
    %3909 = vmatpush1.bf16.msra.mxu0 0
    %3910 = vmatprep.subr.bf16.mxu0 0
    %3911 = vmatpush1.bf16.msra.mxu0 0
    %3912 = vmatprep.subr.bf16.mxu0 0
    %3913 = vmatpush1.bf16.msra.mxu0 0
    %3914 = vmatprep.subr.bf16.mxu0 0
    %3915 = vmatpush1.bf16.msra.mxu0 0
    %3916 = vmatprep.subr.bf16.mxu0 0
    %3917 = vmatpush1.bf16.msra.mxu0 0
    %3918 = vmatprep.subr.bf16.mxu0 0
    %3919 = vmatpush1.bf16.msra.mxu0 0
    %3920 = vmatprep.mubr.bf16.mxu0 0
    %3921 = vmatmul.mubr.bf16.gmra.mrb[0].mxu0 %v3796
    %v3922 = vpop.f32.mrb[0].mxu0
    %v3923 = vadd.f32 %v3801, %v3922
    %v3924 = vpop.f32.mrb[0].mxu0
    %v3925 = vadd.f32 %v3805, %v3924
    %v3926 = vpop.f32.mrb[0].mxu0
    %v3927 = vpop.f32.mrb[0].mxu0
    %3928 = vdwg.mxu0
    %v3929 = vmax.f32 %v3923, 0.0
    %v3930 = vmax.f32 %v3925, 0.0
    %v3931 = vld [vmem:[#allocation10] sm:$0xff]
    %v3932 = vld [vmem:[#allocation10 + $0x8] sm:$0xff]
    %v3933 = vld [vmem:[#allocation10 + $0x10] sm:$0xff]
    %v3934 = vld [vmem:[#allocation10 + $0x18] sm:$0xff]
    %v3935 = vld [vmem:[#allocation10 + $0x20] sm:$0xff]
    %v3936 = vld [vmem:[#allocation10 + $0x28] sm:$0xff]
    %v3937 = vld [vmem:[#allocation10 + $0x30] sm:$0xff]
    %v3938 = vld [vmem:[#allocation10 + $0x38] sm:$0xff]
    %v3939 = vld [vmem:[#allocation10 + $0x40] sm:$0xff]
    %v3940 = vld [vmem:[#allocation10 + $0x48] sm:$0xff]
    %v3941 = vld [vmem:[#allocation10 + $0x50] sm:$0xff]
    %v3942 = vld [vmem:[#allocation10 + $0x58] sm:$0xff]
    %v3943 = vld [vmem:[#allocation10 + $0x60] sm:$0xff]
    %v3944 = vld [vmem:[#allocation10 + $0x68] sm:$0xff]
    %v3945 = vld [vmem:[#allocation10 + $0x70] sm:$0xff]
    %v3946 = vld [vmem:[#allocation10 + $0x78] sm:$0xff]
    %v3947 = vld [vmem:[#allocation10 + $0x80] sm:$0xff]
    %v3948 = vld [vmem:[#allocation10 + $0x88] sm:$0xff]
    %v3949 = vld [vmem:[#allocation10 + $0x90] sm:$0xff]
    %v3950 = vld [vmem:[#allocation10 + $0x98] sm:$0xff]
    %v3951 = vld [vmem:[#allocation10 + $0xa0] sm:$0xff]
    %v3952 = vld [vmem:[#allocation10 + $0xa8] sm:$0xff]
    %v3953 = vld [vmem:[#allocation10 + $0xb0] sm:$0xff]
    %v3954 = vld [vmem:[#allocation10 + $0xb8] sm:$0xff]
    %v3955 = vld [vmem:[#allocation10 + $0xc0] sm:$0xff]
    %v3956 = vld [vmem:[#allocation10 + $0xc8] sm:$0xff]
    %v3957 = vld [vmem:[#allocation10 + $0xd0] sm:$0xff]
    %v3958 = vld [vmem:[#allocation10 + $0xd8] sm:$0xff]
    %v3959 = vld [vmem:[#allocation10 + $0xe0] sm:$0xff]
    %v3960 = vld [vmem:[#allocation10 + $0xe8] sm:$0xff]
    %v3961 = vld [vmem:[#allocation10 + $0xf0] sm:$0xff]
    %v3962 = vld [vmem:[#allocation10 + $0xf8] sm:$0xff]
    %v3963 = vld [vmem:[%s17] sm:$0x3]
    %v3964 = vpack.c.bf16 %v3929, %v3929
    %v3965 = vpack.c.bf16 %v3930, %v3930
    %v3967 = vlaneseq
    %v3968 = vshrl.u32 %v3967, 7
    %v3969 = vsub.s32 0, %v3968
    %v3970 = vrot.slane %v3963, %v3969
    %v3971 = vlaneseq
    %v3972 = vshrl.u32 %v3971, 7
    %v3973 = vsub.s32 1, %v3972
    %v3974 = vrot.slane %v3963, %v3973
    %v4009 = vunpack.c.l.b16 %v3931
    %v4010 = vunpack.c.h.b16 %v3931
    %v4011 = vunpack.c.l.b16 %v3932
    %v4012 = vunpack.c.h.b16 %v3932
    %v4013 = vunpack.c.l.b16 %v3933
    %v4014 = vunpack.c.h.b16 %v3933
    %v4015 = vunpack.c.l.b16 %v3934
    %v4016 = vunpack.c.h.b16 %v3934
    %v4017 = vunpack.c.l.b16 %v3935
    %v4018 = vunpack.c.h.b16 %v3935
    %v4019 = vunpack.c.l.b16 %v3936
    %v4020 = vunpack.c.h.b16 %v3936
    %v4021 = vunpack.c.l.b16 %v3937
    %v4022 = vunpack.c.h.b16 %v3937
    %v4023 = vunpack.c.l.b16 %v3938
    %v4024 = vunpack.c.h.b16 %v3938
    %v4025 = vunpack.c.l.b16 %v3939
    %v4026 = vunpack.c.h.b16 %v3939
    %v4027 = vunpack.c.l.b16 %v3940
    %v4028 = vunpack.c.h.b16 %v3940
    %v4029 = vunpack.c.l.b16 %v3941
    %v4030 = vunpack.c.h.b16 %v3941
    %v4031 = vunpack.c.l.b16 %v3942
    %v4032 = vunpack.c.h.b16 %v3942
    %v4033 = vunpack.c.l.b16 %v3943
    %v4034 = vunpack.c.h.b16 %v3943
    %v4035 = vunpack.c.l.b16 %v3944
    %v4036 = vunpack.c.h.b16 %v3944
    %v4037 = vunpack.c.l.b16 %v3945
    %v4038 = vunpack.c.h.b16 %v3945
    %v4039 = vunpack.c.l.b16 %v3946
    %v4040 = vunpack.c.h.b16 %v3946
    %v4041 = vunpack.c.l.b16 %v3947
    %v4042 = vunpack.c.h.b16 %v3947
    %v4043 = vunpack.c.l.b16 %v3948
    %v4044 = vunpack.c.h.b16 %v3948
    %v4045 = vunpack.c.l.b16 %v3949
    %v4046 = vunpack.c.h.b16 %v3949
    %v4047 = vunpack.c.l.b16 %v3950
    %v4048 = vunpack.c.h.b16 %v3950
    %v4049 = vunpack.c.l.b16 %v3951
    %v4050 = vunpack.c.h.b16 %v3951
    %v4051 = vunpack.c.l.b16 %v3952
    %v4052 = vunpack.c.h.b16 %v3952
    %v4053 = vunpack.c.l.b16 %v3953
    %v4054 = vunpack.c.h.b16 %v3953
    %v4055 = vunpack.c.l.b16 %v3954
    %v4056 = vunpack.c.h.b16 %v3954
    %v4057 = vunpack.c.l.b16 %v3955
    %v4058 = vunpack.c.h.b16 %v3955
    %v4059 = vunpack.c.l.b16 %v3956
    %v4060 = vunpack.c.h.b16 %v3956
    %v4061 = vunpack.c.l.b16 %v3957
    %v4062 = vunpack.c.h.b16 %v3957
    %v4063 = vunpack.c.l.b16 %v3958
    %v4064 = vunpack.c.h.b16 %v3958
    %v4065 = vunpack.c.l.b16 %v3959
    %v4066 = vunpack.c.h.b16 %v3959
    %v4067 = vunpack.c.l.b16 %v3960
    %v4068 = vunpack.c.h.b16 %v3960
    %v4069 = vunpack.c.l.b16 %v3961
    %v4070 = vunpack.c.h.b16 %v3961
    %v4071 = vunpack.c.l.b16 %v3962
    %v4072 = vunpack.c.h.b16 %v3962
    %v4073 = vpack.c.b16 %v4011, %v4009
    %v4074 = vpack.c.b16 %v4012, %v4010
    %v4075 = vpack.c.b16 %v4015, %v4013
    %v4076 = vpack.c.b16 %v4016, %v4014
    %v4077 = vpack.c.b16 %v4019, %v4017
    %v4078 = vpack.c.b16 %v4020, %v4018
    %v4079 = vpack.c.b16 %v4023, %v4021
    %v4080 = vpack.c.b16 %v4024, %v4022
    %v4081 = vpack.c.b16 %v4027, %v4025
    %v4082 = vpack.c.b16 %v4028, %v4026
    %v4083 = vpack.c.b16 %v4031, %v4029
    %v4084 = vpack.c.b16 %v4032, %v4030
    %v4085 = vpack.c.b16 %v4035, %v4033
    %v4086 = vpack.c.b16 %v4036, %v4034
    %v4087 = vpack.c.b16 %v4039, %v4037
    %v4088 = vpack.c.b16 %v4040, %v4038
    %v4089 = vpack.c.b16 %v4043, %v4041
    %v4090 = vpack.c.b16 %v4044, %v4042
    %v4091 = vpack.c.b16 %v4047, %v4045
    %v4092 = vpack.c.b16 %v4048, %v4046
    %v4093 = vpack.c.b16 %v4051, %v4049
    %v4094 = vpack.c.b16 %v4052, %v4050
    %v4095 = vpack.c.b16 %v4055, %v4053
    %v4096 = vpack.c.b16 %v4056, %v4054
    %v4097 = vpack.c.b16 %v4059, %v4057
    %v4098 = vpack.c.b16 %v4060, %v4058
    %v4099 = vpack.c.b16 %v4063, %v4061
    %v4100 = vpack.c.b16 %v4064, %v4062
    %v4101 = vpack.c.b16 %v4067, %v4065
    %v4102 = vpack.c.b16 %v4068, %v4066
    %v4103 = vpack.c.b16 %v4071, %v4069
    %v4104 = vpack.c.b16 %v4072, %v4070
    %4137 = vmatprep.subr.bf16.mxu0 %v4074
    %4138 = vmatpush1.bf16.msra.mxu0 %v4073
    %4139 = vmatprep.subr.bf16.mxu0 %v4076
    %4140 = vmatpush1.bf16.msra.mxu0 %v4075
    %4141 = vmatprep.subr.bf16.mxu0 %v4078
    %4142 = vmatpush1.bf16.msra.mxu0 %v4077
    %4143 = vmatprep.subr.bf16.mxu0 %v4080
    %4144 = vmatpush1.bf16.msra.mxu0 %v4079
    %4145 = vmatprep.subr.bf16.mxu0 %v4082
    %4146 = vmatpush1.bf16.msra.mxu0 %v4081
    %4147 = vmatprep.subr.bf16.mxu0 %v4084
    %4148 = vmatpush1.bf16.msra.mxu0 %v4083
    %4149 = vmatprep.subr.bf16.mxu0 %v4086
    %4150 = vmatpush1.bf16.msra.mxu0 %v4085
    %4151 = vmatprep.subr.bf16.mxu0 %v4088
    %4152 = vmatpush1.bf16.msra.mxu0 %v4087
    %4153 = vmatprep.subr.bf16.mxu0 %v4090
    %4154 = vmatpush1.bf16.msra.mxu0 %v4089
    %4155 = vmatprep.subr.bf16.mxu0 %v4092
    %4156 = vmatpush1.bf16.msra.mxu0 %v4091
    %4157 = vmatprep.subr.bf16.mxu0 %v4094
    %4158 = vmatpush1.bf16.msra.mxu0 %v4093
    %4159 = vmatprep.subr.bf16.mxu0 %v4096
    %4160 = vmatpush1.bf16.msra.mxu0 %v4095
    %4161 = vmatprep.subr.bf16.mxu0 %v4098
    %4162 = vmatpush1.bf16.msra.mxu0 %v4097
    %4163 = vmatprep.subr.bf16.mxu0 %v4100
    %4164 = vmatpush1.bf16.msra.mxu0 %v4099
    %4165 = vmatprep.subr.bf16.mxu0 %v4102
    %4166 = vmatpush1.bf16.msra.mxu0 %v4101
    %4167 = vmatprep.subr.bf16.mxu0 %v4104
    %4168 = vmatpush1.bf16.msra.mxu0 %v4103
    %4169 = vmatprep.mubr.bf16.mxu0 %v3965
    %4170 = vmatmul.mubr.bf16.gmra.mrb[0].mxu0 %v3964
    %v4171 = vpop.f32.mrb[0].mxu0
    %v4172 = vadd.f32 %v3970, %v4171
    %v4173 = vpop.f32.mrb[0].mxu0
    %v4174 = vadd.f32 %v3974, %v4173
    %v4175 = vpop.f32.mrb[0].mxu0
    %v4176 = vpop.f32.mrb[0].mxu0
    %4177 = vdwg.mxu0
    %v4178 = vmax.f32 %v4172, 0.0
    %v4179 = vmax.f32 %v4174, 0.0
    %v4180 = vld [vmem:[#allocation12] sm:$0xff]
    %v4181 = vld [vmem:[#allocation12 + $0x8] sm:$0xff]
    %v4182 = vld [vmem:[#allocation12 + $0x10] sm:$0xff]
    %v4183 = vld [vmem:[#allocation12 + $0x18] sm:$0xff]
    %v4184 = vld [vmem:[#allocation12 + $0x20] sm:$0xff]
    %v4185 = vld [vmem:[#allocation12 + $0x28] sm:$0xff]
    %v4186 = vld [vmem:[#allocation12 + $0x30] sm:$0xff]
    %v4187 = vld [vmem:[#allocation12 + $0x38] sm:$0xff]
    %v4188 = vld [vmem:[#allocation12 + $0x40] sm:$0xff]
    %v4189 = vld [vmem:[#allocation12 + $0x48] sm:$0xff]
    %v4190 = vld [vmem:[#allocation12 + $0x50] sm:$0xff]
    %v4191 = vld [vmem:[#allocation12 + $0x58] sm:$0xff]
    %v4192 = vld [vmem:[#allocation12 + $0x60] sm:$0xff]
    %v4193 = vld [vmem:[#allocation12 + $0x68] sm:$0xff]
    %v4194 = vld [vmem:[#allocation12 + $0x70] sm:$0xff]
    %v4195 = vld [vmem:[#allocation12 + $0x78] sm:$0xff]
    %v4196 = vld [vmem:[#allocation12 + $0x80] sm:$0xff]
    %v4197 = vld [vmem:[#allocation12 + $0x88] sm:$0xff]
    %v4198 = vld [vmem:[#allocation12 + $0x90] sm:$0xff]
    %v4199 = vld [vmem:[#allocation12 + $0x98] sm:$0xff]
    %v4200 = vld [vmem:[#allocation12 + $0xa0] sm:$0xff]
    %v4201 = vld [vmem:[#allocation12 + $0xa8] sm:$0xff]
    %v4202 = vld [vmem:[#allocation12 + $0xb0] sm:$0xff]
    %v4203 = vld [vmem:[#allocation12 + $0xb8] sm:$0xff]
    %v4204 = vld [vmem:[#allocation12 + $0xc0] sm:$0xff]
    %v4205 = vld [vmem:[#allocation12 + $0xc8] sm:$0xff]
    %v4206 = vld [vmem:[#allocation12 + $0xd0] sm:$0xff]
    %v4207 = vld [vmem:[#allocation12 + $0xd8] sm:$0xff]
    %v4208 = vld [vmem:[#allocation12 + $0xe0] sm:$0xff]
    %v4209 = vld [vmem:[#allocation12 + $0xe8] sm:$0xff]
    %v4210 = vld [vmem:[#allocation12 + $0xf0] sm:$0xff]
    %v4211 = vld [vmem:[#allocation12 + $0xf8] sm:$0xff]
    %v4212 = vld [vmem:[#allocation12 + $0x100] sm:$0xff]
    %v4213 = vld [vmem:[#allocation12 + $0x108] sm:$0xff]
    %v4214 = vld [vmem:[#allocation12 + $0x110] sm:$0xff]
    %v4215 = vld [vmem:[#allocation12 + $0x118] sm:$0xff]
    %v4216 = vld [vmem:[#allocation12 + $0x120] sm:$0xff]
    %v4217 = vld [vmem:[#allocation12 + $0x128] sm:$0xff]
    %v4218 = vld [vmem:[#allocation12 + $0x130] sm:$0xff]
    %v4219 = vld [vmem:[#allocation12 + $0x138] sm:$0xff]
    %v4220 = vld [vmem:[#allocation12 + $0x140] sm:$0xff]
    %v4221 = vld [vmem:[#allocation12 + $0x148] sm:$0xff]
    %v4222 = vld [vmem:[#allocation12 + $0x150] sm:$0xff]
    %v4223 = vld [vmem:[#allocation12 + $0x158] sm:$0xff]
    %v4224 = vld [vmem:[#allocation12 + $0x160] sm:$0xff]
    %v4225 = vld [vmem:[#allocation12 + $0x168] sm:$0xff]
    %v4226 = vld [vmem:[#allocation12 + $0x170] sm:$0xff]
    %v4227 = vld [vmem:[#allocation12 + $0x178] sm:$0xff]
    %v4228 = vld [vmem:[#allocation12 + $0x180] sm:$0xff]
    %v4229 = vld [vmem:[#allocation12 + $0x188] sm:$0xff]
    %v4230 = vld [vmem:[#allocation12 + $0x190] sm:$0xff]
    %v4231 = vld [vmem:[#allocation12 + $0x198] sm:$0xff]
    %v4232 = vld [vmem:[#allocation12 + $0x1a0] sm:$0xff]
    %v4233 = vld [vmem:[#allocation12 + $0x1a8] sm:$0xff]
    %v4234 = vld [vmem:[#allocation12 + $0x1b0] sm:$0xff]
    %v4235 = vld [vmem:[#allocation12 + $0x1b8] sm:$0xff]
    %v4236 = vld [vmem:[#allocation12 + $0x1c0] sm:$0xff]
    %v4237 = vld [vmem:[#allocation12 + $0x1c8] sm:$0xff]
    %v4238 = vld [vmem:[#allocation12 + $0x1d0] sm:$0xff]
    %v4239 = vld [vmem:[#allocation12 + $0x1d8] sm:$0xff]
    %v4240 = vld [vmem:[#allocation12 + $0x1e0] sm:$0xff]
    %v4241 = vld [vmem:[#allocation12 + $0x1e8] sm:$0xff]
    %v4242 = vld [vmem:[#allocation12 + $0x1f0] sm:$0xff]
    %v4243 = vld [vmem:[#allocation12 + $0x1f8] sm:$0xff]
    %v4244 = vld [vmem:[%s18] sm:$0xf]
    %v4245 = vpack.c.bf16 %v4178, %v4178
    %v4246 = vpack.c.bf16 %v4179, %v4179
    %v4248 = vlaneseq
    %v4249 = vshrl.u32 %v4248, 7
    %v4250 = vsub.s32 0, %v4249
    %v4251 = vrot.slane %v4244, %v4250
    %v4252 = vlaneseq
    %v4253 = vshrl.u32 %v4252, 7
    %v4254 = vsub.s32 1, %v4253
    %v4255 = vrot.slane %v4244, %v4254
    %v4256 = vlaneseq
    %v4257 = vshrl.u32 %v4256, 7
    %v4258 = vsub.s32 2, %v4257
    %v4259 = vrot.slane %v4244, %v4258
    %v4260 = vlaneseq
    %v4261 = vshrl.u32 %v4260, 7
    %v4262 = vsub.s32 3, %v4261
    %v4263 = vrot.slane %v4244, %v4262
    %v4332 = vunpack.c.l.b16 %v4180
    %v4333 = vunpack.c.h.b16 %v4180
    %v4334 = vunpack.c.l.b16 %v4181
    %v4335 = vunpack.c.h.b16 %v4181
    %v4336 = vunpack.c.l.b16 %v4182
    %v4337 = vunpack.c.h.b16 %v4182
    %v4338 = vunpack.c.l.b16 %v4183
    %v4339 = vunpack.c.h.b16 %v4183
    %v4340 = vunpack.c.l.b16 %v4184
    %v4341 = vunpack.c.h.b16 %v4184
    %v4342 = vunpack.c.l.b16 %v4185
    %v4343 = vunpack.c.h.b16 %v4185
    %v4344 = vunpack.c.l.b16 %v4186
    %v4345 = vunpack.c.h.b16 %v4186
    %v4346 = vunpack.c.l.b16 %v4187
    %v4347 = vunpack.c.h.b16 %v4187
    %v4348 = vunpack.c.l.b16 %v4188
    %v4349 = vunpack.c.h.b16 %v4188
    %v4350 = vunpack.c.l.b16 %v4189
    %v4351 = vunpack.c.h.b16 %v4189
    %v4352 = vunpack.c.l.b16 %v4190
    %v4353 = vunpack.c.h.b16 %v4190
    %v4354 = vunpack.c.l.b16 %v4191
    %v4355 = vunpack.c.h.b16 %v4191
    %v4356 = vunpack.c.l.b16 %v4192
    %v4357 = vunpack.c.h.b16 %v4192
    %v4358 = vunpack.c.l.b16 %v4193
    %v4359 = vunpack.c.h.b16 %v4193
    %v4360 = vunpack.c.l.b16 %v4194
    %v4361 = vunpack.c.h.b16 %v4194
    %v4362 = vunpack.c.l.b16 %v4195
    %v4363 = vunpack.c.h.b16 %v4195
    %v4364 = vunpack.c.l.b16 %v4196
    %v4365 = vunpack.c.h.b16 %v4196
    %v4366 = vunpack.c.l.b16 %v4197
    %v4367 = vunpack.c.h.b16 %v4197
    %v4368 = vunpack.c.l.b16 %v4198
    %v4369 = vunpack.c.h.b16 %v4198
    %v4370 = vunpack.c.l.b16 %v4199
    %v4371 = vunpack.c.h.b16 %v4199
    %v4372 = vunpack.c.l.b16 %v4200
    %v4373 = vunpack.c.h.b16 %v4200
    %v4374 = vunpack.c.l.b16 %v4201
    %v4375 = vunpack.c.h.b16 %v4201
    %v4376 = vunpack.c.l.b16 %v4202
    %v4377 = vunpack.c.h.b16 %v4202
    %v4378 = vunpack.c.l.b16 %v4203
    %v4379 = vunpack.c.h.b16 %v4203
    %v4380 = vunpack.c.l.b16 %v4204
    %v4381 = vunpack.c.h.b16 %v4204
    %v4382 = vunpack.c.l.b16 %v4205
    %v4383 = vunpack.c.h.b16 %v4205
    %v4384 = vunpack.c.l.b16 %v4206
    %v4385 = vunpack.c.h.b16 %v4206
    %v4386 = vunpack.c.l.b16 %v4207
    %v4387 = vunpack.c.h.b16 %v4207
    %v4388 = vunpack.c.l.b16 %v4208
    %v4389 = vunpack.c.h.b16 %v4208
    %v4390 = vunpack.c.l.b16 %v4209
    %v4391 = vunpack.c.h.b16 %v4209
    %v4392 = vunpack.c.l.b16 %v4210
    %v4393 = vunpack.c.h.b16 %v4210
    %v4394 = vunpack.c.l.b16 %v4211
    %v4395 = vunpack.c.h.b16 %v4211
    %v4396 = vunpack.c.l.b16 %v4212
    %v4397 = vunpack.c.h.b16 %v4212
    %v4398 = vunpack.c.l.b16 %v4213
    %v4399 = vunpack.c.h.b16 %v4213
    %v4400 = vunpack.c.l.b16 %v4214
    %v4401 = vunpack.c.h.b16 %v4214
    %v4402 = vunpack.c.l.b16 %v4215
    %v4403 = vunpack.c.h.b16 %v4215
    %v4404 = vunpack.c.l.b16 %v4216
    %v4405 = vunpack.c.h.b16 %v4216
    %v4406 = vunpack.c.l.b16 %v4217
    %v4407 = vunpack.c.h.b16 %v4217
    %v4408 = vunpack.c.l.b16 %v4218
    %v4409 = vunpack.c.h.b16 %v4218
    %v4410 = vunpack.c.l.b16 %v4219
    %v4411 = vunpack.c.h.b16 %v4219
    %v4412 = vunpack.c.l.b16 %v4220
    %v4413 = vunpack.c.h.b16 %v4220
    %v4414 = vunpack.c.l.b16 %v4221
    %v4415 = vunpack.c.h.b16 %v4221
    %v4416 = vunpack.c.l.b16 %v4222
    %v4417 = vunpack.c.h.b16 %v4222
    %v4418 = vunpack.c.l.b16 %v4223
    %v4419 = vunpack.c.h.b16 %v4223
    %v4420 = vunpack.c.l.b16 %v4224
    %v4421 = vunpack.c.h.b16 %v4224
    %v4422 = vunpack.c.l.b16 %v4225
    %v4423 = vunpack.c.h.b16 %v4225
    %v4424 = vunpack.c.l.b16 %v4226
    %v4425 = vunpack.c.h.b16 %v4226
    %v4426 = vunpack.c.l.b16 %v4227
    %v4427 = vunpack.c.h.b16 %v4227
    %v4428 = vunpack.c.l.b16 %v4228
    %v4429 = vunpack.c.h.b16 %v4228
    %v4430 = vunpack.c.l.b16 %v4229
    %v4431 = vunpack.c.h.b16 %v4229
    %v4432 = vunpack.c.l.b16 %v4230
    %v4433 = vunpack.c.h.b16 %v4230
    %v4434 = vunpack.c.l.b16 %v4231
    %v4435 = vunpack.c.h.b16 %v4231
    %v4436 = vunpack.c.l.b16 %v4232
    %v4437 = vunpack.c.h.b16 %v4232
    %v4438 = vunpack.c.l.b16 %v4233
    %v4439 = vunpack.c.h.b16 %v4233
    %v4440 = vunpack.c.l.b16 %v4234
    %v4441 = vunpack.c.h.b16 %v4234
    %v4442 = vunpack.c.l.b16 %v4235
    %v4443 = vunpack.c.h.b16 %v4235
    %v4444 = vunpack.c.l.b16 %v4236
    %v4445 = vunpack.c.h.b16 %v4236
    %v4446 = vunpack.c.l.b16 %v4237
    %v4447 = vunpack.c.h.b16 %v4237
    %v4448 = vunpack.c.l.b16 %v4238
    %v4449 = vunpack.c.h.b16 %v4238
    %v4450 = vunpack.c.l.b16 %v4239
    %v4451 = vunpack.c.h.b16 %v4239
    %v4452 = vunpack.c.l.b16 %v4240
    %v4453 = vunpack.c.h.b16 %v4240
    %v4454 = vunpack.c.l.b16 %v4241
    %v4455 = vunpack.c.h.b16 %v4241
    %v4456 = vunpack.c.l.b16 %v4242
    %v4457 = vunpack.c.h.b16 %v4242
    %v4458 = vunpack.c.l.b16 %v4243
    %v4459 = vunpack.c.h.b16 %v4243
    %v4460 = vpack.c.b16 %v4336, %v4332
    %v4461 = vpack.c.b16 %v4337, %v4333
    %v4462 = vpack.c.b16 %v4338, %v4334
    %v4463 = vpack.c.b16 %v4339, %v4335
    %v4464 = vpack.c.b16 %v4344, %v4340
    %v4465 = vpack.c.b16 %v4345, %v4341
    %v4466 = vpack.c.b16 %v4346, %v4342
    %v4467 = vpack.c.b16 %v4347, %v4343
    %v4468 = vpack.c.b16 %v4352, %v4348
    %v4469 = vpack.c.b16 %v4353, %v4349
    %v4470 = vpack.c.b16 %v4354, %v4350
    %v4471 = vpack.c.b16 %v4355, %v4351
    %v4472 = vpack.c.b16 %v4360, %v4356
    %v4473 = vpack.c.b16 %v4361, %v4357
    %v4474 = vpack.c.b16 %v4362, %v4358
    %v4475 = vpack.c.b16 %v4363, %v4359
    %v4476 = vpack.c.b16 %v4368, %v4364
    %v4477 = vpack.c.b16 %v4369, %v4365
    %v4478 = vpack.c.b16 %v4370, %v4366
    %v4479 = vpack.c.b16 %v4371, %v4367
    %v4480 = vpack.c.b16 %v4376, %v4372
    %v4481 = vpack.c.b16 %v4377, %v4373
    %v4482 = vpack.c.b16 %v4378, %v4374
    %v4483 = vpack.c.b16 %v4379, %v4375
    %v4484 = vpack.c.b16 %v4384, %v4380
    %v4485 = vpack.c.b16 %v4385, %v4381
    %v4486 = vpack.c.b16 %v4386, %v4382
    %v4487 = vpack.c.b16 %v4387, %v4383
    %v4488 = vpack.c.b16 %v4392, %v4388
    %v4489 = vpack.c.b16 %v4393, %v4389
    %v4490 = vpack.c.b16 %v4394, %v4390
    %v4491 = vpack.c.b16 %v4395, %v4391
    %v4492 = vpack.c.b16 %v4400, %v4396
    %v4493 = vpack.c.b16 %v4401, %v4397
    %v4494 = vpack.c.b16 %v4402, %v4398
    %v4495 = vpack.c.b16 %v4403, %v4399
    %v4496 = vpack.c.b16 %v4408, %v4404
    %v4497 = vpack.c.b16 %v4409, %v4405
    %v4498 = vpack.c.b16 %v4410, %v4406
    %v4499 = vpack.c.b16 %v4411, %v4407
    %v4500 = vpack.c.b16 %v4416, %v4412
    %v4501 = vpack.c.b16 %v4417, %v4413
    %v4502 = vpack.c.b16 %v4418, %v4414
    %v4503 = vpack.c.b16 %v4419, %v4415
    %v4504 = vpack.c.b16 %v4424, %v4420
    %v4505 = vpack.c.b16 %v4425, %v4421
    %v4506 = vpack.c.b16 %v4426, %v4422
    %v4507 = vpack.c.b16 %v4427, %v4423
    %v4508 = vpack.c.b16 %v4432, %v4428
    %v4509 = vpack.c.b16 %v4433, %v4429
    %v4510 = vpack.c.b16 %v4434, %v4430
    %v4511 = vpack.c.b16 %v4435, %v4431
    %v4512 = vpack.c.b16 %v4440, %v4436
    %v4513 = vpack.c.b16 %v4441, %v4437
    %v4514 = vpack.c.b16 %v4442, %v4438
    %v4515 = vpack.c.b16 %v4443, %v4439
    %v4516 = vpack.c.b16 %v4448, %v4444
    %v4517 = vpack.c.b16 %v4449, %v4445
    %v4518 = vpack.c.b16 %v4450, %v4446
    %v4519 = vpack.c.b16 %v4451, %v4447
    %v4520 = vpack.c.b16 %v4456, %v4452
    %v4521 = vpack.c.b16 %v4457, %v4453
    %v4522 = vpack.c.b16 %v4458, %v4454
    %v4523 = vpack.c.b16 %v4459, %v4455
    %4588 = vmatprep.subr.bf16.mxu0 %v4461
    %4589 = vmatpush1.bf16.msra.mxu0 %v4460
    %4590 = vmatprep.subr.bf16.mxu0 %v4465
    %4591 = vmatpush1.bf16.msra.mxu0 %v4464
    %4592 = vmatprep.subr.bf16.mxu0 %v4469
    %4593 = vmatpush1.bf16.msra.mxu0 %v4468
    %4594 = vmatprep.subr.bf16.mxu0 %v4473
    %4595 = vmatpush1.bf16.msra.mxu0 %v4472
    %4596 = vmatprep.subr.bf16.mxu0 %v4477
    %4597 = vmatpush1.bf16.msra.mxu0 %v4476
    %4598 = vmatprep.subr.bf16.mxu0 %v4481
    %4599 = vmatpush1.bf16.msra.mxu0 %v4480
    %4600 = vmatprep.subr.bf16.mxu0 %v4485
    %4601 = vmatpush1.bf16.msra.mxu0 %v4484
    %4602 = vmatprep.subr.bf16.mxu0 %v4489
    %4603 = vmatpush1.bf16.msra.mxu0 %v4488
    %4604 = vmatprep.subr.bf16.mxu0 %v4493
    %4605 = vmatpush1.bf16.msra.mxu0 %v4492
    %4606 = vmatprep.subr.bf16.mxu0 %v4497
    %4607 = vmatpush1.bf16.msra.mxu0 %v4496
    %4608 = vmatprep.subr.bf16.mxu0 %v4501
    %4609 = vmatpush1.bf16.msra.mxu0 %v4500
    %4610 = vmatprep.subr.bf16.mxu0 %v4505
    %4611 = vmatpush1.bf16.msra.mxu0 %v4504
    %4612 = vmatprep.subr.bf16.mxu0 %v4509
    %4613 = vmatpush1.bf16.msra.mxu0 %v4508
    %4614 = vmatprep.subr.bf16.mxu0 %v4513
    %4615 = vmatpush1.bf16.msra.mxu0 %v4512
    %4616 = vmatprep.subr.bf16.mxu0 %v4517
    %4617 = vmatpush1.bf16.msra.mxu0 %v4516
    %4618 = vmatprep.subr.bf16.mxu0 %v4521
    %4619 = vmatpush1.bf16.msra.mxu0 %v4520
    %4620 = vmatprep.mubr.bf16.mxu0 %v4246
    %4621 = vmatmul.mubr.bf16.gmra.mrb[0].mxu0 %v4245
    %v4622 = vpop.f32.mrb[0].mxu0
    %v4623 = vadd.f32 %v4251, %v4622
    %v4624 = vpop.f32.mrb[0].mxu0
    %v4625 = vadd.f32 %v4255, %v4624
    %v4626 = vpop.f32.mrb[0].mxu0
    %v4627 = vpop.f32.mrb[0].mxu0
    %4628 = vdwg.mxu0
    %4629 = vmatprep.subr.bf16.mxu0 %v4463
    %4630 = vmatpush1.bf16.msra.mxu0 %v4462
    %4631 = vmatprep.subr.bf16.mxu0 %v4467
    %4632 = vmatpush1.bf16.msra.mxu0 %v4466
    %4633 = vmatprep.subr.bf16.mxu0 %v4471
    %4634 = vmatpush1.bf16.msra.mxu0 %v4470
    %4635 = vmatprep.subr.bf16.mxu0 %v4475
    %4636 = vmatpush1.bf16.msra.mxu0 %v4474
    %4637 = vmatprep.subr.bf16.mxu0 %v4479
    %4638 = vmatpush1.bf16.msra.mxu0 %v4478
    %4639 = vmatprep.subr.bf16.mxu0 %v4483
    %4640 = vmatpush1.bf16.msra.mxu0 %v4482
    %4641 = vmatprep.subr.bf16.mxu0 %v4487
    %4642 = vmatpush1.bf16.msra.mxu0 %v4486
    %4643 = vmatprep.subr.bf16.mxu0 %v4491
    %4644 = vmatpush1.bf16.msra.mxu0 %v4490
    %4645 = vmatprep.subr.bf16.mxu0 %v4495
    %4646 = vmatpush1.bf16.msra.mxu0 %v4494
    %4647 = vmatprep.subr.bf16.mxu0 %v4499
    %4648 = vmatpush1.bf16.msra.mxu0 %v4498
    %4649 = vmatprep.subr.bf16.mxu0 %v4503
    %4650 = vmatpush1.bf16.msra.mxu0 %v4502
    %4651 = vmatprep.subr.bf16.mxu0 %v4507
    %4652 = vmatpush1.bf16.msra.mxu0 %v4506
    %4653 = vmatprep.subr.bf16.mxu0 %v4511
    %4654 = vmatpush1.bf16.msra.mxu0 %v4510
    %4655 = vmatprep.subr.bf16.mxu0 %v4515
    %4656 = vmatpush1.bf16.msra.mxu0 %v4514
    %4657 = vmatprep.subr.bf16.mxu0 %v4519
    %4658 = vmatpush1.bf16.msra.mxu0 %v4518
    %4659 = vmatprep.subr.bf16.mxu0 %v4523
    %4660 = vmatpush1.bf16.msra.mxu0 %v4522
    %4661 = vmatprep.mubr.bf16.mxu0 %v4246
    %4662 = vmatmul.mubr.bf16.gmra.mrb[0].mxu0 %v4245
    %v4663 = vpop.f32.mrb[0].mxu0
    %v4664 = vadd.f32 %v4259, %v4663
    %v4665 = vpop.f32.mrb[0].mxu0
    %v4666 = vadd.f32 %v4263, %v4665
    %v4667 = vpop.f32.mrb[0].mxu0
    %v4668 = vpop.f32.mrb[0].mxu0
    %4669 = vdwg.mxu0
    %v4670 = vmax.f32 %v4623, 0.0
    %v4671 = vmax.f32 %v4625, 0.0
    %v4672 = vmax.f32 %v4664, 0.0
    %v4673 = vmax.f32 %v4666, 0.0
    %v4674 = vld [vmem:[#allocation13] sm:$0xff]
    %v4675 = vld [vmem:[#allocation13 + $0x8] sm:$0xff]
    %v4676 = vld [vmem:[#allocation13 + $0x10] sm:$0xff]
    %v4677 = vld [vmem:[#allocation13 + $0x18] sm:$0xff]
    %v4678 = vld [vmem:[#allocation13 + $0x20] sm:$0xff]
    %v4679 = vld [vmem:[#allocation13 + $0x28] sm:$0xff]
    %v4680 = vld [vmem:[#allocation13 + $0x30] sm:$0xff]
    %v4681 = vld [vmem:[#allocation13 + $0x38] sm:$0xff]
    %v4682 = vld [vmem:[#allocation13 + $0x40] sm:$0xff]
    %v4683 = vld [vmem:[#allocation13 + $0x48] sm:$0xff]
    %v4684 = vld [vmem:[#allocation13 + $0x50] sm:$0xff]
    %v4685 = vld [vmem:[#allocation13 + $0x58] sm:$0xff]
    %v4686 = vld [vmem:[#allocation13 + $0x60] sm:$0xff]
    %v4687 = vld [vmem:[#allocation13 + $0x68] sm:$0xff]
    %v4688 = vld [vmem:[#allocation13 + $0x70] sm:$0xff]
    %v4689 = vld [vmem:[#allocation13 + $0x78] sm:$0xff]
    %v4690 = vld [vmem:[#allocation13 + $0x80] sm:$0xff]
    %v4691 = vld [vmem:[#allocation13 + $0x88] sm:$0xff]
    %v4692 = vld [vmem:[#allocation13 + $0x90] sm:$0xff]
    %v4693 = vld [vmem:[#allocation13 + $0x98] sm:$0xff]
    %v4694 = vld [vmem:[#allocation13 + $0xa0] sm:$0xff]
    %v4695 = vld [vmem:[#allocation13 + $0xa8] sm:$0xff]
    %v4696 = vld [vmem:[#allocation13 + $0xb0] sm:$0xff]
    %v4697 = vld [vmem:[#allocation13 + $0xb8] sm:$0xff]
    %v4698 = vld [vmem:[#allocation13 + $0xc0] sm:$0xff]
    %v4699 = vld [vmem:[#allocation13 + $0xc8] sm:$0xff]
    %v4700 = vld [vmem:[#allocation13 + $0xd0] sm:$0xff]
    %v4701 = vld [vmem:[#allocation13 + $0xd8] sm:$0xff]
    %v4702 = vld [vmem:[#allocation13 + $0xe0] sm:$0xff]
    %v4703 = vld [vmem:[#allocation13 + $0xe8] sm:$0xff]
    %v4704 = vld [vmem:[#allocation13 + $0xf0] sm:$0xff]
    %v4705 = vld [vmem:[#allocation13 + $0xf8] sm:$0xff]
    %v4706 = vld [vmem:[#allocation13 + $0x100] sm:$0xff]
    %v4707 = vld [vmem:[#allocation13 + $0x108] sm:$0xff]
    %v4708 = vld [vmem:[#allocation13 + $0x110] sm:$0xff]
    %v4709 = vld [vmem:[#allocation13 + $0x118] sm:$0xff]
    %v4710 = vld [vmem:[#allocation13 + $0x120] sm:$0xff]
    %v4711 = vld [vmem:[#allocation13 + $0x128] sm:$0xff]
    %v4712 = vld [vmem:[#allocation13 + $0x130] sm:$0xff]
    %v4713 = vld [vmem:[#allocation13 + $0x138] sm:$0xff]
    %v4714 = vld [vmem:[#allocation13 + $0x140] sm:$0xff]
    %v4715 = vld [vmem:[#allocation13 + $0x148] sm:$0xff]
    %v4716 = vld [vmem:[#allocation13 + $0x150] sm:$0xff]
    %v4717 = vld [vmem:[#allocation13 + $0x158] sm:$0xff]
    %v4718 = vld [vmem:[#allocation13 + $0x160] sm:$0xff]
    %v4719 = vld [vmem:[#allocation13 + $0x168] sm:$0xff]
    %v4720 = vld [vmem:[#allocation13 + $0x170] sm:$0xff]
    %v4721 = vld [vmem:[#allocation13 + $0x178] sm:$0xff]
    %v4722 = vld [vmem:[#allocation13 + $0x180] sm:$0xff]
    %v4723 = vld [vmem:[#allocation13 + $0x188] sm:$0xff]
    %v4724 = vld [vmem:[#allocation13 + $0x190] sm:$0xff]
    %v4725 = vld [vmem:[#allocation13 + $0x198] sm:$0xff]
    %v4726 = vld [vmem:[#allocation13 + $0x1a0] sm:$0xff]
    %v4727 = vld [vmem:[#allocation13 + $0x1a8] sm:$0xff]
    %v4728 = vld [vmem:[#allocation13 + $0x1b0] sm:$0xff]
    %v4729 = vld [vmem:[#allocation13 + $0x1b8] sm:$0xff]
    %v4730 = vld [vmem:[#allocation13 + $0x1c0] sm:$0xff]
    %v4731 = vld [vmem:[#allocation13 + $0x1c8] sm:$0xff]
    %v4732 = vld [vmem:[#allocation13 + $0x1d0] sm:$0xff]
    %v4733 = vld [vmem:[#allocation13 + $0x1d8] sm:$0xff]
    %v4734 = vld [vmem:[#allocation13 + $0x1e0] sm:$0xff]
    %v4735 = vld [vmem:[#allocation13 + $0x1e8] sm:$0xff]
    %v4736 = vld [vmem:[#allocation13 + $0x1f0] sm:$0xff]
    %v4737 = vld [vmem:[#allocation13 + $0x1f8] sm:$0xff]
    %v4738 = vld [vmem:[#allocation13 + $0x200] sm:$0xff]
    %v4739 = vld [vmem:[#allocation13 + $0x208] sm:$0xff]
    %v4740 = vld [vmem:[#allocation13 + $0x210] sm:$0xff]
    %v4741 = vld [vmem:[#allocation13 + $0x218] sm:$0xff]
    %v4742 = vld [vmem:[#allocation13 + $0x220] sm:$0xff]
    %v4743 = vld [vmem:[#allocation13 + $0x228] sm:$0xff]
    %v4744 = vld [vmem:[#allocation13 + $0x230] sm:$0xff]
    %v4745 = vld [vmem:[#allocation13 + $0x238] sm:$0xff]
    %v4746 = vld [vmem:[#allocation13 + $0x240] sm:$0xff]
    %v4747 = vld [vmem:[#allocation13 + $0x248] sm:$0xff]
    %v4748 = vld [vmem:[#allocation13 + $0x250] sm:$0xff]
    %v4749 = vld [vmem:[#allocation13 + $0x258] sm:$0xff]
    %v4750 = vld [vmem:[#allocation13 + $0x260] sm:$0xff]
    %v4751 = vld [vmem:[#allocation13 + $0x268] sm:$0xff]
    %v4752 = vld [vmem:[#allocation13 + $0x270] sm:$0xff]
    %v4753 = vld [vmem:[#allocation13 + $0x278] sm:$0xff]
    %v4754 = vld [vmem:[#allocation13 + $0x280] sm:$0xff]
    %v4755 = vld [vmem:[#allocation13 + $0x288] sm:$0xff]
    %v4756 = vld [vmem:[#allocation13 + $0x290] sm:$0xff]
    %v4757 = vld [vmem:[#allocation13 + $0x298] sm:$0xff]
    %v4758 = vld [vmem:[#allocation13 + $0x2a0] sm:$0xff]
    %v4759 = vld [vmem:[#allocation13 + $0x2a8] sm:$0xff]
    %v4760 = vld [vmem:[#allocation13 + $0x2b0] sm:$0xff]
    %v4761 = vld [vmem:[#allocation13 + $0x2b8] sm:$0xff]
    %v4762 = vld [vmem:[#allocation13 + $0x2c0] sm:$0xff]
    %v4763 = vld [vmem:[#allocation13 + $0x2c8] sm:$0xff]
    %v4764 = vld [vmem:[#allocation13 + $0x2d0] sm:$0xff]
    %v4765 = vld [vmem:[#allocation13 + $0x2d8] sm:$0xff]
    %v4766 = vld [vmem:[#allocation13 + $0x2e0] sm:$0xff]
    %v4767 = vld [vmem:[#allocation13 + $0x2e8] sm:$0xff]
    %v4768 = vld [vmem:[#allocation13 + $0x2f0] sm:$0xff]
    %v4769 = vld [vmem:[#allocation13 + $0x2f8] sm:$0xff]
    %v4770 = vld [vmem:[#allocation13 + $0x300] sm:$0xff]
    %v4771 = vld [vmem:[#allocation13 + $0x308] sm:$0xff]
    %v4772 = vld [vmem:[#allocation13 + $0x310] sm:$0xff]
    %v4773 = vld [vmem:[#allocation13 + $0x318] sm:$0xff]
    %v4774 = vld [vmem:[#allocation13 + $0x320] sm:$0xff]
    %v4775 = vld [vmem:[#allocation13 + $0x328] sm:$0xff]
    %v4776 = vld [vmem:[#allocation13 + $0x330] sm:$0xff]
    %v4777 = vld [vmem:[#allocation13 + $0x338] sm:$0xff]
    %v4778 = vld [vmem:[#allocation13 + $0x340] sm:$0xff]
    %v4779 = vld [vmem:[#allocation13 + $0x348] sm:$0xff]
    %v4780 = vld [vmem:[#allocation13 + $0x350] sm:$0xff]
    %v4781 = vld [vmem:[#allocation13 + $0x358] sm:$0xff]
    %v4782 = vld [vmem:[#allocation13 + $0x360] sm:$0xff]
    %v4783 = vld [vmem:[#allocation13 + $0x368] sm:$0xff]
    %v4784 = vld [vmem:[#allocation13 + $0x370] sm:$0xff]
    %v4785 = vld [vmem:[#allocation13 + $0x378] sm:$0xff]
    %v4786 = vld [vmem:[#allocation13 + $0x380] sm:$0xff]
    %v4787 = vld [vmem:[#allocation13 + $0x388] sm:$0xff]
    %v4788 = vld [vmem:[#allocation13 + $0x390] sm:$0xff]
    %v4789 = vld [vmem:[#allocation13 + $0x398] sm:$0xff]
    %v4790 = vld [vmem:[#allocation13 + $0x3a0] sm:$0xff]
    %v4791 = vld [vmem:[#allocation13 + $0x3a8] sm:$0xff]
    %v4792 = vld [vmem:[#allocation13 + $0x3b0] sm:$0xff]
    %v4793 = vld [vmem:[#allocation13 + $0x3b8] sm:$0xff]
    %v4794 = vld [vmem:[#allocation13 + $0x3c0] sm:$0xff]
    %v4795 = vld [vmem:[#allocation13 + $0x3c8] sm:$0xff]
    %v4796 = vld [vmem:[#allocation13 + $0x3d0] sm:$0xff]
    %v4797 = vld [vmem:[#allocation13 + $0x3d8] sm:$0xff]
    %v4798 = vld [vmem:[#allocation13 + $0x3e0] sm:$0xff]
    %v4799 = vld [vmem:[#allocation13 + $0x3e8] sm:$0xff]
    %v4800 = vld [vmem:[#allocation13 + $0x3f0] sm:$0xff]
    %v4801 = vld [vmem:[#allocation13 + $0x3f8] sm:$0xff]
    %v4802 = vld [vmem:[%s19] sm:$0xf]
    %v4803 = vpack.c.bf16 %v4670, %v4670
    %v4804 = vpack.c.bf16 %v4671, %v4671
    %v4805 = vpack.c.bf16 %v4672, %v4672
    %v4806 = vpack.c.bf16 %v4673, %v4673
    %v4808 = vlaneseq
    %v4809 = vshrl.u32 %v4808, 7
    %v4810 = vsub.s32 0, %v4809
    %v4811 = vrot.slane %v4802, %v4810
    %v4812 = vlaneseq
    %v4813 = vshrl.u32 %v4812, 7
    %v4814 = vsub.s32 1, %v4813
    %v4815 = vrot.slane %v4802, %v4814
    %v4816 = vlaneseq
    %v4817 = vshrl.u32 %v4816, 7
    %v4818 = vsub.s32 2, %v4817
    %v4819 = vrot.slane %v4802, %v4818
    %v4820 = vlaneseq
    %v4821 = vshrl.u32 %v4820, 7
    %v4822 = vsub.s32 3, %v4821
    %v4823 = vrot.slane %v4802, %v4822
    %v4956 = vunpack.c.l.b16 %v4674
    %v4957 = vunpack.c.h.b16 %v4674
    %v4958 = vunpack.c.l.b16 %v4675
    %v4959 = vunpack.c.h.b16 %v4675
    %v4960 = vunpack.c.l.b16 %v4676
    %v4961 = vunpack.c.h.b16 %v4676
    %v4962 = vunpack.c.l.b16 %v4677
    %v4963 = vunpack.c.h.b16 %v4677
    %v4964 = vunpack.c.l.b16 %v4678
    %v4965 = vunpack.c.h.b16 %v4678
    %v4966 = vunpack.c.l.b16 %v4679
    %v4967 = vunpack.c.h.b16 %v4679
    %v4968 = vunpack.c.l.b16 %v4680
    %v4969 = vunpack.c.h.b16 %v4680
    %v4970 = vunpack.c.l.b16 %v4681
    %v4971 = vunpack.c.h.b16 %v4681
    %v4972 = vunpack.c.l.b16 %v4682
    %v4973 = vunpack.c.h.b16 %v4682
    %v4974 = vunpack.c.l.b16 %v4683
    %v4975 = vunpack.c.h.b16 %v4683
    %v4976 = vunpack.c.l.b16 %v4684
    %v4977 = vunpack.c.h.b16 %v4684
    %v4978 = vunpack.c.l.b16 %v4685
    %v4979 = vunpack.c.h.b16 %v4685
    %v4980 = vunpack.c.l.b16 %v4686
    %v4981 = vunpack.c.h.b16 %v4686
    %v4982 = vunpack.c.l.b16 %v4687
    %v4983 = vunpack.c.h.b16 %v4687
    %v4984 = vunpack.c.l.b16 %v4688
    %v4985 = vunpack.c.h.b16 %v4688
    %v4986 = vunpack.c.l.b16 %v4689
    %v4987 = vunpack.c.h.b16 %v4689
    %v4988 = vunpack.c.l.b16 %v4690
    %v4989 = vunpack.c.h.b16 %v4690
    %v4990 = vunpack.c.l.b16 %v4691
    %v4991 = vunpack.c.h.b16 %v4691
    %v4992 = vunpack.c.l.b16 %v4692
    %v4993 = vunpack.c.h.b16 %v4692
    %v4994 = vunpack.c.l.b16 %v4693
    %v4995 = vunpack.c.h.b16 %v4693
    %v4996 = vunpack.c.l.b16 %v4694
    %v4997 = vunpack.c.h.b16 %v4694
    %v4998 = vunpack.c.l.b16 %v4695
    %v4999 = vunpack.c.h.b16 %v4695
    %v5000 = vunpack.c.l.b16 %v4696
    %v5001 = vunpack.c.h.b16 %v4696
    %v5002 = vunpack.c.l.b16 %v4697
    %v5003 = vunpack.c.h.b16 %v4697
    %v5004 = vunpack.c.l.b16 %v4698
    %v5005 = vunpack.c.h.b16 %v4698
    %v5006 = vunpack.c.l.b16 %v4699
    %v5007 = vunpack.c.h.b16 %v4699
    %v5008 = vunpack.c.l.b16 %v4700
    %v5009 = vunpack.c.h.b16 %v4700
    %v5010 = vunpack.c.l.b16 %v4701
    %v5011 = vunpack.c.h.b16 %v4701
    %v5012 = vunpack.c.l.b16 %v4702
    %v5013 = vunpack.c.h.b16 %v4702
    %v5014 = vunpack.c.l.b16 %v4703
    %v5015 = vunpack.c.h.b16 %v4703
    %v5016 = vunpack.c.l.b16 %v4704
    %v5017 = vunpack.c.h.b16 %v4704
    %v5018 = vunpack.c.l.b16 %v4705
    %v5019 = vunpack.c.h.b16 %v4705
    %v5020 = vunpack.c.l.b16 %v4706
    %v5021 = vunpack.c.h.b16 %v4706
    %v5022 = vunpack.c.l.b16 %v4707
    %v5023 = vunpack.c.h.b16 %v4707
    %v5024 = vunpack.c.l.b16 %v4708
    %v5025 = vunpack.c.h.b16 %v4708
    %v5026 = vunpack.c.l.b16 %v4709
    %v5027 = vunpack.c.h.b16 %v4709
    %v5028 = vunpack.c.l.b16 %v4710
    %v5029 = vunpack.c.h.b16 %v4710
    %v5030 = vunpack.c.l.b16 %v4711
    %v5031 = vunpack.c.h.b16 %v4711
    %v5032 = vunpack.c.l.b16 %v4712
    %v5033 = vunpack.c.h.b16 %v4712
    %v5034 = vunpack.c.l.b16 %v4713
    %v5035 = vunpack.c.h.b16 %v4713
    %v5036 = vunpack.c.l.b16 %v4714
    %v5037 = vunpack.c.h.b16 %v4714
    %v5038 = vunpack.c.l.b16 %v4715
    %v5039 = vunpack.c.h.b16 %v4715
    %v5040 = vunpack.c.l.b16 %v4716
    %v5041 = vunpack.c.h.b16 %v4716
    %v5042 = vunpack.c.l.b16 %v4717
    %v5043 = vunpack.c.h.b16 %v4717
    %v5044 = vunpack.c.l.b16 %v4718
    %v5045 = vunpack.c.h.b16 %v4718
    %v5046 = vunpack.c.l.b16 %v4719
    %v5047 = vunpack.c.h.b16 %v4719
    %v5048 = vunpack.c.l.b16 %v4720
    %v5049 = vunpack.c.h.b16 %v4720
    %v5050 = vunpack.c.l.b16 %v4721
    %v5051 = vunpack.c.h.b16 %v4721
    %v5052 = vunpack.c.l.b16 %v4722
    %v5053 = vunpack.c.h.b16 %v4722
    %v5054 = vunpack.c.l.b16 %v4723
    %v5055 = vunpack.c.h.b16 %v4723
    %v5056 = vunpack.c.l.b16 %v4724
    %v5057 = vunpack.c.h.b16 %v4724
    %v5058 = vunpack.c.l.b16 %v4725
    %v5059 = vunpack.c.h.b16 %v4725
    %v5060 = vunpack.c.l.b16 %v4726
    %v5061 = vunpack.c.h.b16 %v4726
    %v5062 = vunpack.c.l.b16 %v4727
    %v5063 = vunpack.c.h.b16 %v4727
    %v5064 = vunpack.c.l.b16 %v4728
    %v5065 = vunpack.c.h.b16 %v4728
    %v5066 = vunpack.c.l.b16 %v4729
    %v5067 = vunpack.c.h.b16 %v4729
    %v5068 = vunpack.c.l.b16 %v4730
    %v5069 = vunpack.c.h.b16 %v4730
    %v5070 = vunpack.c.l.b16 %v4731
    %v5071 = vunpack.c.h.b16 %v4731
    %v5072 = vunpack.c.l.b16 %v4732
    %v5073 = vunpack.c.h.b16 %v4732
    %v5074 = vunpack.c.l.b16 %v4733
    %v5075 = vunpack.c.h.b16 %v4733
    %v5076 = vunpack.c.l.b16 %v4734
    %v5077 = vunpack.c.h.b16 %v4734
    %v5078 = vunpack.c.l.b16 %v4735
    %v5079 = vunpack.c.h.b16 %v4735
    %v5080 = vunpack.c.l.b16 %v4736
    %v5081 = vunpack.c.h.b16 %v4736
    %v5082 = vunpack.c.l.b16 %v4737
    %v5083 = vunpack.c.h.b16 %v4737
    %v5084 = vunpack.c.l.b16 %v4738
    %v5085 = vunpack.c.h.b16 %v4738
    %v5086 = vunpack.c.l.b16 %v4739
    %v5087 = vunpack.c.h.b16 %v4739
    %v5088 = vunpack.c.l.b16 %v4740
    %v5089 = vunpack.c.h.b16 %v4740
    %v5090 = vunpack.c.l.b16 %v4741
    %v5091 = vunpack.c.h.b16 %v4741
    %v5092 = vunpack.c.l.b16 %v4742
    %v5093 = vunpack.c.h.b16 %v4742
    %v5094 = vunpack.c.l.b16 %v4743
    %v5095 = vunpack.c.h.b16 %v4743
    %v5096 = vunpack.c.l.b16 %v4744
    %v5097 = vunpack.c.h.b16 %v4744
    %v5098 = vunpack.c.l.b16 %v4745
    %v5099 = vunpack.c.h.b16 %v4745
    %v5100 = vunpack.c.l.b16 %v4746
    %v5101 = vunpack.c.h.b16 %v4746
    %v5102 = vunpack.c.l.b16 %v4747
    %v5103 = vunpack.c.h.b16 %v4747
    %v5104 = vunpack.c.l.b16 %v4748
    %v5105 = vunpack.c.h.b16 %v4748
    %v5106 = vunpack.c.l.b16 %v4749
    %v5107 = vunpack.c.h.b16 %v4749
    %v5108 = vunpack.c.l.b16 %v4750
    %v5109 = vunpack.c.h.b16 %v4750
    %v5110 = vunpack.c.l.b16 %v4751
    %v5111 = vunpack.c.h.b16 %v4751
    %v5112 = vunpack.c.l.b16 %v4752
    %v5113 = vunpack.c.h.b16 %v4752
    %v5114 = vunpack.c.l.b16 %v4753
    %v5115 = vunpack.c.h.b16 %v4753
    %v5116 = vunpack.c.l.b16 %v4754
    %v5117 = vunpack.c.h.b16 %v4754
    %v5118 = vunpack.c.l.b16 %v4755
    %v5119 = vunpack.c.h.b16 %v4755
    %v5120 = vunpack.c.l.b16 %v4756
    %v5121 = vunpack.c.h.b16 %v4756
    %v5122 = vunpack.c.l.b16 %v4757
    %v5123 = vunpack.c.h.b16 %v4757
    %v5124 = vunpack.c.l.b16 %v4758
    %v5125 = vunpack.c.h.b16 %v4758
    %v5126 = vunpack.c.l.b16 %v4759
    %v5127 = vunpack.c.h.b16 %v4759
    %v5128 = vunpack.c.l.b16 %v4760
    %v5129 = vunpack.c.h.b16 %v4760
    %v5130 = vunpack.c.l.b16 %v4761
    %v5131 = vunpack.c.h.b16 %v4761
    %v5132 = vunpack.c.l.b16 %v4762
    %v5133 = vunpack.c.h.b16 %v4762
    %v5134 = vunpack.c.l.b16 %v4763
    %v5135 = vunpack.c.h.b16 %v4763
    %v5136 = vunpack.c.l.b16 %v4764
    %v5137 = vunpack.c.h.b16 %v4764
    %v5138 = vunpack.c.l.b16 %v4765
    %v5139 = vunpack.c.h.b16 %v4765
    %v5140 = vunpack.c.l.b16 %v4766
    %v5141 = vunpack.c.h.b16 %v4766
    %v5142 = vunpack.c.l.b16 %v4767
    %v5143 = vunpack.c.h.b16 %v4767
    %v5144 = vunpack.c.l.b16 %v4768
    %v5145 = vunpack.c.h.b16 %v4768
    %v5146 = vunpack.c.l.b16 %v4769
    %v5147 = vunpack.c.h.b16 %v4769
    %v5148 = vunpack.c.l.b16 %v4770
    %v5149 = vunpack.c.h.b16 %v4770
    %v5150 = vunpack.c.l.b16 %v4771
    %v5151 = vunpack.c.h.b16 %v4771
    %v5152 = vunpack.c.l.b16 %v4772
    %v5153 = vunpack.c.h.b16 %v4772
    %v5154 = vunpack.c.l.b16 %v4773
    %v5155 = vunpack.c.h.b16 %v4773
    %v5156 = vunpack.c.l.b16 %v4774
    %v5157 = vunpack.c.h.b16 %v4774
    %v5158 = vunpack.c.l.b16 %v4775
    %v5159 = vunpack.c.h.b16 %v4775
    %v5160 = vunpack.c.l.b16 %v4776
    %v5161 = vunpack.c.h.b16 %v4776
    %v5162 = vunpack.c.l.b16 %v4777
    %v5163 = vunpack.c.h.b16 %v4777
    %v5164 = vunpack.c.l.b16 %v4778
    %v5165 = vunpack.c.h.b16 %v4778
    %v5166 = vunpack.c.l.b16 %v4779
    %v5167 = vunpack.c.h.b16 %v4779
    %v5168 = vunpack.c.l.b16 %v4780
    %v5169 = vunpack.c.h.b16 %v4780
    %v5170 = vunpack.c.l.b16 %v4781
    %v5171 = vunpack.c.h.b16 %v4781
    %v5172 = vunpack.c.l.b16 %v4782
    %v5173 = vunpack.c.h.b16 %v4782
    %v5174 = vunpack.c.l.b16 %v4783
    %v5175 = vunpack.c.h.b16 %v4783
    %v5176 = vunpack.c.l.b16 %v4784
    %v5177 = vunpack.c.h.b16 %v4784
    %v5178 = vunpack.c.l.b16 %v4785
    %v5179 = vunpack.c.h.b16 %v4785
    %v5180 = vunpack.c.l.b16 %v4786
    %v5181 = vunpack.c.h.b16 %v4786
    %v5182 = vunpack.c.l.b16 %v4787
    %v5183 = vunpack.c.h.b16 %v4787
    %v5184 = vunpack.c.l.b16 %v4788
    %v5185 = vunpack.c.h.b16 %v4788
    %v5186 = vunpack.c.l.b16 %v4789
    %v5187 = vunpack.c.h.b16 %v4789
    %v5188 = vunpack.c.l.b16 %v4790
    %v5189 = vunpack.c.h.b16 %v4790
    %v5190 = vunpack.c.l.b16 %v4791
    %v5191 = vunpack.c.h.b16 %v4791
    %v5192 = vunpack.c.l.b16 %v4792
    %v5193 = vunpack.c.h.b16 %v4792
    %v5194 = vunpack.c.l.b16 %v4793
    %v5195 = vunpack.c.h.b16 %v4793
    %v5196 = vunpack.c.l.b16 %v4794
    %v5197 = vunpack.c.h.b16 %v4794
    %v5198 = vunpack.c.l.b16 %v4795
    %v5199 = vunpack.c.h.b16 %v4795
    %v5200 = vunpack.c.l.b16 %v4796
    %v5201 = vunpack.c.h.b16 %v4796
    %v5202 = vunpack.c.l.b16 %v4797
    %v5203 = vunpack.c.h.b16 %v4797
    %v5204 = vunpack.c.l.b16 %v4798
    %v5205 = vunpack.c.h.b16 %v4798
    %v5206 = vunpack.c.l.b16 %v4799
    %v5207 = vunpack.c.h.b16 %v4799
    %v5208 = vunpack.c.l.b16 %v4800
    %v5209 = vunpack.c.h.b16 %v4800
    %v5210 = vunpack.c.l.b16 %v4801
    %v5211 = vunpack.c.h.b16 %v4801
    %v5212 = vpack.c.b16 %v4960, %v4956
    %v5213 = vpack.c.b16 %v4961, %v4957
    %v5214 = vpack.c.b16 %v4962, %v4958
    %v5215 = vpack.c.b16 %v4963, %v4959
    %v5216 = vpack.c.b16 %v4968, %v4964
    %v5217 = vpack.c.b16 %v4969, %v4965
    %v5218 = vpack.c.b16 %v4970, %v4966
    %v5219 = vpack.c.b16 %v4971, %v4967
    %v5220 = vpack.c.b16 %v4976, %v4972
    %v5221 = vpack.c.b16 %v4977, %v4973
    %v5222 = vpack.c.b16 %v4978, %v4974
    %v5223 = vpack.c.b16 %v4979, %v4975
    %v5224 = vpack.c.b16 %v4984, %v4980
    %v5225 = vpack.c.b16 %v4985, %v4981
    %v5226 = vpack.c.b16 %v4986, %v4982
    %v5227 = vpack.c.b16 %v4987, %v4983
    %v5228 = vpack.c.b16 %v4992, %v4988
    %v5229 = vpack.c.b16 %v4993, %v4989
    %v5230 = vpack.c.b16 %v4994, %v4990
    %v5231 = vpack.c.b16 %v4995, %v4991
    %v5232 = vpack.c.b16 %v5000, %v4996
    %v5233 = vpack.c.b16 %v5001, %v4997
    %v5234 = vpack.c.b16 %v5002, %v4998
    %v5235 = vpack.c.b16 %v5003, %v4999
    %v5236 = vpack.c.b16 %v5008, %v5004
    %v5237 = vpack.c.b16 %v5009, %v5005
    %v5238 = vpack.c.b16 %v5010, %v5006
    %v5239 = vpack.c.b16 %v5011, %v5007
    %v5240 = vpack.c.b16 %v5016, %v5012
    %v5241 = vpack.c.b16 %v5017, %v5013
    %v5242 = vpack.c.b16 %v5018, %v5014
    %v5243 = vpack.c.b16 %v5019, %v5015
    %v5244 = vpack.c.b16 %v5024, %v5020
    %v5245 = vpack.c.b16 %v5025, %v5021
    %v5246 = vpack.c.b16 %v5026, %v5022
    %v5247 = vpack.c.b16 %v5027, %v5023
    %v5248 = vpack.c.b16 %v5032, %v5028
    %v5249 = vpack.c.b16 %v5033, %v5029
    %v5250 = vpack.c.b16 %v5034, %v5030
    %v5251 = vpack.c.b16 %v5035, %v5031
    %v5252 = vpack.c.b16 %v5040, %v5036
    %v5253 = vpack.c.b16 %v5041, %v5037
    %v5254 = vpack.c.b16 %v5042, %v5038
    %v5255 = vpack.c.b16 %v5043, %v5039
    %v5256 = vpack.c.b16 %v5048, %v5044
    %v5257 = vpack.c.b16 %v5049, %v5045
    %v5258 = vpack.c.b16 %v5050, %v5046
    %v5259 = vpack.c.b16 %v5051, %v5047
    %v5260 = vpack.c.b16 %v5056, %v5052
    %v5261 = vpack.c.b16 %v5057, %v5053
    %v5262 = vpack.c.b16 %v5058, %v5054
    %v5263 = vpack.c.b16 %v5059, %v5055
    %v5264 = vpack.c.b16 %v5064, %v5060
    %v5265 = vpack.c.b16 %v5065, %v5061
    %v5266 = vpack.c.b16 %v5066, %v5062
    %v5267 = vpack.c.b16 %v5067, %v5063
    %v5268 = vpack.c.b16 %v5072, %v5068
    %v5269 = vpack.c.b16 %v5073, %v5069
    %v5270 = vpack.c.b16 %v5074, %v5070
    %v5271 = vpack.c.b16 %v5075, %v5071
    %v5272 = vpack.c.b16 %v5080, %v5076
    %v5273 = vpack.c.b16 %v5081, %v5077
    %v5274 = vpack.c.b16 %v5082, %v5078
    %v5275 = vpack.c.b16 %v5083, %v5079
    %v5276 = vpack.c.b16 %v5088, %v5084
    %v5277 = vpack.c.b16 %v5089, %v5085
    %v5278 = vpack.c.b16 %v5090, %v5086
    %v5279 = vpack.c.b16 %v5091, %v5087
    %v5280 = vpack.c.b16 %v5096, %v5092
    %v5281 = vpack.c.b16 %v5097, %v5093
    %v5282 = vpack.c.b16 %v5098, %v5094
    %v5283 = vpack.c.b16 %v5099, %v5095
    %v5284 = vpack.c.b16 %v5104, %v5100
    %v5285 = vpack.c.b16 %v5105, %v5101
    %v5286 = vpack.c.b16 %v5106, %v5102
    %v5287 = vpack.c.b16 %v5107, %v5103
    %v5288 = vpack.c.b16 %v5112, %v5108
    %v5289 = vpack.c.b16 %v5113, %v5109
    %v5290 = vpack.c.b16 %v5114, %v5110
    %v5291 = vpack.c.b16 %v5115, %v5111
    %v5292 = vpack.c.b16 %v5120, %v5116
    %v5293 = vpack.c.b16 %v5121, %v5117
    %v5294 = vpack.c.b16 %v5122, %v5118
    %v5295 = vpack.c.b16 %v5123, %v5119
    %v5296 = vpack.c.b16 %v5128, %v5124
    %v5297 = vpack.c.b16 %v5129, %v5125
    %v5298 = vpack.c.b16 %v5130, %v5126
    %v5299 = vpack.c.b16 %v5131, %v5127
    %v5300 = vpack.c.b16 %v5136, %v5132
    %v5301 = vpack.c.b16 %v5137, %v5133
    %v5302 = vpack.c.b16 %v5138, %v5134
    %v5303 = vpack.c.b16 %v5139, %v5135
    %v5304 = vpack.c.b16 %v5144, %v5140
    %v5305 = vpack.c.b16 %v5145, %v5141
    %v5306 = vpack.c.b16 %v5146, %v5142
    %v5307 = vpack.c.b16 %v5147, %v5143
    %v5308 = vpack.c.b16 %v5152, %v5148
    %v5309 = vpack.c.b16 %v5153, %v5149
    %v5310 = vpack.c.b16 %v5154, %v5150
    %v5311 = vpack.c.b16 %v5155, %v5151
    %v5312 = vpack.c.b16 %v5160, %v5156
    %v5313 = vpack.c.b16 %v5161, %v5157
    %v5314 = vpack.c.b16 %v5162, %v5158
    %v5315 = vpack.c.b16 %v5163, %v5159
    %v5316 = vpack.c.b16 %v5168, %v5164
    %v5317 = vpack.c.b16 %v5169, %v5165
    %v5318 = vpack.c.b16 %v5170, %v5166
    %v5319 = vpack.c.b16 %v5171, %v5167
    %v5320 = vpack.c.b16 %v5176, %v5172
    %v5321 = vpack.c.b16 %v5177, %v5173
    %v5322 = vpack.c.b16 %v5178, %v5174
    %v5323 = vpack.c.b16 %v5179, %v5175
    %v5324 = vpack.c.b16 %v5184, %v5180
    %v5325 = vpack.c.b16 %v5185, %v5181
    %v5326 = vpack.c.b16 %v5186, %v5182
    %v5327 = vpack.c.b16 %v5187, %v5183
    %v5328 = vpack.c.b16 %v5192, %v5188
    %v5329 = vpack.c.b16 %v5193, %v5189
    %v5330 = vpack.c.b16 %v5194, %v5190
    %v5331 = vpack.c.b16 %v5195, %v5191
    %v5332 = vpack.c.b16 %v5200, %v5196
    %v5333 = vpack.c.b16 %v5201, %v5197
    %v5334 = vpack.c.b16 %v5202, %v5198
    %v5335 = vpack.c.b16 %v5203, %v5199
    %v5336 = vpack.c.b16 %v5208, %v5204
    %v5337 = vpack.c.b16 %v5209, %v5205
    %v5338 = vpack.c.b16 %v5210, %v5206
    %v5339 = vpack.c.b16 %v5211, %v5207
    %5468 = vmatprep.subr.bf16.mxu0 %v5213
    %5469 = vmatpush1.bf16.msra.mxu0 %v5212
    %5470 = vmatprep.subr.bf16.mxu0 %v5217
    %5471 = vmatpush1.bf16.msra.mxu0 %v5216
    %5472 = vmatprep.subr.bf16.mxu0 %v5221
    %5473 = vmatpush1.bf16.msra.mxu0 %v5220
    %5474 = vmatprep.subr.bf16.mxu0 %v5225
    %5475 = vmatpush1.bf16.msra.mxu0 %v5224
    %5476 = vmatprep.subr.bf16.mxu0 %v5229
    %5477 = vmatpush1.bf16.msra.mxu0 %v5228
    %5478 = vmatprep.subr.bf16.mxu0 %v5233
    %5479 = vmatpush1.bf16.msra.mxu0 %v5232
    %5480 = vmatprep.subr.bf16.mxu0 %v5237
    %5481 = vmatpush1.bf16.msra.mxu0 %v5236
    %5482 = vmatprep.subr.bf16.mxu0 %v5241
    %5483 = vmatpush1.bf16.msra.mxu0 %v5240
    %5484 = vmatprep.subr.bf16.mxu0 %v5245
    %5485 = vmatpush1.bf16.msra.mxu0 %v5244
    %5486 = vmatprep.subr.bf16.mxu0 %v5249
    %5487 = vmatpush1.bf16.msra.mxu0 %v5248
    %5488 = vmatprep.subr.bf16.mxu0 %v5253
    %5489 = vmatpush1.bf16.msra.mxu0 %v5252
    %5490 = vmatprep.subr.bf16.mxu0 %v5257
    %5491 = vmatpush1.bf16.msra.mxu0 %v5256
    %5492 = vmatprep.subr.bf16.mxu0 %v5261
    %5493 = vmatpush1.bf16.msra.mxu0 %v5260
    %5494 = vmatprep.subr.bf16.mxu0 %v5265
    %5495 = vmatpush1.bf16.msra.mxu0 %v5264
    %5496 = vmatprep.subr.bf16.mxu0 %v5269
    %5497 = vmatpush1.bf16.msra.mxu0 %v5268
    %5498 = vmatprep.subr.bf16.mxu0 %v5273
    %5499 = vmatpush1.bf16.msra.mxu0 %v5272
    %5500 = vmatprep.mubr.bf16.mxu0 %v4804
    %5501 = vmatmul.mubr.bf16.gmra.mrb[0].mxu0 %v4803
    %v5502 = vpop.f32.mrb[0].mxu0
    %v5503 = vadd.f32 %v4811, %v5502
    %v5504 = vpop.f32.mrb[0].mxu0
    %v5505 = vadd.f32 %v4815, %v5504
    %v5506 = vpop.f32.mrb[0].mxu0
    %v5507 = vpop.f32.mrb[0].mxu0
    %5508 = vdwg.mxu0
    %5509 = vmatprep.subr.bf16.mxu0 %v5277
    %5510 = vmatpush1.bf16.msra.mxu0 %v5276
    %5511 = vmatprep.subr.bf16.mxu0 %v5281
    %5512 = vmatpush1.bf16.msra.mxu0 %v5280
    %5513 = vmatprep.subr.bf16.mxu0 %v5285
    %5514 = vmatpush1.bf16.msra.mxu0 %v5284
    %5515 = vmatprep.subr.bf16.mxu0 %v5289
    %5516 = vmatpush1.bf16.msra.mxu0 %v5288
    %5517 = vmatprep.subr.bf16.mxu0 %v5293
    %5518 = vmatpush1.bf16.msra.mxu0 %v5292
    %5519 = vmatprep.subr.bf16.mxu0 %v5297
    %5520 = vmatpush1.bf16.msra.mxu0 %v5296
    %5521 = vmatprep.subr.bf16.mxu0 %v5301
    %5522 = vmatpush1.bf16.msra.mxu0 %v5300
    %5523 = vmatprep.subr.bf16.mxu0 %v5305
    %5524 = vmatpush1.bf16.msra.mxu0 %v5304
    %5525 = vmatprep.subr.bf16.mxu0 %v5309
    %5526 = vmatpush1.bf16.msra.mxu0 %v5308
    %5527 = vmatprep.subr.bf16.mxu0 %v5313
    %5528 = vmatpush1.bf16.msra.mxu0 %v5312
    %5529 = vmatprep.subr.bf16.mxu0 %v5317
    %5530 = vmatpush1.bf16.msra.mxu0 %v5316
    %5531 = vmatprep.subr.bf16.mxu0 %v5321
    %5532 = vmatpush1.bf16.msra.mxu0 %v5320
    %5533 = vmatprep.subr.bf16.mxu0 %v5325
    %5534 = vmatpush1.bf16.msra.mxu0 %v5324
    %5535 = vmatprep.subr.bf16.mxu0 %v5329
    %5536 = vmatpush1.bf16.msra.mxu0 %v5328
    %5537 = vmatprep.subr.bf16.mxu0 %v5333
    %5538 = vmatpush1.bf16.msra.mxu0 %v5332
    %5539 = vmatprep.subr.bf16.mxu0 %v5337
    %5540 = vmatpush1.bf16.msra.mxu0 %v5336
    %5541 = vmatprep.mubr.bf16.mxu0 %v4806
    %5542 = vmatmul.mubr.bf16.gmra.mrb[0].mxu0 %v4805
    %v5543 = vpop.f32.mrb[0].mxu0
    %v5544 = vadd.f32 %v5503, %v5543
    %v5545 = vpop.f32.mrb[0].mxu0
    %v5546 = vadd.f32 %v5505, %v5545
    %v5547 = vpop.f32.mrb[0].mxu0
    %v5548 = vpop.f32.mrb[0].mxu0
    %5549 = vdwg.mxu0
    %5550 = vmatprep.subr.bf16.mxu0 %v5215
    %5551 = vmatpush1.bf16.msra.mxu0 %v5214
    %5552 = vmatprep.subr.bf16.mxu0 %v5219
    %5553 = vmatpush1.bf16.msra.mxu0 %v5218
    %5554 = vmatprep.subr.bf16.mxu0 %v5223
    %5555 = vmatpush1.bf16.msra.mxu0 %v5222
    %5556 = vmatprep.subr.bf16.mxu0 %v5227
    %5557 = vmatpush1.bf16.msra.mxu0 %v5226
    %5558 = vmatprep.subr.bf16.mxu0 %v5231
    %5559 = vmatpush1.bf16.msra.mxu0 %v5230
    %5560 = vmatprep.subr.bf16.mxu0 %v5235
    %5561 = vmatpush1.bf16.msra.mxu0 %v5234
    %5562 = vmatprep.subr.bf16.mxu0 %v5239
    %5563 = vmatpush1.bf16.msra.mxu0 %v5238
    %5564 = vmatprep.subr.bf16.mxu0 %v5243
    %5565 = vmatpush1.bf16.msra.mxu0 %v5242
    %5566 = vmatprep.subr.bf16.mxu0 %v5247
    %5567 = vmatpush1.bf16.msra.mxu0 %v5246
    %5568 = vmatprep.subr.bf16.mxu0 %v5251
    %5569 = vmatpush1.bf16.msra.mxu0 %v5250
    %5570 = vmatprep.subr.bf16.mxu0 %v5255
    %5571 = vmatpush1.bf16.msra.mxu0 %v5254
    %5572 = vmatprep.subr.bf16.mxu0 %v5259
    %5573 = vmatpush1.bf16.msra.mxu0 %v5258
    %5574 = vmatprep.subr.bf16.mxu0 %v5263
    %5575 = vmatpush1.bf16.msra.mxu0 %v5262
    %5576 = vmatprep.subr.bf16.mxu0 %v5267
    %5577 = vmatpush1.bf16.msra.mxu0 %v5266
    %5578 = vmatprep.subr.bf16.mxu0 %v5271
    %5579 = vmatpush1.bf16.msra.mxu0 %v5270
    %5580 = vmatprep.subr.bf16.mxu0 %v5275
    %5581 = vmatpush1.bf16.msra.mxu0 %v5274
    %5582 = vmatprep.mubr.bf16.mxu0 %v4804
    %5583 = vmatmul.mubr.bf16.gmra.mrb[0].mxu0 %v4803
    %v5584 = vpop.f32.mrb[0].mxu0
    %v5585 = vadd.f32 %v4819, %v5584
    %v5586 = vpop.f32.mrb[0].mxu0
    %v5587 = vadd.f32 %v4823, %v5586
    %v5588 = vpop.f32.mrb[0].mxu0
    %v5589 = vpop.f32.mrb[0].mxu0
    %5590 = vdwg.mxu0
    %5591 = vmatprep.subr.bf16.mxu0 %v5279
    %5592 = vmatpush1.bf16.msra.mxu0 %v5278
    %5593 = vmatprep.subr.bf16.mxu0 %v5283
    %5594 = vmatpush1.bf16.msra.mxu0 %v5282
    %5595 = vmatprep.subr.bf16.mxu0 %v5287
    %5596 = vmatpush1.bf16.msra.mxu0 %v5286
    %5597 = vmatprep.subr.bf16.mxu0 %v5291
    %5598 = vmatpush1.bf16.msra.mxu0 %v5290
    %5599 = vmatprep.subr.bf16.mxu0 %v5295
    %5600 = vmatpush1.bf16.msra.mxu0 %v5294
    %5601 = vmatprep.subr.bf16.mxu0 %v5299
    %5602 = vmatpush1.bf16.msra.mxu0 %v5298
    %5603 = vmatprep.subr.bf16.mxu0 %v5303
    %5604 = vmatpush1.bf16.msra.mxu0 %v5302
    %5605 = vmatprep.subr.bf16.mxu0 %v5307
    %5606 = vmatpush1.bf16.msra.mxu0 %v5306
    %5607 = vmatprep.subr.bf16.mxu0 %v5311
    %5608 = vmatpush1.bf16.msra.mxu0 %v5310
    %5609 = vmatprep.subr.bf16.mxu0 %v5315
    %5610 = vmatpush1.bf16.msra.mxu0 %v5314
    %5611 = vmatprep.subr.bf16.mxu0 %v5319
    %5612 = vmatpush1.bf16.msra.mxu0 %v5318
    %5613 = vmatprep.subr.bf16.mxu0 %v5323
    %5614 = vmatpush1.bf16.msra.mxu0 %v5322
    %5615 = vmatprep.subr.bf16.mxu0 %v5327
    %5616 = vmatpush1.bf16.msra.mxu0 %v5326
    %5617 = vmatprep.subr.bf16.mxu0 %v5331
    %5618 = vmatpush1.bf16.msra.mxu0 %v5330
    %5619 = vmatprep.subr.bf16.mxu0 %v5335
    %5620 = vmatpush1.bf16.msra.mxu0 %v5334
    %5621 = vmatprep.subr.bf16.mxu0 %v5339
    %5622 = vmatpush1.bf16.msra.mxu0 %v5338
    %5623 = vmatprep.mubr.bf16.mxu0 %v4806
    %5624 = vmatmul.mubr.bf16.gmra.mrb[0].mxu0 %v4805
    %v5625 = vpop.f32.mrb[0].mxu0
    %v5626 = vadd.f32 %v5585, %v5625
    %v5627 = vpop.f32.mrb[0].mxu0
    %v5628 = vadd.f32 %v5587, %v5627
    %v5629 = vpop.f32.mrb[0].mxu0
    %v5630 = vpop.f32.mrb[0].mxu0
    %5631 = vdwg.mxu0
    %v5632 = vmax.f32 %v5544, 0.0
    %v5633 = vmax.f32 %v5546, 0.0
    %v5634 = vmax.f32 %v5626, 0.0
    %v5635 = vmax.f32 %v5628, 0.0
    %v5636 = vld [vmem:[#allocation15] sm:$0xff]
    %v5637 = vld [vmem:[#allocation15 + $0x8] sm:$0xff]
    %v5638 = vld [vmem:[#allocation15 + $0x10] sm:$0xff]
    %v5639 = vld [vmem:[#allocation15 + $0x18] sm:$0xf]
    %v5640 = vld [vmem:[#allocation15 + $0x1c] sm:$0xff]
    %v5641 = vld [vmem:[#allocation15 + $0x24] sm:$0xff]
    %v5642 = vld [vmem:[#allocation15 + $0x2c] sm:$0xff]
    %v5643 = vld [vmem:[#allocation15 + $0x34] sm:$0xf]
    %v5644 = vld [vmem:[#allocation15 + $0x38] sm:$0xff]
    %v5645 = vld [vmem:[#allocation15 + $0x40] sm:$0xff]
    %v5646 = vld [vmem:[#allocation15 + $0x48] sm:$0xff]
    %v5647 = vld [vmem:[#allocation15 + $0x50] sm:$0xf]
    %v5648 = vld [vmem:[#allocation15 + $0x54] sm:$0xff]
    %v5649 = vld [vmem:[#allocation15 + $0x5c] sm:$0xff]
    %v5650 = vld [vmem:[#allocation15 + $0x64] sm:$0xff]
    %v5651 = vld [vmem:[#allocation15 + $0x6c] sm:$0xf]
    %v5652 = vld [vmem:[#allocation15 + $0x70] sm:$0xff]
    %v5653 = vld [vmem:[#allocation15 + $0x78] sm:$0xff]
    %v5654 = vld [vmem:[#allocation15 + $0x80] sm:$0xff]
    %v5655 = vld [vmem:[#allocation15 + $0x88] sm:$0xf]
    %v5656 = vld [vmem:[#allocation15 + $0x8c] sm:$0xff]
    %v5657 = vld [vmem:[#allocation15 + $0x94] sm:$0xff]
    %v5658 = vld [vmem:[#allocation15 + $0x9c] sm:$0xff]
    %v5659 = vld [vmem:[#allocation15 + $0xa4] sm:$0xf]
    %v5660 = vld [vmem:[#allocation15 + $0xa8] sm:$0xff]
    %v5661 = vld [vmem:[#allocation15 + $0xb0] sm:$0xff]
    %v5662 = vld [vmem:[#allocation15 + $0xb8] sm:$0xff]
    %v5663 = vld [vmem:[#allocation15 + $0xc0] sm:$0xf]
    %v5664 = vld [vmem:[#allocation15 + $0xc4] sm:$0xff]
    %v5665 = vld [vmem:[#allocation15 + $0xcc] sm:$0xff]
    %v5666 = vld [vmem:[#allocation15 + $0xd4] sm:$0xff]
    %v5667 = vld [vmem:[#allocation15 + $0xdc] sm:$0xf]
    %v5668 = vld [vmem:[#allocation15 + $0xe0] sm:$0xff]
    %v5669 = vld [vmem:[#allocation15 + $0xe8] sm:$0xff]
    %v5670 = vld [vmem:[#allocation15 + $0xf0] sm:$0xff]
    %v5671 = vld [vmem:[#allocation15 + $0xf8] sm:$0xf]
    %v5672 = vld [vmem:[#allocation15 + $0xfc] sm:$0xff]
    %v5673 = vld [vmem:[#allocation15 + $0x104] sm:$0xff]
    %v5674 = vld [vmem:[#allocation15 + $0x10c] sm:$0xff]
    %v5675 = vld [vmem:[#allocation15 + $0x114] sm:$0xf]
    %v5676 = vld [vmem:[#allocation15 + $0x118] sm:$0xff]
    %v5677 = vld [vmem:[#allocation15 + $0x120] sm:$0xff]
    %v5678 = vld [vmem:[#allocation15 + $0x128] sm:$0xff]
    %v5679 = vld [vmem:[#allocation15 + $0x130] sm:$0xf]
    %v5680 = vld [vmem:[#allocation15 + $0x134] sm:$0xff]
    %v5681 = vld [vmem:[#allocation15 + $0x13c] sm:$0xff]
    %v5682 = vld [vmem:[#allocation15 + $0x144] sm:$0xff]
    %v5683 = vld [vmem:[#allocation15 + $0x14c] sm:$0xf]
    %v5684 = vld [vmem:[#allocation15 + $0x150] sm:$0xff]
    %v5685 = vld [vmem:[#allocation15 + $0x158] sm:$0xff]
    %v5686 = vld [vmem:[#allocation15 + $0x160] sm:$0xff]
    %v5687 = vld [vmem:[#allocation15 + $0x168] sm:$0xf]
    %v5688 = vld [vmem:[#allocation15 + $0x16c] sm:$0xff]
    %v5689 = vld [vmem:[#allocation15 + $0x174] sm:$0xff]
    %v5690 = vld [vmem:[#allocation15 + $0x17c] sm:$0xff]
    %v5691 = vld [vmem:[#allocation15 + $0x184] sm:$0xf]
    %v5692 = vld [vmem:[#allocation15 + $0x188] sm:$0xff]
    %v5693 = vld [vmem:[#allocation15 + $0x190] sm:$0xff]
    %v5694 = vld [vmem:[#allocation15 + $0x198] sm:$0xff]
    %v5695 = vld [vmem:[#allocation15 + $0x1a0] sm:$0xf]
    %v5696 = vld [vmem:[#allocation15 + $0x1a4] sm:$0xff]
    %v5697 = vld [vmem:[#allocation15 + $0x1ac] sm:$0xff]
    %v5698 = vld [vmem:[#allocation15 + $0x1b4] sm:$0xff]
    %v5699 = vld [vmem:[#allocation15 + $0x1bc] sm:$0xf]
    %v5700 = vld [vmem:[#allocation15 + $0x1c0] sm:$0xff]
    %v5701 = vld [vmem:[#allocation15 + $0x1c8] sm:$0xff]
    %v5702 = vld [vmem:[#allocation15 + $0x1d0] sm:$0xff]
    %v5703 = vld [vmem:[#allocation15 + $0x1d8] sm:$0xf]
    %v5704 = vld [vmem:[#allocation15 + $0x1dc] sm:$0xff]
    %v5705 = vld [vmem:[#allocation15 + $0x1e4] sm:$0xff]
    %v5706 = vld [vmem:[#allocation15 + $0x1ec] sm:$0xff]
    %v5707 = vld [vmem:[#allocation15 + $0x1f4] sm:$0xf]
    %v5708 = vld [vmem:[#allocation15 + $0x1f8] sm:$0xff]
    %v5709 = vld [vmem:[#allocation15 + $0x200] sm:$0xff]
    %v5710 = vld [vmem:[#allocation15 + $0x208] sm:$0xff]
    %v5711 = vld [vmem:[#allocation15 + $0x210] sm:$0xf]
    %v5712 = vld [vmem:[#allocation15 + $0x214] sm:$0xff]
    %v5713 = vld [vmem:[#allocation15 + $0x21c] sm:$0xff]
    %v5714 = vld [vmem:[#allocation15 + $0x224] sm:$0xff]
    %v5715 = vld [vmem:[#allocation15 + $0x22c] sm:$0xf]
    %v5716 = vld [vmem:[#allocation15 + $0x230] sm:$0xff]
    %v5717 = vld [vmem:[#allocation15 + $0x238] sm:$0xff]
    %v5718 = vld [vmem:[#allocation15 + $0x240] sm:$0xff]
    %v5719 = vld [vmem:[#allocation15 + $0x248] sm:$0xf]
    %v5720 = vld [vmem:[#allocation15 + $0x24c] sm:$0xff]
    %v5721 = vld [vmem:[#allocation15 + $0x254] sm:$0xff]
    %v5722 = vld [vmem:[#allocation15 + $0x25c] sm:$0xff]
    %v5723 = vld [vmem:[#allocation15 + $0x264] sm:$0xf]
    %v5724 = vld [vmem:[#allocation15 + $0x268] sm:$0xff]
    %v5725 = vld [vmem:[#allocation15 + $0x270] sm:$0xff]
    %v5726 = vld [vmem:[#allocation15 + $0x278] sm:$0xff]
    %v5727 = vld [vmem:[#allocation15 + $0x280] sm:$0xf]
    %v5728 = vld [vmem:[#allocation15 + $0x284] sm:$0xff]
    %v5729 = vld [vmem:[#allocation15 + $0x28c] sm:$0xff]
    %v5730 = vld [vmem:[#allocation15 + $0x294] sm:$0xff]
    %v5731 = vld [vmem:[#allocation15 + $0x29c] sm:$0xf]
    %v5732 = vld [vmem:[#allocation15 + $0x2a0] sm:$0xff]
    %v5733 = vld [vmem:[#allocation15 + $0x2a8] sm:$0xff]
    %v5734 = vld [vmem:[#allocation15 + $0x2b0] sm:$0xff]
    %v5735 = vld [vmem:[#allocation15 + $0x2b8] sm:$0xf]
    %v5736 = vld [vmem:[#allocation15 + $0x2bc] sm:$0xff]
    %v5737 = vld [vmem:[#allocation15 + $0x2c4] sm:$0xff]
    %v5738 = vld [vmem:[#allocation15 + $0x2cc] sm:$0xff]
    %v5739 = vld [vmem:[#allocation15 + $0x2d4] sm:$0xf]
    %v5740 = vld [vmem:[#allocation15 + $0x2d8] sm:$0xff]
    %v5741 = vld [vmem:[#allocation15 + $0x2e0] sm:$0xff]
    %v5742 = vld [vmem:[#allocation15 + $0x2e8] sm:$0xff]
    %v5743 = vld [vmem:[#allocation15 + $0x2f0] sm:$0xf]
    %v5744 = vld [vmem:[#allocation15 + $0x2f4] sm:$0xff]
    %v5745 = vld [vmem:[#allocation15 + $0x2fc] sm:$0xff]
    %v5746 = vld [vmem:[#allocation15 + $0x304] sm:$0xff]
    %v5747 = vld [vmem:[#allocation15 + $0x30c] sm:$0xf]
    %v5748 = vld [vmem:[#allocation15 + $0x310] sm:$0xff]
    %v5749 = vld [vmem:[#allocation15 + $0x318] sm:$0xff]
    %v5750 = vld [vmem:[#allocation15 + $0x320] sm:$0xff]
    %v5751 = vld [vmem:[#allocation15 + $0x328] sm:$0xf]
    %v5752 = vld [vmem:[#allocation15 + $0x32c] sm:$0xff]
    %v5753 = vld [vmem:[#allocation15 + $0x334] sm:$0xff]
    %v5754 = vld [vmem:[#allocation15 + $0x33c] sm:$0xff]
    %v5755 = vld [vmem:[#allocation15 + $0x344] sm:$0xf]
    %v5756 = vld [vmem:[#allocation15 + $0x348] sm:$0xff]
    %v5757 = vld [vmem:[#allocation15 + $0x350] sm:$0xff]
    %v5758 = vld [vmem:[#allocation15 + $0x358] sm:$0xff]
    %v5759 = vld [vmem:[#allocation15 + $0x360] sm:$0xf]
    %v5760 = vld [vmem:[#allocation15 + $0x364] sm:$0xff]
    %v5761 = vld [vmem:[#allocation15 + $0x36c] sm:$0xff]
    %v5762 = vld [vmem:[#allocation15 + $0x374] sm:$0xff]
    %v5763 = vld [vmem:[#allocation15 + $0x37c] sm:$0xf]
    %v5764 = vld [vmem:[#allocation15 + $0x380] sm:$0xff]
    %v5765 = vld [vmem:[#allocation15 + $0x388] sm:$0xff]
    %v5766 = vld [vmem:[#allocation15 + $0x390] sm:$0xff]
    %v5767 = vld [vmem:[#allocation15 + $0x398] sm:$0xf]
    %v5768 = vld [vmem:[#allocation15 + $0x39c] sm:$0xff]
    %v5769 = vld [vmem:[#allocation15 + $0x3a4] sm:$0xff]
    %v5770 = vld [vmem:[#allocation15 + $0x3ac] sm:$0xff]
    %v5771 = vld [vmem:[#allocation15 + $0x3b4] sm:$0xf]
    %v5772 = vld [vmem:[#allocation15 + $0x3b8] sm:$0xff]
    %v5773 = vld [vmem:[#allocation15 + $0x3c0] sm:$0xff]
    %v5774 = vld [vmem:[#allocation15 + $0x3c8] sm:$0xff]
    %v5775 = vld [vmem:[#allocation15 + $0x3d0] sm:$0xf]
    %v5776 = vld [vmem:[#allocation15 + $0x3d4] sm:$0xff]
    %v5777 = vld [vmem:[#allocation15 + $0x3dc] sm:$0xff]
    %v5778 = vld [vmem:[#allocation15 + $0x3e4] sm:$0xff]
    %v5779 = vld [vmem:[#allocation15 + $0x3ec] sm:$0xf]
    %v5780 = vld [vmem:[#allocation15 + $0x3f0] sm:$0xff]
    %v5781 = vld [vmem:[#allocation15 + $0x3f8] sm:$0xff]
    %v5782 = vld [vmem:[#allocation15 + $0x400] sm:$0xff]
    %v5783 = vld [vmem:[#allocation15 + $0x408] sm:$0xf]
    %v5784 = vld [vmem:[#allocation15 + $0x40c] sm:$0xff]
    %v5785 = vld [vmem:[#allocation15 + $0x414] sm:$0xff]
    %v5786 = vld [vmem:[#allocation15 + $0x41c] sm:$0xff]
    %v5787 = vld [vmem:[#allocation15 + $0x424] sm:$0xf]
    %v5788 = vld [vmem:[#allocation15 + $0x428] sm:$0xff]
    %v5789 = vld [vmem:[#allocation15 + $0x430] sm:$0xff]
    %v5790 = vld [vmem:[#allocation15 + $0x438] sm:$0xff]
    %v5791 = vld [vmem:[#allocation15 + $0x440] sm:$0xf]
    %v5792 = vld [vmem:[#allocation15 + $0x444] sm:$0xff]
    %v5793 = vld [vmem:[#allocation15 + $0x44c] sm:$0xff]
    %v5794 = vld [vmem:[#allocation15 + $0x454] sm:$0xff]
    %v5795 = vld [vmem:[#allocation15 + $0x45c] sm:$0xf]
    %v5796 = vld [vmem:[#allocation15 + $0x460] sm:$0xff]
    %v5797 = vld [vmem:[#allocation15 + $0x468] sm:$0xff]
    %v5798 = vld [vmem:[#allocation15 + $0x470] sm:$0xff]
    %v5799 = vld [vmem:[#allocation15 + $0x478] sm:$0xf]
    %v5800 = vld [vmem:[#allocation15 + $0x47c] sm:$0xff]
    %v5801 = vld [vmem:[#allocation15 + $0x484] sm:$0xff]
    %v5802 = vld [vmem:[#allocation15 + $0x48c] sm:$0xff]
    %v5803 = vld [vmem:[#allocation15 + $0x494] sm:$0xf]
    %v5804 = vld [vmem:[#allocation15 + $0x498] sm:$0xff]
    %v5805 = vld [vmem:[#allocation15 + $0x4a0] sm:$0xff]
    %v5806 = vld [vmem:[#allocation15 + $0x4a8] sm:$0xff]
    %v5807 = vld [vmem:[#allocation15 + $0x4b0] sm:$0xf]
    %v5808 = vld [vmem:[#allocation15 + $0x4b4] sm:$0xff]
    %v5809 = vld [vmem:[#allocation15 + $0x4bc] sm:$0xff]
    %v5810 = vld [vmem:[#allocation15 + $0x4c4] sm:$0xff]
    %v5811 = vld [vmem:[#allocation15 + $0x4cc] sm:$0xf]
    %v5812 = vld [vmem:[#allocation15 + $0x4d0] sm:$0xff]
    %v5813 = vld [vmem:[#allocation15 + $0x4d8] sm:$0xff]
    %v5814 = vld [vmem:[#allocation15 + $0x4e0] sm:$0xff]
    %v5815 = vld [vmem:[#allocation15 + $0x4e8] sm:$0xf]
    %v5816 = vld [vmem:[#allocation15 + $0x4ec] sm:$0xff]
    %v5817 = vld [vmem:[#allocation15 + $0x4f4] sm:$0xff]
    %v5818 = vld [vmem:[#allocation15 + $0x4fc] sm:$0xff]
    %v5819 = vld [vmem:[#allocation15 + $0x504] sm:$0xf]
    %v5820 = vld [vmem:[#allocation15 + $0x508] sm:$0xff]
    %v5821 = vld [vmem:[#allocation15 + $0x510] sm:$0xff]
    %v5822 = vld [vmem:[#allocation15 + $0x518] sm:$0xff]
    %v5823 = vld [vmem:[#allocation15 + $0x520] sm:$0xf]
    %v5824 = vld [vmem:[#allocation15 + $0x524] sm:$0xff]
    %v5825 = vld [vmem:[#allocation15 + $0x52c] sm:$0xff]
    %v5826 = vld [vmem:[#allocation15 + $0x534] sm:$0xff]
    %v5827 = vld [vmem:[#allocation15 + $0x53c] sm:$0xf]
    %v5828 = vld [vmem:[#allocation15 + $0x540] sm:$0xff]
    %v5829 = vld [vmem:[#allocation15 + $0x548] sm:$0xff]
    %v5830 = vld [vmem:[#allocation15 + $0x550] sm:$0xff]
    %v5831 = vld [vmem:[#allocation15 + $0x558] sm:$0xf]
    %v5832 = vld [vmem:[#allocation15 + $0x55c] sm:$0xff]
    %v5833 = vld [vmem:[#allocation15 + $0x564] sm:$0xff]
    %v5834 = vld [vmem:[#allocation15 + $0x56c] sm:$0xff]
    %v5835 = vld [vmem:[#allocation15 + $0x574] sm:$0xf]
    %v5836 = vld [vmem:[#allocation15 + $0x578] sm:$0xff]
    %v5837 = vld [vmem:[#allocation15 + $0x580] sm:$0xff]
    %v5838 = vld [vmem:[#allocation15 + $0x588] sm:$0xff]
    %v5839 = vld [vmem:[#allocation15 + $0x590] sm:$0xf]
    %v5840 = vld [vmem:[#allocation15 + $0x594] sm:$0xff]
    %v5841 = vld [vmem:[#allocation15 + $0x59c] sm:$0xff]
    %v5842 = vld [vmem:[#allocation15 + $0x5a4] sm:$0xff]
    %v5843 = vld [vmem:[#allocation15 + $0x5ac] sm:$0xf]
    %v5844 = vld [vmem:[#allocation15 + $0x5b0] sm:$0xff]
    %v5845 = vld [vmem:[#allocation15 + $0x5b8] sm:$0xff]
    %v5846 = vld [vmem:[#allocation15 + $0x5c0] sm:$0xff]
    %v5847 = vld [vmem:[#allocation15 + $0x5c8] sm:$0xf]
    %v5848 = vld [vmem:[#allocation15 + $0x5cc] sm:$0xff]
    %v5849 = vld [vmem:[#allocation15 + $0x5d4] sm:$0xff]
    %v5850 = vld [vmem:[#allocation15 + $0x5dc] sm:$0xff]
    %v5851 = vld [vmem:[#allocation15 + $0x5e4] sm:$0xf]
    %v5852 = vld [vmem:[#allocation15 + $0x5e8] sm:$0xff]
    %v5853 = vld [vmem:[#allocation15 + $0x5f0] sm:$0xff]
    %v5854 = vld [vmem:[#allocation15 + $0x5f8] sm:$0xff]
    %v5855 = vld [vmem:[#allocation15 + $0x600] sm:$0xf]
    %v5856 = vld [vmem:[#allocation15 + $0x604] sm:$0xff]
    %v5857 = vld [vmem:[#allocation15 + $0x60c] sm:$0xff]
    %v5858 = vld [vmem:[#allocation15 + $0x614] sm:$0xff]
    %v5859 = vld [vmem:[#allocation15 + $0x61c] sm:$0xf]
    %v5860 = vld [vmem:[#allocation15 + $0x620] sm:$0xff]
    %v5861 = vld [vmem:[#allocation15 + $0x628] sm:$0xff]
    %v5862 = vld [vmem:[#allocation15 + $0x630] sm:$0xff]
    %v5863 = vld [vmem:[#allocation15 + $0x638] sm:$0xf]
    %v5864 = vld [vmem:[#allocation15 + $0x63c] sm:$0xff]
    %v5865 = vld [vmem:[#allocation15 + $0x644] sm:$0xff]
    %v5866 = vld [vmem:[#allocation15 + $0x64c] sm:$0xff]
    %v5867 = vld [vmem:[#allocation15 + $0x654] sm:$0xf]
    %v5868 = vld [vmem:[#allocation15 + $0x658] sm:$0xff]
    %v5869 = vld [vmem:[#allocation15 + $0x660] sm:$0xff]
    %v5870 = vld [vmem:[#allocation15 + $0x668] sm:$0xff]
    %v5871 = vld [vmem:[#allocation15 + $0x670] sm:$0xf]
    %v5872 = vld [vmem:[#allocation15 + $0x674] sm:$0xff]
    %v5873 = vld [vmem:[#allocation15 + $0x67c] sm:$0xff]
    %v5874 = vld [vmem:[#allocation15 + $0x684] sm:$0xff]
    %v5875 = vld [vmem:[#allocation15 + $0x68c] sm:$0xf]
    %v5876 = vld [vmem:[#allocation15 + $0x690] sm:$0xff]
    %v5877 = vld [vmem:[#allocation15 + $0x698] sm:$0xff]
    %v5878 = vld [vmem:[#allocation15 + $0x6a0] sm:$0xff]
    %v5879 = vld [vmem:[#allocation15 + $0x6a8] sm:$0xf]
    %v5880 = vld [vmem:[#allocation15 + $0x6ac] sm:$0xff]
    %v5881 = vld [vmem:[#allocation15 + $0x6b4] sm:$0xff]
    %v5882 = vld [vmem:[#allocation15 + $0x6bc] sm:$0xff]
    %v5883 = vld [vmem:[#allocation15 + $0x6c4] sm:$0xf]
    %v5884 = vld [vmem:[#allocation15 + $0x6c8] sm:$0xff]
    %v5885 = vld [vmem:[#allocation15 + $0x6d0] sm:$0xff]
    %v5886 = vld [vmem:[#allocation15 + $0x6d8] sm:$0xff]
    %v5887 = vld [vmem:[#allocation15 + $0x6e0] sm:$0xf]
    %v5888 = vld [vmem:[#allocation15 + $0x6e4] sm:$0xff]
    %v5889 = vld [vmem:[#allocation15 + $0x6ec] sm:$0xff]
    %v5890 = vld [vmem:[#allocation15 + $0x6f4] sm:$0xff]
    %v5891 = vld [vmem:[#allocation15 + $0x6fc] sm:$0xf]
    %v5892 = vld [vmem:[%s20] sm:$0xff]
    %v5893 = vpack.c.bf16 %v5632, %v5632
    %v5894 = vpack.c.bf16 %v5633, %v5633
    %v5895 = vpack.c.bf16 %v5634, %v5634
    %v5896 = vpack.c.bf16 %v5635, %v5635
    %v5898 = vlaneseq
    %v5899 = vshrl.u32 %v5898, 7
    %v5900 = vsub.s32 0, %v5899
    %v5901 = vrot.slane %v5892, %v5900
    %v5902 = vlaneseq
    %v5903 = vshrl.u32 %v5902, 7
    %v5904 = vsub.s32 1, %v5903
    %v5905 = vrot.slane %v5892, %v5904
    %v5906 = vlaneseq
    %v5907 = vshrl.u32 %v5906, 7
    %v5908 = vsub.s32 2, %v5907
    %v5909 = vrot.slane %v5892, %v5908
    %v5910 = vlaneseq
    %v5911 = vshrl.u32 %v5910, 7
    %v5912 = vsub.s32 3, %v5911
    %v5913 = vrot.slane %v5892, %v5912
    %v5914 = vlaneseq
    %v5915 = vshrl.u32 %v5914, 7
    %v5916 = vsub.s32 4, %v5915
    %v5917 = vrot.slane %v5892, %v5916
    %v5918 = vlaneseq
    %v5919 = vshrl.u32 %v5918, 7
    %v5920 = vsub.s32 5, %v5919
    %v5921 = vrot.slane %v5892, %v5920
    %v5922 = vlaneseq
    %v5923 = vshrl.u32 %v5922, 7
    %v5924 = vsub.s32 6, %v5923
    %v5925 = vrot.slane %v5892, %v5924
    %v6189 = vunpack.c.l.b16 %v5636
    %v6190 = vunpack.c.h.b16 %v5636
    %v6191 = vunpack.c.l.b16 %v5637
    %v6192 = vunpack.c.h.b16 %v5637
    %v6193 = vunpack.c.l.b16 %v5638
    %v6194 = vunpack.c.h.b16 %v5638
    %v6195 = vunpack.c.l.b16 %v5639
    %v6196 = vunpack.c.l.b16 %v5640
    %v6197 = vunpack.c.h.b16 %v5640
    %v6198 = vunpack.c.l.b16 %v5641
    %v6199 = vunpack.c.h.b16 %v5641
    %v6200 = vunpack.c.l.b16 %v5642
    %v6201 = vunpack.c.h.b16 %v5642
    %v6202 = vunpack.c.l.b16 %v5643
    %v6203 = vunpack.c.l.b16 %v5644
    %v6204 = vunpack.c.h.b16 %v5644
    %v6205 = vunpack.c.l.b16 %v5645
    %v6206 = vunpack.c.h.b16 %v5645
    %v6207 = vunpack.c.l.b16 %v5646
    %v6208 = vunpack.c.h.b16 %v5646
    %v6209 = vunpack.c.l.b16 %v5647
    %v6210 = vunpack.c.l.b16 %v5648
    %v6211 = vunpack.c.h.b16 %v5648
    %v6212 = vunpack.c.l.b16 %v5649
    %v6213 = vunpack.c.h.b16 %v5649
    %v6214 = vunpack.c.l.b16 %v5650
    %v6215 = vunpack.c.h.b16 %v5650
    %v6216 = vunpack.c.l.b16 %v5651
    %v6217 = vunpack.c.l.b16 %v5652
    %v6218 = vunpack.c.h.b16 %v5652
    %v6219 = vunpack.c.l.b16 %v5653
    %v6220 = vunpack.c.h.b16 %v5653
    %v6221 = vunpack.c.l.b16 %v5654
    %v6222 = vunpack.c.h.b16 %v5654
    %v6223 = vunpack.c.l.b16 %v5655
    %v6224 = vunpack.c.l.b16 %v5656
    %v6225 = vunpack.c.h.b16 %v5656
    %v6226 = vunpack.c.l.b16 %v5657
    %v6227 = vunpack.c.h.b16 %v5657
    %v6228 = vunpack.c.l.b16 %v5658
    %v6229 = vunpack.c.h.b16 %v5658
    %v6230 = vunpack.c.l.b16 %v5659
    %v6231 = vunpack.c.l.b16 %v5660
    %v6232 = vunpack.c.h.b16 %v5660
    %v6233 = vunpack.c.l.b16 %v5661
    %v6234 = vunpack.c.h.b16 %v5661
    %v6235 = vunpack.c.l.b16 %v5662
    %v6236 = vunpack.c.h.b16 %v5662
    %v6237 = vunpack.c.l.b16 %v5663
    %v6238 = vunpack.c.l.b16 %v5664
    %v6239 = vunpack.c.h.b16 %v5664
    %v6240 = vunpack.c.l.b16 %v5665
    %v6241 = vunpack.c.h.b16 %v5665
    %v6242 = vunpack.c.l.b16 %v5666
    %v6243 = vunpack.c.h.b16 %v5666
    %v6244 = vunpack.c.l.b16 %v5667
    %v6245 = vunpack.c.l.b16 %v5668
    %v6246 = vunpack.c.h.b16 %v5668
    %v6247 = vunpack.c.l.b16 %v5669
    %v6248 = vunpack.c.h.b16 %v5669
    %v6249 = vunpack.c.l.b16 %v5670
    %v6250 = vunpack.c.h.b16 %v5670
    %v6251 = vunpack.c.l.b16 %v5671
    %v6252 = vunpack.c.l.b16 %v5672
    %v6253 = vunpack.c.h.b16 %v5672
    %v6254 = vunpack.c.l.b16 %v5673
    %v6255 = vunpack.c.h.b16 %v5673
    %v6256 = vunpack.c.l.b16 %v5674
    %v6257 = vunpack.c.h.b16 %v5674
    %v6258 = vunpack.c.l.b16 %v5675
    %v6259 = vunpack.c.l.b16 %v5676
    %v6260 = vunpack.c.h.b16 %v5676
    %v6261 = vunpack.c.l.b16 %v5677
    %v6262 = vunpack.c.h.b16 %v5677
    %v6263 = vunpack.c.l.b16 %v5678
    %v6264 = vunpack.c.h.b16 %v5678
    %v6265 = vunpack.c.l.b16 %v5679
    %v6266 = vunpack.c.l.b16 %v5680
    %v6267 = vunpack.c.h.b16 %v5680
    %v6268 = vunpack.c.l.b16 %v5681
    %v6269 = vunpack.c.h.b16 %v5681
    %v6270 = vunpack.c.l.b16 %v5682
    %v6271 = vunpack.c.h.b16 %v5682
    %v6272 = vunpack.c.l.b16 %v5683
    %v6273 = vunpack.c.l.b16 %v5684
    %v6274 = vunpack.c.h.b16 %v5684
    %v6275 = vunpack.c.l.b16 %v5685
    %v6276 = vunpack.c.h.b16 %v5685
    %v6277 = vunpack.c.l.b16 %v5686
    %v6278 = vunpack.c.h.b16 %v5686
    %v6279 = vunpack.c.l.b16 %v5687
    %v6280 = vunpack.c.l.b16 %v5688
    %v6281 = vunpack.c.h.b16 %v5688
    %v6282 = vunpack.c.l.b16 %v5689
    %v6283 = vunpack.c.h.b16 %v5689
    %v6284 = vunpack.c.l.b16 %v5690
    %v6285 = vunpack.c.h.b16 %v5690
    %v6286 = vunpack.c.l.b16 %v5691
    %v6287 = vunpack.c.l.b16 %v5692
    %v6288 = vunpack.c.h.b16 %v5692
    %v6289 = vunpack.c.l.b16 %v5693
    %v6290 = vunpack.c.h.b16 %v5693
    %v6291 = vunpack.c.l.b16 %v5694
    %v6292 = vunpack.c.h.b16 %v5694
    %v6293 = vunpack.c.l.b16 %v5695
    %v6294 = vunpack.c.l.b16 %v5696
    %v6295 = vunpack.c.h.b16 %v5696
    %v6296 = vunpack.c.l.b16 %v5697
    %v6297 = vunpack.c.h.b16 %v5697
    %v6298 = vunpack.c.l.b16 %v5698
    %v6299 = vunpack.c.h.b16 %v5698
    %v6300 = vunpack.c.l.b16 %v5699
    %v6301 = vunpack.c.l.b16 %v5700
    %v6302 = vunpack.c.h.b16 %v5700
    %v6303 = vunpack.c.l.b16 %v5701
    %v6304 = vunpack.c.h.b16 %v5701
    %v6305 = vunpack.c.l.b16 %v5702
    %v6306 = vunpack.c.h.b16 %v5702
    %v6307 = vunpack.c.l.b16 %v5703
    %v6308 = vunpack.c.l.b16 %v5704
    %v6309 = vunpack.c.h.b16 %v5704
    %v6310 = vunpack.c.l.b16 %v5705
    %v6311 = vunpack.c.h.b16 %v5705
    %v6312 = vunpack.c.l.b16 %v5706
    %v6313 = vunpack.c.h.b16 %v5706
    %v6314 = vunpack.c.l.b16 %v5707
    %v6315 = vunpack.c.l.b16 %v5708
    %v6316 = vunpack.c.h.b16 %v5708
    %v6317 = vunpack.c.l.b16 %v5709
    %v6318 = vunpack.c.h.b16 %v5709
    %v6319 = vunpack.c.l.b16 %v5710
    %v6320 = vunpack.c.h.b16 %v5710
    %v6321 = vunpack.c.l.b16 %v5711
    %v6322 = vunpack.c.l.b16 %v5712
    %v6323 = vunpack.c.h.b16 %v5712
    %v6324 = vunpack.c.l.b16 %v5713
    %v6325 = vunpack.c.h.b16 %v5713
    %v6326 = vunpack.c.l.b16 %v5714
    %v6327 = vunpack.c.h.b16 %v5714
    %v6328 = vunpack.c.l.b16 %v5715
    %v6329 = vunpack.c.l.b16 %v5716
    %v6330 = vunpack.c.h.b16 %v5716
    %v6331 = vunpack.c.l.b16 %v5717
    %v6332 = vunpack.c.h.b16 %v5717
    %v6333 = vunpack.c.l.b16 %v5718
    %v6334 = vunpack.c.h.b16 %v5718
    %v6335 = vunpack.c.l.b16 %v5719
    %v6336 = vunpack.c.l.b16 %v5720
    %v6337 = vunpack.c.h.b16 %v5720
    %v6338 = vunpack.c.l.b16 %v5721
    %v6339 = vunpack.c.h.b16 %v5721
    %v6340 = vunpack.c.l.b16 %v5722
    %v6341 = vunpack.c.h.b16 %v5722
    %v6342 = vunpack.c.l.b16 %v5723
    %v6343 = vunpack.c.l.b16 %v5724
    %v6344 = vunpack.c.h.b16 %v5724
    %v6345 = vunpack.c.l.b16 %v5725
    %v6346 = vunpack.c.h.b16 %v5725
    %v6347 = vunpack.c.l.b16 %v5726
    %v6348 = vunpack.c.h.b16 %v5726
    %v6349 = vunpack.c.l.b16 %v5727
    %v6350 = vunpack.c.l.b16 %v5728
    %v6351 = vunpack.c.h.b16 %v5728
    %v6352 = vunpack.c.l.b16 %v5729
    %v6353 = vunpack.c.h.b16 %v5729
    %v6354 = vunpack.c.l.b16 %v5730
    %v6355 = vunpack.c.h.b16 %v5730
    %v6356 = vunpack.c.l.b16 %v5731
    %v6357 = vunpack.c.l.b16 %v5732
    %v6358 = vunpack.c.h.b16 %v5732
    %v6359 = vunpack.c.l.b16 %v5733
    %v6360 = vunpack.c.h.b16 %v5733
    %v6361 = vunpack.c.l.b16 %v5734
    %v6362 = vunpack.c.h.b16 %v5734
    %v6363 = vunpack.c.l.b16 %v5735
    %v6364 = vunpack.c.l.b16 %v5736
    %v6365 = vunpack.c.h.b16 %v5736
    %v6366 = vunpack.c.l.b16 %v5737
    %v6367 = vunpack.c.h.b16 %v5737
    %v6368 = vunpack.c.l.b16 %v5738
    %v6369 = vunpack.c.h.b16 %v5738
    %v6370 = vunpack.c.l.b16 %v5739
    %v6371 = vunpack.c.l.b16 %v5740
    %v6372 = vunpack.c.h.b16 %v5740
    %v6373 = vunpack.c.l.b16 %v5741
    %v6374 = vunpack.c.h.b16 %v5741
    %v6375 = vunpack.c.l.b16 %v5742
    %v6376 = vunpack.c.h.b16 %v5742
    %v6377 = vunpack.c.l.b16 %v5743
    %v6378 = vunpack.c.l.b16 %v5744
    %v6379 = vunpack.c.h.b16 %v5744
    %v6380 = vunpack.c.l.b16 %v5745
    %v6381 = vunpack.c.h.b16 %v5745
    %v6382 = vunpack.c.l.b16 %v5746
    %v6383 = vunpack.c.h.b16 %v5746
    %v6384 = vunpack.c.l.b16 %v5747
    %v6385 = vunpack.c.l.b16 %v5748
    %v6386 = vunpack.c.h.b16 %v5748
    %v6387 = vunpack.c.l.b16 %v5749
    %v6388 = vunpack.c.h.b16 %v5749
    %v6389 = vunpack.c.l.b16 %v5750
    %v6390 = vunpack.c.h.b16 %v5750
    %v6391 = vunpack.c.l.b16 %v5751
    %v6392 = vunpack.c.l.b16 %v5752
    %v6393 = vunpack.c.h.b16 %v5752
    %v6394 = vunpack.c.l.b16 %v5753
    %v6395 = vunpack.c.h.b16 %v5753
    %v6396 = vunpack.c.l.b16 %v5754
    %v6397 = vunpack.c.h.b16 %v5754
    %v6398 = vunpack.c.l.b16 %v5755
    %v6399 = vunpack.c.l.b16 %v5756
    %v6400 = vunpack.c.h.b16 %v5756
    %v6401 = vunpack.c.l.b16 %v5757
    %v6402 = vunpack.c.h.b16 %v5757
    %v6403 = vunpack.c.l.b16 %v5758
    %v6404 = vunpack.c.h.b16 %v5758
    %v6405 = vunpack.c.l.b16 %v5759
    %v6406 = vunpack.c.l.b16 %v5760
    %v6407 = vunpack.c.h.b16 %v5760
    %v6408 = vunpack.c.l.b16 %v5761
    %v6409 = vunpack.c.h.b16 %v5761
    %v6410 = vunpack.c.l.b16 %v5762
    %v6411 = vunpack.c.h.b16 %v5762
    %v6412 = vunpack.c.l.b16 %v5763
    %v6413 = vunpack.c.l.b16 %v5764
    %v6414 = vunpack.c.h.b16 %v5764
    %v6415 = vunpack.c.l.b16 %v5765
    %v6416 = vunpack.c.h.b16 %v5765
    %v6417 = vunpack.c.l.b16 %v5766
    %v6418 = vunpack.c.h.b16 %v5766
    %v6419 = vunpack.c.l.b16 %v5767
    %v6420 = vunpack.c.l.b16 %v5768
    %v6421 = vunpack.c.h.b16 %v5768
    %v6422 = vunpack.c.l.b16 %v5769
    %v6423 = vunpack.c.h.b16 %v5769
    %v6424 = vunpack.c.l.b16 %v5770
    %v6425 = vunpack.c.h.b16 %v5770
    %v6426 = vunpack.c.l.b16 %v5771
    %v6427 = vunpack.c.l.b16 %v5772
    %v6428 = vunpack.c.h.b16 %v5772
    %v6429 = vunpack.c.l.b16 %v5773
    %v6430 = vunpack.c.h.b16 %v5773
    %v6431 = vunpack.c.l.b16 %v5774
    %v6432 = vunpack.c.h.b16 %v5774
    %v6433 = vunpack.c.l.b16 %v5775
    %v6434 = vunpack.c.l.b16 %v5776
    %v6435 = vunpack.c.h.b16 %v5776
    %v6436 = vunpack.c.l.b16 %v5777
    %v6437 = vunpack.c.h.b16 %v5777
    %v6438 = vunpack.c.l.b16 %v5778
    %v6439 = vunpack.c.h.b16 %v5778
    %v6440 = vunpack.c.l.b16 %v5779
    %v6441 = vunpack.c.l.b16 %v5780
    %v6442 = vunpack.c.h.b16 %v5780
    %v6443 = vunpack.c.l.b16 %v5781
    %v6444 = vunpack.c.h.b16 %v5781
    %v6445 = vunpack.c.l.b16 %v5782
    %v6446 = vunpack.c.h.b16 %v5782
    %v6447 = vunpack.c.l.b16 %v5783
    %v6448 = vunpack.c.l.b16 %v5784
    %v6449 = vunpack.c.h.b16 %v5784
    %v6450 = vunpack.c.l.b16 %v5785
    %v6451 = vunpack.c.h.b16 %v5785
    %v6452 = vunpack.c.l.b16 %v5786
    %v6453 = vunpack.c.h.b16 %v5786
    %v6454 = vunpack.c.l.b16 %v5787
    %v6455 = vunpack.c.l.b16 %v5788
    %v6456 = vunpack.c.h.b16 %v5788
    %v6457 = vunpack.c.l.b16 %v5789
    %v6458 = vunpack.c.h.b16 %v5789
    %v6459 = vunpack.c.l.b16 %v5790
    %v6460 = vunpack.c.h.b16 %v5790
    %v6461 = vunpack.c.l.b16 %v5791
    %v6462 = vunpack.c.l.b16 %v5792
    %v6463 = vunpack.c.h.b16 %v5792
    %v6464 = vunpack.c.l.b16 %v5793
    %v6465 = vunpack.c.h.b16 %v5793
    %v6466 = vunpack.c.l.b16 %v5794
    %v6467 = vunpack.c.h.b16 %v5794
    %v6468 = vunpack.c.l.b16 %v5795
    %v6469 = vunpack.c.l.b16 %v5796
    %v6470 = vunpack.c.h.b16 %v5796
    %v6471 = vunpack.c.l.b16 %v5797
    %v6472 = vunpack.c.h.b16 %v5797
    %v6473 = vunpack.c.l.b16 %v5798
    %v6474 = vunpack.c.h.b16 %v5798
    %v6475 = vunpack.c.l.b16 %v5799
    %v6476 = vunpack.c.l.b16 %v5800
    %v6477 = vunpack.c.h.b16 %v5800
    %v6478 = vunpack.c.l.b16 %v5801
    %v6479 = vunpack.c.h.b16 %v5801
    %v6480 = vunpack.c.l.b16 %v5802
    %v6481 = vunpack.c.h.b16 %v5802
    %v6482 = vunpack.c.l.b16 %v5803
    %v6483 = vunpack.c.l.b16 %v5804
    %v6484 = vunpack.c.h.b16 %v5804
    %v6485 = vunpack.c.l.b16 %v5805
    %v6486 = vunpack.c.h.b16 %v5805
    %v6487 = vunpack.c.l.b16 %v5806
    %v6488 = vunpack.c.h.b16 %v5806
    %v6489 = vunpack.c.l.b16 %v5807
    %v6490 = vunpack.c.l.b16 %v5808
    %v6491 = vunpack.c.h.b16 %v5808
    %v6492 = vunpack.c.l.b16 %v5809
    %v6493 = vunpack.c.h.b16 %v5809
    %v6494 = vunpack.c.l.b16 %v5810
    %v6495 = vunpack.c.h.b16 %v5810
    %v6496 = vunpack.c.l.b16 %v5811
    %v6497 = vunpack.c.l.b16 %v5812
    %v6498 = vunpack.c.h.b16 %v5812
    %v6499 = vunpack.c.l.b16 %v5813
    %v6500 = vunpack.c.h.b16 %v5813
    %v6501 = vunpack.c.l.b16 %v5814
    %v6502 = vunpack.c.h.b16 %v5814
    %v6503 = vunpack.c.l.b16 %v5815
    %v6504 = vunpack.c.l.b16 %v5816
    %v6505 = vunpack.c.h.b16 %v5816
    %v6506 = vunpack.c.l.b16 %v5817
    %v6507 = vunpack.c.h.b16 %v5817
    %v6508 = vunpack.c.l.b16 %v5818
    %v6509 = vunpack.c.h.b16 %v5818
    %v6510 = vunpack.c.l.b16 %v5819
    %v6511 = vunpack.c.l.b16 %v5820
    %v6512 = vunpack.c.h.b16 %v5820
    %v6513 = vunpack.c.l.b16 %v5821
    %v6514 = vunpack.c.h.b16 %v5821
    %v6515 = vunpack.c.l.b16 %v5822
    %v6516 = vunpack.c.h.b16 %v5822
    %v6517 = vunpack.c.l.b16 %v5823
    %v6518 = vunpack.c.l.b16 %v5824
    %v6519 = vunpack.c.h.b16 %v5824
    %v6520 = vunpack.c.l.b16 %v5825
    %v6521 = vunpack.c.h.b16 %v5825
    %v6522 = vunpack.c.l.b16 %v5826
    %v6523 = vunpack.c.h.b16 %v5826
    %v6524 = vunpack.c.l.b16 %v5827
    %v6525 = vunpack.c.l.b16 %v5828
    %v6526 = vunpack.c.h.b16 %v5828
    %v6527 = vunpack.c.l.b16 %v5829
    %v6528 = vunpack.c.h.b16 %v5829
    %v6529 = vunpack.c.l.b16 %v5830
    %v6530 = vunpack.c.h.b16 %v5830
    %v6531 = vunpack.c.l.b16 %v5831
    %v6532 = vunpack.c.l.b16 %v5832
    %v6533 = vunpack.c.h.b16 %v5832
    %v6534 = vunpack.c.l.b16 %v5833
    %v6535 = vunpack.c.h.b16 %v5833
    %v6536 = vunpack.c.l.b16 %v5834
    %v6537 = vunpack.c.h.b16 %v5834
    %v6538 = vunpack.c.l.b16 %v5835
    %v6539 = vunpack.c.l.b16 %v5836
    %v6540 = vunpack.c.h.b16 %v5836
    %v6541 = vunpack.c.l.b16 %v5837
    %v6542 = vunpack.c.h.b16 %v5837
    %v6543 = vunpack.c.l.b16 %v5838
    %v6544 = vunpack.c.h.b16 %v5838
    %v6545 = vunpack.c.l.b16 %v5839
    %v6546 = vunpack.c.l.b16 %v5840
    %v6547 = vunpack.c.h.b16 %v5840
    %v6548 = vunpack.c.l.b16 %v5841
    %v6549 = vunpack.c.h.b16 %v5841
    %v6550 = vunpack.c.l.b16 %v5842
    %v6551 = vunpack.c.h.b16 %v5842
    %v6552 = vunpack.c.l.b16 %v5843
    %v6553 = vunpack.c.l.b16 %v5844
    %v6554 = vunpack.c.h.b16 %v5844
    %v6555 = vunpack.c.l.b16 %v5845
    %v6556 = vunpack.c.h.b16 %v5845
    %v6557 = vunpack.c.l.b16 %v5846
    %v6558 = vunpack.c.h.b16 %v5846
    %v6559 = vunpack.c.l.b16 %v5847
    %v6560 = vunpack.c.l.b16 %v5848
    %v6561 = vunpack.c.h.b16 %v5848
    %v6562 = vunpack.c.l.b16 %v5849
    %v6563 = vunpack.c.h.b16 %v5849
    %v6564 = vunpack.c.l.b16 %v5850
    %v6565 = vunpack.c.h.b16 %v5850
    %v6566 = vunpack.c.l.b16 %v5851
    %v6567 = vunpack.c.l.b16 %v5852
    %v6568 = vunpack.c.h.b16 %v5852
    %v6569 = vunpack.c.l.b16 %v5853
    %v6570 = vunpack.c.h.b16 %v5853
    %v6571 = vunpack.c.l.b16 %v5854
    %v6572 = vunpack.c.h.b16 %v5854
    %v6573 = vunpack.c.l.b16 %v5855
    %v6574 = vunpack.c.l.b16 %v5856
    %v6575 = vunpack.c.h.b16 %v5856
    %v6576 = vunpack.c.l.b16 %v5857
    %v6577 = vunpack.c.h.b16 %v5857
    %v6578 = vunpack.c.l.b16 %v5858
    %v6579 = vunpack.c.h.b16 %v5858
    %v6580 = vunpack.c.l.b16 %v5859
    %v6581 = vunpack.c.l.b16 %v5860
    %v6582 = vunpack.c.h.b16 %v5860
    %v6583 = vunpack.c.l.b16 %v5861
    %v6584 = vunpack.c.h.b16 %v5861
    %v6585 = vunpack.c.l.b16 %v5862
    %v6586 = vunpack.c.h.b16 %v5862
    %v6587 = vunpack.c.l.b16 %v5863
    %v6588 = vunpack.c.l.b16 %v5864
    %v6589 = vunpack.c.h.b16 %v5864
    %v6590 = vunpack.c.l.b16 %v5865
    %v6591 = vunpack.c.h.b16 %v5865
    %v6592 = vunpack.c.l.b16 %v5866
    %v6593 = vunpack.c.h.b16 %v5866
    %v6594 = vunpack.c.l.b16 %v5867
    %v6595 = vunpack.c.l.b16 %v5868
    %v6596 = vunpack.c.h.b16 %v5868
    %v6597 = vunpack.c.l.b16 %v5869
    %v6598 = vunpack.c.h.b16 %v5869
    %v6599 = vunpack.c.l.b16 %v5870
    %v6600 = vunpack.c.h.b16 %v5870
    %v6601 = vunpack.c.l.b16 %v5871
    %v6602 = vunpack.c.l.b16 %v5872
    %v6603 = vunpack.c.h.b16 %v5872
    %v6604 = vunpack.c.l.b16 %v5873
    %v6605 = vunpack.c.h.b16 %v5873
    %v6606 = vunpack.c.l.b16 %v5874
    %v6607 = vunpack.c.h.b16 %v5874
    %v6608 = vunpack.c.l.b16 %v5875
    %v6609 = vunpack.c.l.b16 %v5876
    %v6610 = vunpack.c.h.b16 %v5876
    %v6611 = vunpack.c.l.b16 %v5877
    %v6612 = vunpack.c.h.b16 %v5877
    %v6613 = vunpack.c.l.b16 %v5878
    %v6614 = vunpack.c.h.b16 %v5878
    %v6615 = vunpack.c.l.b16 %v5879
    %v6616 = vunpack.c.l.b16 %v5880
    %v6617 = vunpack.c.h.b16 %v5880
    %v6618 = vunpack.c.l.b16 %v5881
    %v6619 = vunpack.c.h.b16 %v5881
    %v6620 = vunpack.c.l.b16 %v5882
    %v6621 = vunpack.c.h.b16 %v5882
    %v6622 = vunpack.c.l.b16 %v5883
    %v6623 = vunpack.c.l.b16 %v5884
    %v6624 = vunpack.c.h.b16 %v5884
    %v6625 = vunpack.c.l.b16 %v5885
    %v6626 = vunpack.c.h.b16 %v5885
    %v6627 = vunpack.c.l.b16 %v5886
    %v6628 = vunpack.c.h.b16 %v5886
    %v6629 = vunpack.c.l.b16 %v5887
    %v6630 = vunpack.c.l.b16 %v5888
    %v6631 = vunpack.c.h.b16 %v5888
    %v6632 = vunpack.c.l.b16 %v5889
    %v6633 = vunpack.c.h.b16 %v5889
    %v6634 = vunpack.c.l.b16 %v5890
    %v6635 = vunpack.c.h.b16 %v5890
    %v6636 = vunpack.c.l.b16 %v5891
    %v6637 = vpack.c.b16 %v6196, %v6189
    %v6638 = vpack.c.b16 %v6197, %v6190
    %v6639 = vpack.c.b16 %v6198, %v6191
    %v6640 = vpack.c.b16 %v6199, %v6192
    %v6641 = vpack.c.b16 %v6200, %v6193
    %v6642 = vpack.c.b16 %v6201, %v6194
    %v6643 = vpack.c.b16 %v6202, %v6195
    %v6644 = vpack.c.b16 %v6210, %v6203
    %v6645 = vpack.c.b16 %v6211, %v6204
    %v6646 = vpack.c.b16 %v6212, %v6205
    %v6647 = vpack.c.b16 %v6213, %v6206
    %v6648 = vpack.c.b16 %v6214, %v6207
    %v6649 = vpack.c.b16 %v6215, %v6208
    %v6650 = vpack.c.b16 %v6216, %v6209
    %v6651 = vpack.c.b16 %v6224, %v6217
    %v6652 = vpack.c.b16 %v6225, %v6218
    %v6653 = vpack.c.b16 %v6226, %v6219
    %v6654 = vpack.c.b16 %v6227, %v6220
    %v6655 = vpack.c.b16 %v6228, %v6221
    %v6656 = vpack.c.b16 %v6229, %v6222
    %v6657 = vpack.c.b16 %v6230, %v6223
    %v6658 = vpack.c.b16 %v6238, %v6231
    %v6659 = vpack.c.b16 %v6239, %v6232
    %v6660 = vpack.c.b16 %v6240, %v6233
    %v6661 = vpack.c.b16 %v6241, %v6234
    %v6662 = vpack.c.b16 %v6242, %v6235
    %v6663 = vpack.c.b16 %v6243, %v6236
    %v6664 = vpack.c.b16 %v6244, %v6237
    %v6665 = vpack.c.b16 %v6252, %v6245
    %v6666 = vpack.c.b16 %v6253, %v6246
    %v6667 = vpack.c.b16 %v6254, %v6247
    %v6668 = vpack.c.b16 %v6255, %v6248
    %v6669 = vpack.c.b16 %v6256, %v6249
    %v6670 = vpack.c.b16 %v6257, %v6250
    %v6671 = vpack.c.b16 %v6258, %v6251
    %v6672 = vpack.c.b16 %v6266, %v6259
    %v6673 = vpack.c.b16 %v6267, %v6260
    %v6674 = vpack.c.b16 %v6268, %v6261
    %v6675 = vpack.c.b16 %v6269, %v6262
    %v6676 = vpack.c.b16 %v6270, %v6263
    %v6677 = vpack.c.b16 %v6271, %v6264
    %v6678 = vpack.c.b16 %v6272, %v6265
    %v6679 = vpack.c.b16 %v6280, %v6273
    %v6680 = vpack.c.b16 %v6281, %v6274
    %v6681 = vpack.c.b16 %v6282, %v6275
    %v6682 = vpack.c.b16 %v6283, %v6276
    %v6683 = vpack.c.b16 %v6284, %v6277
    %v6684 = vpack.c.b16 %v6285, %v6278
    %v6685 = vpack.c.b16 %v6286, %v6279
    %v6686 = vpack.c.b16 %v6294, %v6287
    %v6687 = vpack.c.b16 %v6295, %v6288
    %v6688 = vpack.c.b16 %v6296, %v6289
    %v6689 = vpack.c.b16 %v6297, %v6290
    %v6690 = vpack.c.b16 %v6298, %v6291
    %v6691 = vpack.c.b16 %v6299, %v6292
    %v6692 = vpack.c.b16 %v6300, %v6293
    %v6693 = vpack.c.b16 %v6308, %v6301
    %v6694 = vpack.c.b16 %v6309, %v6302
    %v6695 = vpack.c.b16 %v6310, %v6303
    %v6696 = vpack.c.b16 %v6311, %v6304
    %v6697 = vpack.c.b16 %v6312, %v6305
    %v6698 = vpack.c.b16 %v6313, %v6306
    %v6699 = vpack.c.b16 %v6314, %v6307
    %v6700 = vpack.c.b16 %v6322, %v6315
    %v6701 = vpack.c.b16 %v6323, %v6316
    %v6702 = vpack.c.b16 %v6324, %v6317
    %v6703 = vpack.c.b16 %v6325, %v6318
    %v6704 = vpack.c.b16 %v6326, %v6319
    %v6705 = vpack.c.b16 %v6327, %v6320
    %v6706 = vpack.c.b16 %v6328, %v6321
    %v6707 = vpack.c.b16 %v6336, %v6329
    %v6708 = vpack.c.b16 %v6337, %v6330
    %v6709 = vpack.c.b16 %v6338, %v6331
    %v6710 = vpack.c.b16 %v6339, %v6332
    %v6711 = vpack.c.b16 %v6340, %v6333
    %v6712 = vpack.c.b16 %v6341, %v6334
    %v6713 = vpack.c.b16 %v6342, %v6335
    %v6714 = vpack.c.b16 %v6350, %v6343
    %v6715 = vpack.c.b16 %v6351, %v6344
    %v6716 = vpack.c.b16 %v6352, %v6345
    %v6717 = vpack.c.b16 %v6353, %v6346
    %v6718 = vpack.c.b16 %v6354, %v6347
    %v6719 = vpack.c.b16 %v6355, %v6348
    %v6720 = vpack.c.b16 %v6356, %v6349
    %v6721 = vpack.c.b16 %v6364, %v6357
    %v6722 = vpack.c.b16 %v6365, %v6358
    %v6723 = vpack.c.b16 %v6366, %v6359
    %v6724 = vpack.c.b16 %v6367, %v6360
    %v6725 = vpack.c.b16 %v6368, %v6361
    %v6726 = vpack.c.b16 %v6369, %v6362
    %v6727 = vpack.c.b16 %v6370, %v6363
    %v6728 = vpack.c.b16 %v6378, %v6371
    %v6729 = vpack.c.b16 %v6379, %v6372
    %v6730 = vpack.c.b16 %v6380, %v6373
    %v6731 = vpack.c.b16 %v6381, %v6374
    %v6732 = vpack.c.b16 %v6382, %v6375
    %v6733 = vpack.c.b16 %v6383, %v6376
    %v6734 = vpack.c.b16 %v6384, %v6377
    %v6735 = vpack.c.b16 %v6392, %v6385
    %v6736 = vpack.c.b16 %v6393, %v6386
    %v6737 = vpack.c.b16 %v6394, %v6387
    %v6738 = vpack.c.b16 %v6395, %v6388
    %v6739 = vpack.c.b16 %v6396, %v6389
    %v6740 = vpack.c.b16 %v6397, %v6390
    %v6741 = vpack.c.b16 %v6398, %v6391
    %v6742 = vpack.c.b16 %v6406, %v6399
    %v6743 = vpack.c.b16 %v6407, %v6400
    %v6744 = vpack.c.b16 %v6408, %v6401
    %v6745 = vpack.c.b16 %v6409, %v6402
    %v6746 = vpack.c.b16 %v6410, %v6403
    %v6747 = vpack.c.b16 %v6411, %v6404
    %v6748 = vpack.c.b16 %v6412, %v6405
    %v6749 = vpack.c.b16 %v6420, %v6413
    %v6750 = vpack.c.b16 %v6421, %v6414
    %v6751 = vpack.c.b16 %v6422, %v6415
    %v6752 = vpack.c.b16 %v6423, %v6416
    %v6753 = vpack.c.b16 %v6424, %v6417
    %v6754 = vpack.c.b16 %v6425, %v6418
    %v6755 = vpack.c.b16 %v6426, %v6419
    %v6756 = vpack.c.b16 %v6434, %v6427
    %v6757 = vpack.c.b16 %v6435, %v6428
    %v6758 = vpack.c.b16 %v6436, %v6429
    %v6759 = vpack.c.b16 %v6437, %v6430
    %v6760 = vpack.c.b16 %v6438, %v6431
    %v6761 = vpack.c.b16 %v6439, %v6432
    %v6762 = vpack.c.b16 %v6440, %v6433
    %v6763 = vpack.c.b16 %v6448, %v6441
    %v6764 = vpack.c.b16 %v6449, %v6442
    %v6765 = vpack.c.b16 %v6450, %v6443
    %v6766 = vpack.c.b16 %v6451, %v6444
    %v6767 = vpack.c.b16 %v6452, %v6445
    %v6768 = vpack.c.b16 %v6453, %v6446
    %v6769 = vpack.c.b16 %v6454, %v6447
    %v6770 = vpack.c.b16 %v6462, %v6455
    %v6771 = vpack.c.b16 %v6463, %v6456
    %v6772 = vpack.c.b16 %v6464, %v6457
    %v6773 = vpack.c.b16 %v6465, %v6458
    %v6774 = vpack.c.b16 %v6466, %v6459
    %v6775 = vpack.c.b16 %v6467, %v6460
    %v6776 = vpack.c.b16 %v6468, %v6461
    %v6777 = vpack.c.b16 %v6476, %v6469
    %v6778 = vpack.c.b16 %v6477, %v6470
    %v6779 = vpack.c.b16 %v6478, %v6471
    %v6780 = vpack.c.b16 %v6479, %v6472
    %v6781 = vpack.c.b16 %v6480, %v6473
    %v6782 = vpack.c.b16 %v6481, %v6474
    %v6783 = vpack.c.b16 %v6482, %v6475
    %v6784 = vpack.c.b16 %v6490, %v6483
    %v6785 = vpack.c.b16 %v6491, %v6484
    %v6786 = vpack.c.b16 %v6492, %v6485
    %v6787 = vpack.c.b16 %v6493, %v6486
    %v6788 = vpack.c.b16 %v6494, %v6487
    %v6789 = vpack.c.b16 %v6495, %v6488
    %v6790 = vpack.c.b16 %v6496, %v6489
    %v6791 = vpack.c.b16 %v6504, %v6497
    %v6792 = vpack.c.b16 %v6505, %v6498
    %v6793 = vpack.c.b16 %v6506, %v6499
    %v6794 = vpack.c.b16 %v6507, %v6500
    %v6795 = vpack.c.b16 %v6508, %v6501
    %v6796 = vpack.c.b16 %v6509, %v6502
    %v6797 = vpack.c.b16 %v6510, %v6503
    %v6798 = vpack.c.b16 %v6518, %v6511
    %v6799 = vpack.c.b16 %v6519, %v6512
    %v6800 = vpack.c.b16 %v6520, %v6513
    %v6801 = vpack.c.b16 %v6521, %v6514
    %v6802 = vpack.c.b16 %v6522, %v6515
    %v6803 = vpack.c.b16 %v6523, %v6516
    %v6804 = vpack.c.b16 %v6524, %v6517
    %v6805 = vpack.c.b16 %v6532, %v6525
    %v6806 = vpack.c.b16 %v6533, %v6526
    %v6807 = vpack.c.b16 %v6534, %v6527
    %v6808 = vpack.c.b16 %v6535, %v6528
    %v6809 = vpack.c.b16 %v6536, %v6529
    %v6810 = vpack.c.b16 %v6537, %v6530
    %v6811 = vpack.c.b16 %v6538, %v6531
    %v6812 = vpack.c.b16 %v6546, %v6539
    %v6813 = vpack.c.b16 %v6547, %v6540
    %v6814 = vpack.c.b16 %v6548, %v6541
    %v6815 = vpack.c.b16 %v6549, %v6542
    %v6816 = vpack.c.b16 %v6550, %v6543
    %v6817 = vpack.c.b16 %v6551, %v6544
    %v6818 = vpack.c.b16 %v6552, %v6545
    %v6819 = vpack.c.b16 %v6560, %v6553
    %v6820 = vpack.c.b16 %v6561, %v6554
    %v6821 = vpack.c.b16 %v6562, %v6555
    %v6822 = vpack.c.b16 %v6563, %v6556
    %v6823 = vpack.c.b16 %v6564, %v6557
    %v6824 = vpack.c.b16 %v6565, %v6558
    %v6825 = vpack.c.b16 %v6566, %v6559
    %v6826 = vpack.c.b16 %v6574, %v6567
    %v6827 = vpack.c.b16 %v6575, %v6568
    %v6828 = vpack.c.b16 %v6576, %v6569
    %v6829 = vpack.c.b16 %v6577, %v6570
    %v6830 = vpack.c.b16 %v6578, %v6571
    %v6831 = vpack.c.b16 %v6579, %v6572
    %v6832 = vpack.c.b16 %v6580, %v6573
    %v6833 = vpack.c.b16 %v6588, %v6581
    %v6834 = vpack.c.b16 %v6589, %v6582
    %v6835 = vpack.c.b16 %v6590, %v6583
    %v6836 = vpack.c.b16 %v6591, %v6584
    %v6837 = vpack.c.b16 %v6592, %v6585
    %v6838 = vpack.c.b16 %v6593, %v6586
    %v6839 = vpack.c.b16 %v6594, %v6587
    %v6840 = vpack.c.b16 %v6602, %v6595
    %v6841 = vpack.c.b16 %v6603, %v6596
    %v6842 = vpack.c.b16 %v6604, %v6597
    %v6843 = vpack.c.b16 %v6605, %v6598
    %v6844 = vpack.c.b16 %v6606, %v6599
    %v6845 = vpack.c.b16 %v6607, %v6600
    %v6846 = vpack.c.b16 %v6608, %v6601
    %v6847 = vpack.c.b16 %v6616, %v6609
    %v6848 = vpack.c.b16 %v6617, %v6610
    %v6849 = vpack.c.b16 %v6618, %v6611
    %v6850 = vpack.c.b16 %v6619, %v6612
    %v6851 = vpack.c.b16 %v6620, %v6613
    %v6852 = vpack.c.b16 %v6621, %v6614
    %v6853 = vpack.c.b16 %v6622, %v6615
    %v6854 = vpack.c.b16 %v6630, %v6623
    %v6855 = vpack.c.b16 %v6631, %v6624
    %v6856 = vpack.c.b16 %v6632, %v6625
    %v6857 = vpack.c.b16 %v6633, %v6626
    %v6858 = vpack.c.b16 %v6634, %v6627
    %v6859 = vpack.c.b16 %v6635, %v6628
    %v6860 = vpack.c.b16 %v6636, %v6629
    %7085 = vmatprep.subr.bf16.mxu0 %v6638
    %7086 = vmatpush1.bf16.msra.mxu0 %v6637
    %7087 = vmatprep.subr.bf16.mxu0 %v6645
    %7088 = vmatpush1.bf16.msra.mxu0 %v6644
    %7089 = vmatprep.subr.bf16.mxu0 %v6652
    %7090 = vmatpush1.bf16.msra.mxu0 %v6651
    %7091 = vmatprep.subr.bf16.mxu0 %v6659
    %7092 = vmatpush1.bf16.msra.mxu0 %v6658
    %7093 = vmatprep.subr.bf16.mxu0 %v6666
    %7094 = vmatpush1.bf16.msra.mxu0 %v6665
    %7095 = vmatprep.subr.bf16.mxu0 %v6673
    %7096 = vmatpush1.bf16.msra.mxu0 %v6672
    %7097 = vmatprep.subr.bf16.mxu0 %v6680
    %7098 = vmatpush1.bf16.msra.mxu0 %v6679
    %7099 = vmatprep.subr.bf16.mxu0 %v6687
    %7100 = vmatpush1.bf16.msra.mxu0 %v6686
    %7101 = vmatprep.subr.bf16.mxu0 %v6694
    %7102 = vmatpush1.bf16.msra.mxu0 %v6693
    %7103 = vmatprep.subr.bf16.mxu0 %v6701
    %7104 = vmatpush1.bf16.msra.mxu0 %v6700
    %7105 = vmatprep.subr.bf16.mxu0 %v6708
    %7106 = vmatpush1.bf16.msra.mxu0 %v6707
    %7107 = vmatprep.subr.bf16.mxu0 %v6715
    %7108 = vmatpush1.bf16.msra.mxu0 %v6714
    %7109 = vmatprep.subr.bf16.mxu0 %v6722
    %7110 = vmatpush1.bf16.msra.mxu0 %v6721
    %7111 = vmatprep.subr.bf16.mxu0 %v6729
    %7112 = vmatpush1.bf16.msra.mxu0 %v6728
    %7113 = vmatprep.subr.bf16.mxu0 %v6736
    %7114 = vmatpush1.bf16.msra.mxu0 %v6735
    %7115 = vmatprep.subr.bf16.mxu0 %v6743
    %7116 = vmatpush1.bf16.msra.mxu0 %v6742
    %7117 = vmatprep.mubr.bf16.mxu0 %v5894
    %7118 = vmatmul.mubr.bf16.gmra.mrb[0].mxu0 %v5893
    %v7119 = vpop.f32.mrb[0].mxu0
    %v7120 = vadd.f32 %v5901, %v7119
    %v7121 = vpop.f32.mrb[0].mxu0
    %v7122 = vadd.f32 %v5905, %v7121
    %v7123 = vpop.f32.mrb[0].mxu0
    %v7124 = vpop.f32.mrb[0].mxu0
    %7125 = vdwg.mxu0
    %7126 = vmatprep.subr.bf16.mxu0 %v6750
    %7127 = vmatpush1.bf16.msra.mxu0 %v6749
    %7128 = vmatprep.subr.bf16.mxu0 %v6757
    %7129 = vmatpush1.bf16.msra.mxu0 %v6756
    %7130 = vmatprep.subr.bf16.mxu0 %v6764
    %7131 = vmatpush1.bf16.msra.mxu0 %v6763
    %7132 = vmatprep.subr.bf16.mxu0 %v6771
    %7133 = vmatpush1.bf16.msra.mxu0 %v6770
    %7134 = vmatprep.subr.bf16.mxu0 %v6778
    %7135 = vmatpush1.bf16.msra.mxu0 %v6777
    %7136 = vmatprep.subr.bf16.mxu0 %v6785
    %7137 = vmatpush1.bf16.msra.mxu0 %v6784
    %7138 = vmatprep.subr.bf16.mxu0 %v6792
    %7139 = vmatpush1.bf16.msra.mxu0 %v6791
    %7140 = vmatprep.subr.bf16.mxu0 %v6799
    %7141 = vmatpush1.bf16.msra.mxu0 %v6798
    %7142 = vmatprep.subr.bf16.mxu0 %v6806
    %7143 = vmatpush1.bf16.msra.mxu0 %v6805
    %7144 = vmatprep.subr.bf16.mxu0 %v6813
    %7145 = vmatpush1.bf16.msra.mxu0 %v6812
    %7146 = vmatprep.subr.bf16.mxu0 %v6820
    %7147 = vmatpush1.bf16.msra.mxu0 %v6819
    %7148 = vmatprep.subr.bf16.mxu0 %v6827
    %7149 = vmatpush1.bf16.msra.mxu0 %v6826
    %7150 = vmatprep.subr.bf16.mxu0 %v6834
    %7151 = vmatpush1.bf16.msra.mxu0 %v6833
    %7152 = vmatprep.subr.bf16.mxu0 %v6841
    %7153 = vmatpush1.bf16.msra.mxu0 %v6840
    %7154 = vmatprep.subr.bf16.mxu0 %v6848
    %7155 = vmatpush1.bf16.msra.mxu0 %v6847
    %7156 = vmatprep.subr.bf16.mxu0 %v6855
    %7157 = vmatpush1.bf16.msra.mxu0 %v6854
    %7158 = vmatprep.mubr.bf16.mxu0 %v5896
    %7159 = vmatmul.mubr.bf16.gmra.mrb[0].mxu0 %v5895
    %v7160 = vpop.f32.mrb[0].mxu0
    %v7161 = vadd.f32 %v7120, %v7160
    %v7162 = vpop.f32.mrb[0].mxu0
    %v7163 = vadd.f32 %v7122, %v7162
    %v7164 = vpop.f32.mrb[0].mxu0
    %v7165 = vpop.f32.mrb[0].mxu0
    %7166 = vdwg.mxu0
    %7167 = vmatprep.subr.bf16.mxu0 %v6640
    %7168 = vmatpush1.bf16.msra.mxu0 %v6639
    %7169 = vmatprep.subr.bf16.mxu0 %v6647
    %7170 = vmatpush1.bf16.msra.mxu0 %v6646
    %7171 = vmatprep.subr.bf16.mxu0 %v6654
    %7172 = vmatpush1.bf16.msra.mxu0 %v6653
    %7173 = vmatprep.subr.bf16.mxu0 %v6661
    %7174 = vmatpush1.bf16.msra.mxu0 %v6660
    %7175 = vmatprep.subr.bf16.mxu0 %v6668
    %7176 = vmatpush1.bf16.msra.mxu0 %v6667
    %7177 = vmatprep.subr.bf16.mxu0 %v6675
    %7178 = vmatpush1.bf16.msra.mxu0 %v6674
    %7179 = vmatprep.subr.bf16.mxu0 %v6682
    %7180 = vmatpush1.bf16.msra.mxu0 %v6681
    %7181 = vmatprep.subr.bf16.mxu0 %v6689
    %7182 = vmatpush1.bf16.msra.mxu0 %v6688
    %7183 = vmatprep.subr.bf16.mxu0 %v6696
    %7184 = vmatpush1.bf16.msra.mxu0 %v6695
    %7185 = vmatprep.subr.bf16.mxu0 %v6703
    %7186 = vmatpush1.bf16.msra.mxu0 %v6702
    %7187 = vmatprep.subr.bf16.mxu0 %v6710
    %7188 = vmatpush1.bf16.msra.mxu0 %v6709
    %7189 = vmatprep.subr.bf16.mxu0 %v6717
    %7190 = vmatpush1.bf16.msra.mxu0 %v6716
    %7191 = vmatprep.subr.bf16.mxu0 %v6724
    %7192 = vmatpush1.bf16.msra.mxu0 %v6723
    %7193 = vmatprep.subr.bf16.mxu0 %v6731
    %7194 = vmatpush1.bf16.msra.mxu0 %v6730
    %7195 = vmatprep.subr.bf16.mxu0 %v6738
    %7196 = vmatpush1.bf16.msra.mxu0 %v6737
    %7197 = vmatprep.subr.bf16.mxu0 %v6745
    %7198 = vmatpush1.bf16.msra.mxu0 %v6744
    %7199 = vmatprep.mubr.bf16.mxu0 %v5894
    %7200 = vmatmul.mubr.bf16.gmra.mrb[0].mxu0 %v5893
    %v7201 = vpop.f32.mrb[0].mxu0
    %v7202 = vadd.f32 %v5909, %v7201
    %v7203 = vpop.f32.mrb[0].mxu0
    %v7204 = vadd.f32 %v5913, %v7203
    %v7205 = vpop.f32.mrb[0].mxu0
    %v7206 = vpop.f32.mrb[0].mxu0
    %7207 = vdwg.mxu0
    %7208 = vmatprep.subr.bf16.mxu0 %v6752
    %7209 = vmatpush1.bf16.msra.mxu0 %v6751
    %7210 = vmatprep.subr.bf16.mxu0 %v6759
    %7211 = vmatpush1.bf16.msra.mxu0 %v6758
    %7212 = vmatprep.subr.bf16.mxu0 %v6766
    %7213 = vmatpush1.bf16.msra.mxu0 %v6765
    %7214 = vmatprep.subr.bf16.mxu0 %v6773
    %7215 = vmatpush1.bf16.msra.mxu0 %v6772
    %7216 = vmatprep.subr.bf16.mxu0 %v6780
    %7217 = vmatpush1.bf16.msra.mxu0 %v6779
    %7218 = vmatprep.subr.bf16.mxu0 %v6787
    %7219 = vmatpush1.bf16.msra.mxu0 %v6786
    %7220 = vmatprep.subr.bf16.mxu0 %v6794
    %7221 = vmatpush1.bf16.msra.mxu0 %v6793
    %7222 = vmatprep.subr.bf16.mxu0 %v6801
    %7223 = vmatpush1.bf16.msra.mxu0 %v6800
    %7224 = vmatprep.subr.bf16.mxu0 %v6808
    %7225 = vmatpush1.bf16.msra.mxu0 %v6807
    %7226 = vmatprep.subr.bf16.mxu0 %v6815
    %7227 = vmatpush1.bf16.msra.mxu0 %v6814
    %7228 = vmatprep.subr.bf16.mxu0 %v6822
    %7229 = vmatpush1.bf16.msra.mxu0 %v6821
    %7230 = vmatprep.subr.bf16.mxu0 %v6829
    %7231 = vmatpush1.bf16.msra.mxu0 %v6828
    %7232 = vmatprep.subr.bf16.mxu0 %v6836
    %7233 = vmatpush1.bf16.msra.mxu0 %v6835
    %7234 = vmatprep.subr.bf16.mxu0 %v6843
    %7235 = vmatpush1.bf16.msra.mxu0 %v6842
    %7236 = vmatprep.subr.bf16.mxu0 %v6850
    %7237 = vmatpush1.bf16.msra.mxu0 %v6849
    %7238 = vmatprep.subr.bf16.mxu0 %v6857
    %7239 = vmatpush1.bf16.msra.mxu0 %v6856
    %7240 = vmatprep.mubr.bf16.mxu0 %v5896
    %7241 = vmatmul.mubr.bf16.gmra.mrb[0].mxu0 %v5895
    %v7242 = vpop.f32.mrb[0].mxu0
    %v7243 = vadd.f32 %v7202, %v7242
    %v7244 = vpop.f32.mrb[0].mxu0
    %v7245 = vadd.f32 %v7204, %v7244
    %v7246 = vpop.f32.mrb[0].mxu0
    %v7247 = vpop.f32.mrb[0].mxu0
    %7248 = vdwg.mxu0
    %7249 = vmatprep.subr.bf16.mxu0 %v6642
    %7250 = vmatpush1.bf16.msra.mxu0 %v6641
    %7251 = vmatprep.subr.bf16.mxu0 %v6649
    %7252 = vmatpush1.bf16.msra.mxu0 %v6648
    %7253 = vmatprep.subr.bf16.mxu0 %v6656
    %7254 = vmatpush1.bf16.msra.mxu0 %v6655
    %7255 = vmatprep.subr.bf16.mxu0 %v6663
    %7256 = vmatpush1.bf16.msra.mxu0 %v6662
    %7257 = vmatprep.subr.bf16.mxu0 %v6670
    %7258 = vmatpush1.bf16.msra.mxu0 %v6669
    %7259 = vmatprep.subr.bf16.mxu0 %v6677
    %7260 = vmatpush1.bf16.msra.mxu0 %v6676
    %7261 = vmatprep.subr.bf16.mxu0 %v6684
    %7262 = vmatpush1.bf16.msra.mxu0 %v6683
    %7263 = vmatprep.subr.bf16.mxu0 %v6691
    %7264 = vmatpush1.bf16.msra.mxu0 %v6690
    %7265 = vmatprep.subr.bf16.mxu0 %v6698
    %7266 = vmatpush1.bf16.msra.mxu0 %v6697
    %7267 = vmatprep.subr.bf16.mxu0 %v6705
    %7268 = vmatpush1.bf16.msra.mxu0 %v6704
    %7269 = vmatprep.subr.bf16.mxu0 %v6712
    %7270 = vmatpush1.bf16.msra.mxu0 %v6711
    %7271 = vmatprep.subr.bf16.mxu0 %v6719
    %7272 = vmatpush1.bf16.msra.mxu0 %v6718
    %7273 = vmatprep.subr.bf16.mxu0 %v6726
    %7274 = vmatpush1.bf16.msra.mxu0 %v6725
    %7275 = vmatprep.subr.bf16.mxu0 %v6733
    %7276 = vmatpush1.bf16.msra.mxu0 %v6732
    %7277 = vmatprep.subr.bf16.mxu0 %v6740
    %7278 = vmatpush1.bf16.msra.mxu0 %v6739
    %7279 = vmatprep.subr.bf16.mxu0 %v6747
    %7280 = vmatpush1.bf16.msra.mxu0 %v6746
    %7281 = vmatprep.mubr.bf16.mxu0 %v5894
    %7282 = vmatmul.mubr.bf16.gmra.mrb[0].mxu0 %v5893
    %v7283 = vpop.f32.mrb[0].mxu0
    %v7284 = vadd.f32 %v5917, %v7283
    %v7285 = vpop.f32.mrb[0].mxu0
    %v7286 = vadd.f32 %v5921, %v7285
    %v7287 = vpop.f32.mrb[0].mxu0
    %v7288 = vpop.f32.mrb[0].mxu0
    %7289 = vdwg.mxu0
    %7290 = vmatprep.subr.bf16.mxu0 %v6754
    %7291 = vmatpush1.bf16.msra.mxu0 %v6753
    %7292 = vmatprep.subr.bf16.mxu0 %v6761
    %7293 = vmatpush1.bf16.msra.mxu0 %v6760
    %7294 = vmatprep.subr.bf16.mxu0 %v6768
    %7295 = vmatpush1.bf16.msra.mxu0 %v6767
    %7296 = vmatprep.subr.bf16.mxu0 %v6775
    %7297 = vmatpush1.bf16.msra.mxu0 %v6774
    %7298 = vmatprep.subr.bf16.mxu0 %v6782
    %7299 = vmatpush1.bf16.msra.mxu0 %v6781
    %7300 = vmatprep.subr.bf16.mxu0 %v6789
    %7301 = vmatpush1.bf16.msra.mxu0 %v6788
    %7302 = vmatprep.subr.bf16.mxu0 %v6796
    %7303 = vmatpush1.bf16.msra.mxu0 %v6795
    %7304 = vmatprep.subr.bf16.mxu0 %v6803
    %7305 = vmatpush1.bf16.msra.mxu0 %v6802
    %7306 = vmatprep.subr.bf16.mxu0 %v6810
    %7307 = vmatpush1.bf16.msra.mxu0 %v6809
    %7308 = vmatprep.subr.bf16.mxu0 %v6817
    %7309 = vmatpush1.bf16.msra.mxu0 %v6816
    %7310 = vmatprep.subr.bf16.mxu0 %v6824
    %7311 = vmatpush1.bf16.msra.mxu0 %v6823
    %7312 = vmatprep.subr.bf16.mxu0 %v6831
    %7313 = vmatpush1.bf16.msra.mxu0 %v6830
    %7314 = vmatprep.subr.bf16.mxu0 %v6838
    %7315 = vmatpush1.bf16.msra.mxu0 %v6837
    %7316 = vmatprep.subr.bf16.mxu0 %v6845
    %7317 = vmatpush1.bf16.msra.mxu0 %v6844
    %7318 = vmatprep.subr.bf16.mxu0 %v6852
    %7319 = vmatpush1.bf16.msra.mxu0 %v6851
    %7320 = vmatprep.subr.bf16.mxu0 %v6859
    %7321 = vmatpush1.bf16.msra.mxu0 %v6858
    %7322 = vmatprep.mubr.bf16.mxu0 %v5896
    %7323 = vmatmul.mubr.bf16.gmra.mrb[0].mxu0 %v5895
    %v7324 = vpop.f32.mrb[0].mxu0
    %v7325 = vadd.f32 %v7284, %v7324
    %v7326 = vpop.f32.mrb[0].mxu0
    %v7327 = vadd.f32 %v7286, %v7326
    %v7328 = vpop.f32.mrb[0].mxu0
    %v7329 = vpop.f32.mrb[0].mxu0
    %7330 = vdwg.mxu0
    %7331 = vmatprep.subr.bf16.mxu0 0
    %7332 = vmatpush1.bf16.msra.mxu0 %v6643
    %7333 = vmatprep.subr.bf16.mxu0 0
    %7334 = vmatpush1.bf16.msra.mxu0 %v6650
    %7335 = vmatprep.subr.bf16.mxu0 0
    %7336 = vmatpush1.bf16.msra.mxu0 %v6657
    %7337 = vmatprep.subr.bf16.mxu0 0
    %7338 = vmatpush1.bf16.msra.mxu0 %v6664
    %7339 = vmatprep.subr.bf16.mxu0 0
    %7340 = vmatpush1.bf16.msra.mxu0 %v6671
    %7341 = vmatprep.subr.bf16.mxu0 0
    %7342 = vmatpush1.bf16.msra.mxu0 %v6678
    %7343 = vmatprep.subr.bf16.mxu0 0
    %7344 = vmatpush1.bf16.msra.mxu0 %v6685
    %7345 = vmatprep.subr.bf16.mxu0 0
    %7346 = vmatpush1.bf16.msra.mxu0 %v6692
    %7347 = vmatprep.subr.bf16.mxu0 0
    %7348 = vmatpush1.bf16.msra.mxu0 %v6699
    %7349 = vmatprep.subr.bf16.mxu0 0
    %7350 = vmatpush1.bf16.msra.mxu0 %v6706
    %7351 = vmatprep.subr.bf16.mxu0 0
    %7352 = vmatpush1.bf16.msra.mxu0 %v6713
    %7353 = vmatprep.subr.bf16.mxu0 0
    %7354 = vmatpush1.bf16.msra.mxu0 %v6720
    %7355 = vmatprep.subr.bf16.mxu0 0
    %7356 = vmatpush1.bf16.msra.mxu0 %v6727
    %7357 = vmatprep.subr.bf16.mxu0 0
    %7358 = vmatpush1.bf16.msra.mxu0 %v6734
    %7359 = vmatprep.subr.bf16.mxu0 0
    %7360 = vmatpush1.bf16.msra.mxu0 %v6741
    %7361 = vmatprep.subr.bf16.mxu0 0
    %7362 = vmatpush1.bf16.msra.mxu0 %v6748
    %7363 = vmatprep.mubr.bf16.mxu0 %v5894
    %7364 = vmatmul.mubr.bf16.gmra.mrb[0].mxu0 %v5893
    %v7365 = vpop.f32.mrb[0].mxu0
    %v7366 = vadd.f32 %v5925, %v7365
    %v7367 = vpop.f32.mrb[0].mxu0
    %v7368 = vpop.f32.mrb[0].mxu0
    %v7369 = vpop.f32.mrb[0].mxu0
    %7370 = vdwg.mxu0
    %7371 = vmatprep.subr.bf16.mxu0 0
    %7372 = vmatpush1.bf16.msra.mxu0 %v6755
    %7373 = vmatprep.subr.bf16.mxu0 0
    %7374 = vmatpush1.bf16.msra.mxu0 %v6762
    %7375 = vmatprep.subr.bf16.mxu0 0
    %7376 = vmatpush1.bf16.msra.mxu0 %v6769
    %7377 = vmatprep.subr.bf16.mxu0 0
    %7378 = vmatpush1.bf16.msra.mxu0 %v6776
    %7379 = vmatprep.subr.bf16.mxu0 0
    %7380 = vmatpush1.bf16.msra.mxu0 %v6783
    %7381 = vmatprep.subr.bf16.mxu0 0
    %7382 = vmatpush1.bf16.msra.mxu0 %v6790
    %7383 = vmatprep.subr.bf16.mxu0 0
    %7384 = vmatpush1.bf16.msra.mxu0 %v6797
    %7385 = vmatprep.subr.bf16.mxu0 0
    %7386 = vmatpush1.bf16.msra.mxu0 %v6804
    %7387 = vmatprep.subr.bf16.mxu0 0
    %7388 = vmatpush1.bf16.msra.mxu0 %v6811
    %7389 = vmatprep.subr.bf16.mxu0 0
    %7390 = vmatpush1.bf16.msra.mxu0 %v6818
    %7391 = vmatprep.subr.bf16.mxu0 0
    %7392 = vmatpush1.bf16.msra.mxu0 %v6825
    %7393 = vmatprep.subr.bf16.mxu0 0
    %7394 = vmatpush1.bf16.msra.mxu0 %v6832
    %7395 = vmatprep.subr.bf16.mxu0 0
    %7396 = vmatpush1.bf16.msra.mxu0 %v6839
    %7397 = vmatprep.subr.bf16.mxu0 0
    %7398 = vmatpush1.bf16.msra.mxu0 %v6846
    %7399 = vmatprep.subr.bf16.mxu0 0
    %7400 = vmatpush1.bf16.msra.mxu0 %v6853
    %7401 = vmatprep.subr.bf16.mxu0 0
    %7402 = vmatpush1.bf16.msra.mxu0 %v6860
    %7403 = vmatprep.mubr.bf16.mxu0 %v5896
    %7404 = vmatmul.mubr.bf16.gmra.mrb[0].mxu0 %v5895
    %v7405 = vpop.f32.mrb[0].mxu0
    %v7406 = vadd.f32 %v7366, %v7405
    %v7407 = vpop.f32.mrb[0].mxu0
    %v7408 = vpop.f32.mrb[0].mxu0
    %v7409 = vpop.f32.mrb[0].mxu0
    %7410 = vdwg.mxu0
    %v7411 = vmax.f32 %v7161, 0.0
    %v7412 = vmax.f32 %v7163, 0.0
    %v7413 = vmax.f32 %v7243, 0.0
    %v7414 = vmax.f32 %v7245, 0.0
    %v7415 = vmax.f32 %v7325, 0.0
    %v7416 = vmax.f32 %v7327, 0.0
    %v7417 = vmax.f32 %v7406, 0.0
    %7418 = vst [vmem:[%s22] sm:$0xff] %v7411
    %7419 = vst [vmem:[%s22 + $0x8] sm:$0xff] %v7412
    %7420 = vst [vmem:[%s22 + $0x10] sm:$0xff] %v7413
    %7421 = vst [vmem:[%s22 + $0x18] sm:$0xff] %v7414
    %7422 = vst [vmem:[%s22 + $0x20] sm:$0xff] %v7415
    %7423 = vst [vmem:[%s22 + $0x28] sm:$0xff] %v7416
    %7424 = vst [vmem:[%s22 + $0x30] sm:$0xff] %v7417
    // Predicated region
    $region122: #{autoenc_forward.1} parent=1 // pred_check
      _
    $region123: #{autoenc_forward.1} parent=1 // pred_check_branch
      %7426 = sbr.rel (0) target = $region125
    $region124: #{autoenc_forward.1} parent=1 // pred_region
      _
    $region125: #{autoenc_forward.1} parent=1 // pred_fallthru
      _
    // Predicated region
    $region126: #{autoenc_forward.1} parent=1 // pred_check
      _
    $region127: #{autoenc_forward.1} parent=1 // pred_check_branch
      %7428 = sbr.rel (0) target = $region129
    $region128: #{autoenc_forward.1} parent=1 // pred_region
      _
    $region129: #{autoenc_forward.1} parent=1 // pred_fallthru
      _
    // Predicated region
    $region130: #{autoenc_forward.1} parent=1 // pred_check
      _
    $region131: #{autoenc_forward.1} parent=1 // pred_check_branch
      %7430 = sbr.rel (0) target = $region133
    $region132: #{autoenc_forward.1} parent=1 // pred_region
      _
    $region133: #{autoenc_forward.1} parent=1 // pred_fallthru
      _
    // Predicated region
    $region134: #{autoenc_forward.1} parent=1 // pred_check
      _
    $region135: #{autoenc_forward.1} parent=1 // pred_check_branch
      %7432 = sbr.rel (0) target = $region137
    $region136: #{autoenc_forward.1} parent=1 // pred_region
      _
    $region137: #{autoenc_forward.1} parent=1 // pred_fallthru
      _
    %7433 = vsyncpa [#allocation3], 1
    %7434 = vsyncpa [#allocation5], 1
    %7435 = vsyncpa [#allocation8], 1
    %7436 = vsyncpa [#allocation11], 1
    %7437 = vsyncpa [#allocation14], 1

</llo_original>
